<compile_context>
chip_gen: v6e
topology: v6e:2x2x1
jax: 0.10.0
libtpu: 0.0.40
codegen_flags: <defaults>
</compile_context>

<pallas_src>
import jax
import jax.numpy as jnp
from jax.experimental import pallas as pl
from jax.experimental.pallas import tpu as pltpu

LATENT_DIM = 32
SEQ_LEN = 187                       # fc1 in_features = 2944 = 128 * 23

# per-stage sequence lengths and padded per-sample segment sizes
L1, L2, L3, L4 = 187, 93, 46, 23    # conv1/conv2/conv3 outputs, final pooled
SEG1, SEG2, SEG3 = 192, 96, 48      # >= L_i + 2, even, multiple of 8


# --------------------------------- kernel -----------------------------------

def _make_kernel(B, latent):
    NT1 = B * SEG1 - 2              # rows produced by each conv matmul
    NT2 = B * SEG2 - 2
    NT3 = B * SEG3 - 2

    def kernel(x_ref, w1_ref, b1_ref, w2_ref, b2_ref, w3_ref, b3_ref,
               wf_ref, bf_ref, wo_ref, bo_ref, o_ref,
               s1_ref, p2_ref, s2_ref, p3_ref, s3_ref, fcin_ref):
        # Zero the padded conv-input scratches once (only the two pad rows of
        # each per-sample segment actually matter; a full clear is one store).
        p2_ref[...] = jnp.zeros_like(p2_ref)
        p3_ref[...] = jnp.zeros_like(p3_ref)

        def conv3x1(src_ref, w_ref, b_ref, n_rows):
            """kernel-3 / pad-1 conv for the whole batch.

            src_ref holds zero-padded per-sample segments; tap k is simply the
            same ref read shifted by k rows.  Valid outputs land at rows
            b*SEG + l; rows between segments are ignored downstream.
            """
            taps = [src_ref[pl.ds(k, n_rows), :] for k in range(3)]
            cin = src_ref.shape[1]
            cout = w_ref.shape[-1]
            if cin == 1:
                # 3 broadcast FMAs on the VPU beat a degenerate K=3 matmul.
                acc = jnp.zeros((n_rows, cout), jnp.float32)
                for k in range(3):
                    acc = acc + taps[k] * w_ref[pl.ds(k, 1), :]
                return acc + b_ref[...]
            # Fuse the 3 taps into one bf16 matmul with K = 3*Cin.
            h3 = jnp.concatenate(taps, axis=-1).astype(jnp.bfloat16)
            return jnp.dot(h3, w_ref[...],
                           preferred_element_type=jnp.float32) + b_ref[...]

        # ---- stage 1: conv1 (1 -> 16) + maxpool(2) ----
        s1_ref[...] = conv3x1(x_ref, w1_ref, b1_ref, NT1)          # (NT1, 16)
        for b in range(B):                                         # data movement only
            ev = s1_ref[pl.ds(b * SEG1, L2, 2), :]
            od = s1_ref[pl.ds(b * SEG1 + 1, L2, 2), :]
            p2_ref[pl.ds(b * SEG2 + 1, L2), :] = jnp.maximum(ev, od)

        # ---- stage 2: conv2 (16 -> 64) + maxpool(2) ----
        s2_ref[...] = conv3x1(p2_ref, w2_ref, b2_ref, NT2)         # (NT2, 64)
        for b in range(B):
            ev = s2_ref[pl.ds(b * SEG2, L3, 2), :]
            od = s2_ref[pl.ds(b * SEG2 + 1, L3, 2), :]
            p3_ref[pl.ds(b * SEG3 + 1, L3), :] = jnp.maximum(ev, od)

        # ---- stage 3: conv3 (64 -> 128) + maxpool(2) fused with the flatten ----
        s3_ref[...] = conv3x1(p3_ref, w3_ref, b3_ref, NT3)         # (NT3, 128)
        for l in range(L4):
            # pooled position l for ALL batch items with one strided read per tap
            ev = s3_ref[pl.ds(2 * l, B, SEG3), :]                  # (B, 128)
            od = s3_ref[pl.ds(2 * l + 1, B, SEG3), :]
            fcin_ref[:, pl.ds(l * 128, 128)] = (
                jnp.maximum(ev, od).astype(jnp.bfloat16))

        # ---- fc1: one (B, 2944) x (2944, latent) matmul + LeakyReLU(0.01) ----
        y = jnp.dot(fcin_ref[...], wf_ref[...],
                    preferred_element_type=jnp.float32) + bf_ref[...]
        y = jnp.where(y > 0, y, 0.01 * y)

        # ---- output head: (B, latent) x (latent, 2) ----
        o_ref[...] = jnp.dot(y.astype(jnp.bfloat16), wo_ref[...],
                             preferred_element_type=jnp.float32) + bo_ref[...]

    return kernel


# --------------------------------- wrapper ----------------------------------

def classifier_ecg_forward(x, p):
    """x: (B, 187) float32, p: dict of PyTorch-shaped params -> (B, 2) float32."""
    B, L = x.shape
    assert L == SEQ_LEN
    latent = p["wf"].shape[0]

    # Padded input segments: row b*SEG1 + 1 + i holds x[b, i]; pad rows are 0.
    xp = jnp.zeros((B, SEG1), jnp.float32).at[:, 1:1 + L].set(x)
    xp = xp.reshape(B * SEG1, 1)

    # Conv weights -> (k*Cin + c, Cout), matching the lane-concatenated taps.
    w1 = jnp.transpose(p["w1"], (2, 1, 0)).reshape(3 * 1, 16).astype(jnp.bfloat16)
    w2 = jnp.transpose(p["w2"], (2, 1, 0)).reshape(3 * 16, 64).astype(jnp.bfloat16)
    w3 = jnp.transpose(p["w3"], (2, 1, 0)).reshape(3 * 64, 128).astype(jnp.bfloat16)
    b1 = p["b1"].reshape(1, -1)
    b2 = p["b2"].reshape(1, -1)
    b3 = p["b3"].reshape(1, -1)
    # torch flatten order is c*23 + l; the kernel builds fc input as l*128 + c.
    wf = (jnp.transpose(p["wf"].reshape(latent, 128, 23), (2, 1, 0))
          .reshape(23 * 128, latent).astype(jnp.bfloat16))
    bf = p["bf"].reshape(1, -1)
    wo = jnp.transpose(p["wo"], (1, 0)).astype(jnp.bfloat16)
    bo = p["bo"].reshape(1, -1)

    vmem = pl.BlockSpec(memory_space=pltpu.MemorySpace.VMEM)
    # TODO(synk): if batch size grows, tile B onto a parallel grid axis
    # (2 TensorCores on v7x) instead of a single full-VMEM invocation.
    return pl.pallas_call(
        _make_kernel(B, latent),
        out_shape=jax.ShapeDtypeStruct((B, 2), jnp.float32),
        in_specs=[vmem] * 11,
        out_specs=vmem,
        scratch_shapes=[
            pltpu.VMEM((B * SEG1 - 2, 16), jnp.float32),    # s1: conv1 out
            pltpu.VMEM((B * SEG2, 16), jnp.float32),        # p2: padded conv2 in
            pltpu.VMEM((B * SEG2 - 2, 64), jnp.float32),    # s2: conv2 out
            pltpu.VMEM((B * SEG3, 64), jnp.float32),        # p3: padded conv3 in
            pltpu.VMEM((B * SEG3 - 2, 128), jnp.float32),   # s3: conv3 out
            pltpu.VMEM((B, 23 * 128), jnp.bfloat16),        # fcin: flattened fc1 input
        ],
    )(xp, w1, b1, w2, b2, w3, b3, wf, bf, wo, bo)


# ------------------------- params + pure-JAX reference ----------------------

def init_params(key, latent_dim=LATENT_DIM):
    ks = jax.random.split(key, 10)

    def u(k, shape, fan_in):
        bound = 1.0 / jnp.sqrt(jnp.float32(fan_in))
        return jax.random.uniform(k, shape, jnp.float32, -bound, bound)

    return {
        "w1": u(ks[0], (16, 1, 3), 1 * 3),    "b1": u(ks[1], (16,), 1 * 3),
        "w2": u(ks[2], (64, 16, 3), 16 * 3),  "b2": u(ks[3], (64,), 16 * 3),
        "w3": u(ks[4], (128, 64, 3), 64 * 3), "b3": u(ks[5], (128,), 64 * 3),
        "wf": u(ks[6], (latent_dim, 2944), 2944), "bf": u(ks[7], (latent_dim,), 2944),
        "wo": u(ks[8], (2, latent_dim), latent_dim), "bo": u(ks[9], (2,), latent_dim),
    }


def ref_forward(x, p):
    h = x[:, None, :]                                     # (B, 1, L)  NCW

    def conv(h, w, b):
        y = jax.lax.conv_general_dilated(
            h, w, window_strides=(1,), padding=((1, 1),),
            dimension_numbers=("NCH", "OIH", "NCH"))
        return y + b[None, :, None]

    def pool(h):
        B_, C_, L_ = h.shape
        Lh = L_ // 2
        return jnp.max(h[:, :, :2 * Lh].reshape(B_, C_, Lh, 2), axis=-1)

    h = pool(conv(h, p["w1"], p["b1"]))
    h = pool(conv(h, p["w2"], p["b2"]))
    h = pool(conv(h, p["w3"], p["b3"]))
    flat = h.reshape(h.shape[0], -1)                      # (B, 2944), c-major
    y = flat @ p["wf"].T + p["bf"]
    y = jnp.where(y > 0, y, 0.01 * y)
    return y @ p["wo"].T + p["bo"]


# ----------------------------------- main ------------------------------------

if __name__ == "__main__":
    key = jax.random.PRNGKey(0)
    kx, kp = jax.random.split(key)
    B = 2
    x = jax.random.normal(kx, (B, SEQ_LEN), jnp.float32)
    params = init_params(kp, LATENT_DIM)

    out = jax.block_until_ready(classifier_ecg_forward(x, params))

    ref = jax.block_until_ready(ref_forward(x, params))
    if out.shape != (B, 2) or not jnp.allclose(out, ref, atol=5e-2, rtol=5e-2):
        raise AssertionError("Pallas kernel output does not match JAX reference")

    # TODO(synk): training loop / CrossEntropyLoss / checkpoint & metadata IO
    # from the PyTorch module are out of scope for the forward kernel.
    print("KERNEL_OK")
</pallas_src>

<mosaic_0001>
module attributes {stable_mosaic.version = 11 : i64} {
  func.func @kernel(%arg0: memref<384x1xf32, #tpu.memory_space<vmem>>, %arg1: memref<3x16xbf16, #tpu.memory_space<vmem>>, %arg2: memref<1x16xf32, #tpu.memory_space<vmem>>, %arg3: memref<48x64xbf16, #tpu.memory_space<vmem>>, %arg4: memref<1x64xf32, #tpu.memory_space<vmem>>, %arg5: memref<192x128xbf16, #tpu.memory_space<vmem>>, %arg6: memref<1x128xf32, #tpu.memory_space<vmem>>, %arg7: memref<2944x32xbf16, #tpu.memory_space<vmem>>, %arg8: memref<1x32xf32, #tpu.memory_space<vmem>>, %arg9: memref<32x2xbf16, #tpu.memory_space<vmem>>, %arg10: memref<1x2xf32, #tpu.memory_space<vmem>>, %arg11: memref<2x2xf32, #tpu.memory_space<vmem>>, %arg12: memref<382x16xf32, #tpu.memory_space<vmem>>, %arg13: memref<192x16xf32, #tpu.memory_space<vmem>>, %arg14: memref<190x64xf32, #tpu.memory_space<vmem>>, %arg15: memref<96x64xf32, #tpu.memory_space<vmem>>, %arg16: memref<94x128xf32, #tpu.memory_space<vmem>>, %arg17: memref<2x2944xbf16, #tpu.memory_space<vmem>>) attributes {dimension_semantics = [], scalar_prefetch = 0 : i64, scratch_operands = 6 : i64, tpu.core_type = #tpu.core_type<tc>} {
    %cst = arith.constant 0.000000e+00 : f32
    %0 = vector.broadcast %cst : f32 to vector<192x16xf32>
    %c0 = arith.constant 0 : index
    %c0_0 = arith.constant 0 : index
    %1 = vector.load %arg13[%c0, %c0_0] : memref<192x16xf32, #tpu.memory_space<vmem>>, vector<192x16xf32>
    tpu.vector_store %arg13[%c0, %c0_0], %0 {strides = array<i32>} : memref<192x16xf32, #tpu.memory_space<vmem>>, vector<192x16xf32>,
    %cst_1 = arith.constant 0.000000e+00 : f32
    %2 = vector.broadcast %cst_1 : f32 to vector<96x64xf32>
    %c0_2 = arith.constant 0 : index
    %c0_3 = arith.constant 0 : index
    %3 = vector.load %arg15[%c0_2, %c0_3] : memref<96x64xf32, #tpu.memory_space<vmem>>, vector<96x64xf32>
    tpu.vector_store %arg15[%c0_2, %c0_3], %2 {strides = array<i32>} : memref<96x64xf32, #tpu.memory_space<vmem>>, vector<96x64xf32>,
    %c0_4 = arith.constant 0 : index
    %c0_5 = arith.constant 0 : index
    %4 = vector.load %arg0[%c0_4, %c0_5] : memref<384x1xf32, #tpu.memory_space<vmem>>, vector<382x1xf32>
    %c1 = arith.constant 1 : index
    %c0_6 = arith.constant 0 : index
    %5 = vector.load %arg0[%c1, %c0_6] : memref<384x1xf32, #tpu.memory_space<vmem>>, vector<382x1xf32>
    %c2 = arith.constant 2 : index
    %c0_7 = arith.constant 0 : index
    %6 = vector.load %arg0[%c2, %c0_7] : memref<384x1xf32, #tpu.memory_space<vmem>>, vector<382x1xf32>
    %cst_8 = arith.constant 0.000000e+00 : f32
    %7 = vector.broadcast %cst_8 : f32 to vector<382x16xf32>
    %c0_9 = arith.constant 0 : index
    %c0_10 = arith.constant 0 : index
    %8 = vector.load %arg1[%c0_9, %c0_10] : memref<3x16xbf16, #tpu.memory_space<vmem>>, vector<1x16xbf16>
    %9 = arith.extf %8 : vector<1x16xbf16> to vector<1x16xf32>
    %10 = vector.broadcast %4 : vector<382x1xf32> to vector<382x16xf32>
    %11 = vector.broadcast %9 : vector<1x16xf32> to vector<382x16xf32>
    %12 = arith.mulf %10, %11 : vector<382x16xf32>
    %13 = arith.addf %7, %12 : vector<382x16xf32>
    %c1_11 = arith.constant 1 : index
    %c0_12 = arith.constant 0 : index
    %14 = vector.load %arg1[%c1_11, %c0_12] : memref<3x16xbf16, #tpu.memory_space<vmem>>, vector<1x16xbf16>
    %15 = arith.extf %14 : vector<1x16xbf16> to vector<1x16xf32>
    %16 = vector.broadcast %5 : vector<382x1xf32> to vector<382x16xf32>
    %17 = vector.broadcast %15 : vector<1x16xf32> to vector<382x16xf32>
    %18 = arith.mulf %16, %17 : vector<382x16xf32>
    %19 = arith.addf %13, %18 : vector<382x16xf32>
    %c2_13 = arith.constant 2 : index
    %c0_14 = arith.constant 0 : index
    %20 = vector.load %arg1[%c2_13, %c0_14] : memref<3x16xbf16, #tpu.memory_space<vmem>>, vector<1x16xbf16>
    %21 = arith.extf %20 : vector<1x16xbf16> to vector<1x16xf32>
    %22 = vector.broadcast %6 : vector<382x1xf32> to vector<382x16xf32>
    %23 = vector.broadcast %21 : vector<1x16xf32> to vector<382x16xf32>
    %24 = arith.mulf %22, %23 : vector<382x16xf32>
    %25 = arith.addf %19, %24 : vector<382x16xf32>
    %c0_15 = arith.constant 0 : index
    %c0_16 = arith.constant 0 : index
    %26 = vector.load %arg2[%c0_15, %c0_16] : memref<1x16xf32, #tpu.memory_space<vmem>>, vector<1x16xf32>
    %27 = vector.broadcast %26 : vector<1x16xf32> to vector<382x16xf32>
    %28 = arith.addf %25, %27 : vector<382x16xf32>
    %c0_17 = arith.constant 0 : index
    %c0_18 = arith.constant 0 : index
    %29 = vector.load %arg12[%c0_17, %c0_18] : memref<382x16xf32, #tpu.memory_space<vmem>>, vector<382x16xf32>
    tpu.vector_store %arg12[%c0_17, %c0_18], %28 {strides = array<i32>} : memref<382x16xf32, #tpu.memory_space<vmem>>, vector<382x16xf32>,
    %c0_19 = arith.constant 0 : index
    %c0_20 = arith.constant 0 : index
    %30 = tpu.strided_load %arg12[%c0_19, %c0_20] {strides = array<i32: 2, 1>} : memref<382x16xf32, #tpu.memory_space<vmem>>, vector<93x16xf32>
    %c1_21 = arith.constant 1 : index
    %c0_22 = arith.constant 0 : index
    %31 = tpu.strided_load %arg12[%c1_21, %c0_22] {strides = array<i32: 2, 1>} : memref<382x16xf32, #tpu.memory_space<vmem>>, vector<93x16xf32>
    %32 = arith.maximumf %30, %31 : vector<93x16xf32>
    %c1_23 = arith.constant 1 : index
    %c0_24 = arith.constant 0 : index
    %33 = vector.load %arg13[%c1_23, %c0_24] : memref<192x16xf32, #tpu.memory_space<vmem>>, vector<93x16xf32>
    tpu.vector_store %arg13[%c1_23, %c0_24], %32 {strides = array<i32>} : memref<192x16xf32, #tpu.memory_space<vmem>>, vector<93x16xf32>,
    %c192 = arith.constant 192 : index
    %c0_25 = arith.constant 0 : index
    %34 = tpu.strided_load %arg12[%c192, %c0_25] {strides = array<i32: 2, 1>} : memref<382x16xf32, #tpu.memory_space<vmem>>, vector<93x16xf32>
    %c193 = arith.constant 193 : index
    %c0_26 = arith.constant 0 : index
    %35 = tpu.strided_load %arg12[%c193, %c0_26] {strides = array<i32: 2, 1>} : memref<382x16xf32, #tpu.memory_space<vmem>>, vector<93x16xf32>
    %36 = arith.maximumf %34, %35 : vector<93x16xf32>
    %c97 = arith.constant 97 : index
    %c0_27 = arith.constant 0 : index
    %37 = vector.load %arg13[%c97, %c0_27] : memref<192x16xf32, #tpu.memory_space<vmem>>, vector<93x16xf32>
    tpu.vector_store %arg13[%c97, %c0_27], %36 {strides = array<i32>} : memref<192x16xf32, #tpu.memory_space<vmem>>, vector<93x16xf32>,
    %c0_28 = arith.constant 0 : index
    %c0_29 = arith.constant 0 : index
    %38 = vector.load %arg13[%c0_28, %c0_29] : memref<192x16xf32, #tpu.memory_space<vmem>>, vector<190x16xf32>
    %c1_30 = arith.constant 1 : index
    %c0_31 = arith.constant 0 : index
    %39 = vector.load %arg13[%c1_30, %c0_31] : memref<192x16xf32, #tpu.memory_space<vmem>>, vector<190x16xf32>
    %c2_32 = arith.constant 2 : index
    %c0_33 = arith.constant 0 : index
    %40 = vector.load %arg13[%c2_32, %c0_33] : memref<192x16xf32, #tpu.memory_space<vmem>>, vector<190x16xf32>
    %41 = tpu.concatenate %38, %39, %40 in 1 : vector<190x16xf32>, vector<190x16xf32>, vector<190x16xf32> -> vector<190x48xf32>
    %42 = arith.truncf %41 : vector<190x48xf32> to vector<190x48xbf16>
    %c0_34 = arith.constant 0 : index
    %c0_35 = arith.constant 0 : index
    %43 = vector.load %arg3[%c0_34, %c0_35] : memref<48x64xbf16, #tpu.memory_space<vmem>>, vector<48x64xbf16>
    %cst_36 = arith.constant dense<0.000000e+00> : vector<190x64xf32>
    %44 = tpu.matmul %42, %43, %cst_36 {dimension_numbers = #tpu.dot_dimension_numbers<[1], [0], [0], [1], [0, 0, 1, 1], [], []>} : vector<190x48xbf16>, vector<48x64xbf16>, vector<190x64xf32> -> vector<190x64xf32>
    %c0_37 = arith.constant 0 : index
    %c0_38 = arith.constant 0 : index
    %45 = vector.load %arg4[%c0_37, %c0_38] : memref<1x64xf32, #tpu.memory_space<vmem>>, vector<1x64xf32>
    %46 = vector.broadcast %45 : vector<1x64xf32> to vector<190x64xf32>
    %47 = arith.addf %44, %46 : vector<190x64xf32>
    %c0_39 = arith.constant 0 : index
    %c0_40 = arith.constant 0 : index
    %48 = vector.load %arg14[%c0_39, %c0_40] : memref<190x64xf32, #tpu.memory_space<vmem>>, vector<190x64xf32>
    tpu.vector_store %arg14[%c0_39, %c0_40], %47 {strides = array<i32>} : memref<190x64xf32, #tpu.memory_space<vmem>>, vector<190x64xf32>,
    %c0_41 = arith.constant 0 : index
    %c0_42 = arith.constant 0 : index
    %49 = tpu.strided_load %arg14[%c0_41, %c0_42] {strides = array<i32: 2, 1>} : memref<190x64xf32, #tpu.memory_space<vmem>>, vector<46x64xf32>
    %c1_43 = arith.constant 1 : index
    %c0_44 = arith.constant 0 : index
    %50 = tpu.strided_load %arg14[%c1_43, %c0_44] {strides = array<i32: 2, 1>} : memref<190x64xf32, #tpu.memory_space<vmem>>, vector<46x64xf32>
    %51 = arith.maximumf %49, %50 : vector<46x64xf32>
    %c1_45 = arith.constant 1 : index
    %c0_46 = arith.constant 0 : index
    %52 = vector.load %arg15[%c1_45, %c0_46] : memref<96x64xf32, #tpu.memory_space<vmem>>, vector<46x64xf32>
    tpu.vector_store %arg15[%c1_45, %c0_46], %51 {strides = array<i32>} : memref<96x64xf32, #tpu.memory_space<vmem>>, vector<46x64xf32>,
    %c96 = arith.constant 96 : index
    %c0_47 = arith.constant 0 : index
    %53 = tpu.strided_load %arg14[%c96, %c0_47] {strides = array<i32: 2, 1>} : memref<190x64xf32, #tpu.memory_space<vmem>>, vector<46x64xf32>
    %c97_48 = arith.constant 97 : index
    %c0_49 = arith.constant 0 : index
    %54 = tpu.strided_load %arg14[%c97_48, %c0_49] {strides = array<i32: 2, 1>} : memref<190x64xf32, #tpu.memory_space<vmem>>, vector<46x64xf32>
    %55 = arith.maximumf %53, %54 : vector<46x64xf32>
    %c49 = arith.constant 49 : index
    %c0_50 = arith.constant 0 : index
    %56 = vector.load %arg15[%c49, %c0_50] : memref<96x64xf32, #tpu.memory_space<vmem>>, vector<46x64xf32>
    tpu.vector_store %arg15[%c49, %c0_50], %55 {strides = array<i32>} : memref<96x64xf32, #tpu.memory_space<vmem>>, vector<46x64xf32>,
    %c0_51 = arith.constant 0 : index
    %c0_52 = arith.constant 0 : index
    %57 = vector.load %arg15[%c0_51, %c0_52] : memref<96x64xf32, #tpu.memory_space<vmem>>, vector<94x64xf32>
    %c1_53 = arith.constant 1 : index
    %c0_54 = arith.constant 0 : index
    %58 = vector.load %arg15[%c1_53, %c0_54] : memref<96x64xf32, #tpu.memory_space<vmem>>, vector<94x64xf32>
    %c2_55 = arith.constant 2 : index
    %c0_56 = arith.constant 0 : index
    %59 = vector.load %arg15[%c2_55, %c0_56] : memref<96x64xf32, #tpu.memory_space<vmem>>, vector<94x64xf32>
    %60 = tpu.concatenate %57, %58, %59 in 1 : vector<94x64xf32>, vector<94x64xf32>, vector<94x64xf32> -> vector<94x192xf32>
    %61 = arith.truncf %60 : vector<94x192xf32> to vector<94x192xbf16>
    %c0_57 = arith.constant 0 : index
    %c0_58 = arith.constant 0 : index
    %62 = vector.load %arg5[%c0_57, %c0_58] : memref<192x128xbf16, #tpu.memory_space<vmem>>, vector<192x128xbf16>
    %cst_59 = arith.constant dense<0.000000e+00> : vector<94x128xf32>
    %63 = tpu.matmul %61, %62, %cst_59 {dimension_numbers = #tpu.dot_dimension_numbers<[1], [0], [0], [1], [0, 0, 1, 1], [], []>} : vector<94x192xbf16>, vector<192x128xbf16>, vector<94x128xf32> -> vector<94x128xf32>
    %c0_60 = arith.constant 0 : index
    %c0_61 = arith.constant 0 : index
    %64 = vector.load %arg6[%c0_60, %c0_61] : memref<1x128xf32, #tpu.memory_space<vmem>>, vector<1x128xf32>
    %65 = vector.broadcast %64 : vector<1x128xf32> to vector<94x128xf32>
    %66 = arith.addf %63, %65 : vector<94x128xf32>
    %c0_62 = arith.constant 0 : index
    %c0_63 = arith.constant 0 : index
    %67 = vector.load %arg16[%c0_62, %c0_63] : memref<94x128xf32, #tpu.memory_space<vmem>>, vector<94x128xf32>
    tpu.vector_store %arg16[%c0_62, %c0_63], %66 {strides = array<i32>} : memref<94x128xf32, #tpu.memory_space<vmem>>, vector<94x128xf32>,
    %c0_64 = arith.constant 0 : index
    %c0_65 = arith.constant 0 : index
    %68 = tpu.strided_load %arg16[%c0_64, %c0_65] {strides = array<i32: 48, 1>} : memref<94x128xf32, #tpu.memory_space<vmem>>, vector<2x128xf32>
    %c1_66 = arith.constant 1 : index
    %c0_67 = arith.constant 0 : index
    %69 = tpu.strided_load %arg16[%c1_66, %c0_67] {strides = array<i32: 48, 1>} : memref<94x128xf32, #tpu.memory_space<vmem>>, vector<2x128xf32>
    %70 = arith.maximumf %68, %69 : vector<2x128xf32>
    %71 = arith.truncf %70 : vector<2x128xf32> to vector<2x128xbf16>
    %c0_68 = arith.constant 0 : index
    %c0_69 = arith.constant 0 : index
    %72 = vector.load %arg17[%c0_68, %c0_69] : memref<2x2944xbf16, #tpu.memory_space<vmem>>, vector<2x128xbf16>
    tpu.vector_store %arg17[%c0_68, %c0_69], %71 {strides = array<i32>} : memref<2x2944xbf16, #tpu.memory_space<vmem>>, vector<2x128xbf16>,
    %c2_70 = arith.constant 2 : index
    %c0_71 = arith.constant 0 : index
    %73 = tpu.strided_load %arg16[%c2_70, %c0_71] {strides = array<i32: 48, 1>} : memref<94x128xf32, #tpu.memory_space<vmem>>, vector<2x128xf32>
    %c3 = arith.constant 3 : index
    %c0_72 = arith.constant 0 : index
    %74 = tpu.strided_load %arg16[%c3, %c0_72] {strides = array<i32: 48, 1>} : memref<94x128xf32, #tpu.memory_space<vmem>>, vector<2x128xf32>
    %75 = arith.maximumf %73, %74 : vector<2x128xf32>
    %76 = arith.truncf %75 : vector<2x128xf32> to vector<2x128xbf16>
    %c0_73 = arith.constant 0 : index
    %c128 = arith.constant 128 : index
    %77 = vector.load %arg17[%c0_73, %c128] : memref<2x2944xbf16, #tpu.memory_space<vmem>>, vector<2x128xbf16>
    tpu.vector_store %arg17[%c0_73, %c128], %76 {strides = array<i32>} : memref<2x2944xbf16, #tpu.memory_space<vmem>>, vector<2x128xbf16>,
    %c4 = arith.constant 4 : index
    %c0_74 = arith.constant 0 : index
    %78 = tpu.strided_load %arg16[%c4, %c0_74] {strides = array<i32: 48, 1>} : memref<94x128xf32, #tpu.memory_space<vmem>>, vector<2x128xf32>
    %c5 = arith.constant 5 : index
    %c0_75 = arith.constant 0 : index
    %79 = tpu.strided_load %arg16[%c5, %c0_75] {strides = array<i32: 48, 1>} : memref<94x128xf32, #tpu.memory_space<vmem>>, vector<2x128xf32>
    %80 = arith.maximumf %78, %79 : vector<2x128xf32>
    %81 = arith.truncf %80 : vector<2x128xf32> to vector<2x128xbf16>
    %c0_76 = arith.constant 0 : index
    %c256 = arith.constant 256 : index
    %82 = vector.load %arg17[%c0_76, %c256] : memref<2x2944xbf16, #tpu.memory_space<vmem>>, vector<2x128xbf16>
    tpu.vector_store %arg17[%c0_76, %c256], %81 {strides = array<i32>} : memref<2x2944xbf16, #tpu.memory_space<vmem>>, vector<2x128xbf16>,
    %c6 = arith.constant 6 : index
    %c0_77 = arith.constant 0 : index
    %83 = tpu.strided_load %arg16[%c6, %c0_77] {strides = array<i32: 48, 1>} : memref<94x128xf32, #tpu.memory_space<vmem>>, vector<2x128xf32>
    %c7 = arith.constant 7 : index
    %c0_78 = arith.constant 0 : index
    %84 = tpu.strided_load %arg16[%c7, %c0_78] {strides = array<i32: 48, 1>} : memref<94x128xf32, #tpu.memory_space<vmem>>, vector<2x128xf32>
    %85 = arith.maximumf %83, %84 : vector<2x128xf32>
    %86 = arith.truncf %85 : vector<2x128xf32> to vector<2x128xbf16>
    %c0_79 = arith.constant 0 : index
    %c384 = arith.constant 384 : index
    %87 = vector.load %arg17[%c0_79, %c384] : memref<2x2944xbf16, #tpu.memory_space<vmem>>, vector<2x128xbf16>
    tpu.vector_store %arg17[%c0_79, %c384], %86 {strides = array<i32>} : memref<2x2944xbf16, #tpu.memory_space<vmem>>, vector<2x128xbf16>,
    %c8 = arith.constant 8 : index
    %c0_80 = arith.constant 0 : index
    %88 = tpu.strided_load %arg16[%c8, %c0_80] {strides = array<i32: 48, 1>} : memref<94x128xf32, #tpu.memory_space<vmem>>, vector<2x128xf32>
    %c9 = arith.constant 9 : index
    %c0_81 = arith.constant 0 : index
    %89 = tpu.strided_load %arg16[%c9, %c0_81] {strides = array<i32: 48, 1>} : memref<94x128xf32, #tpu.memory_space<vmem>>, vector<2x128xf32>
    %90 = arith.maximumf %88, %89 : vector<2x128xf32>
    %91 = arith.truncf %90 : vector<2x128xf32> to vector<2x128xbf16>
    %c0_82 = arith.constant 0 : index
    %c512 = arith.constant 512 : index
    %92 = vector.load %arg17[%c0_82, %c512] : memref<2x2944xbf16, #tpu.memory_space<vmem>>, vector<2x128xbf16>
    tpu.vector_store %arg17[%c0_82, %c512], %91 {strides = array<i32>} : memref<2x2944xbf16, #tpu.memory_space<vmem>>, vector<2x128xbf16>,
    %c10 = arith.constant 10 : index
    %c0_83 = arith.constant 0 : index
    %93 = tpu.strided_load %arg16[%c10, %c0_83] {strides = array<i32: 48, 1>} : memref<94x128xf32, #tpu.memory_space<vmem>>, vector<2x128xf32>
    %c11 = arith.constant 11 : index
    %c0_84 = arith.constant 0 : index
    %94 = tpu.strided_load %arg16[%c11, %c0_84] {strides = array<i32: 48, 1>} : memref<94x128xf32, #tpu.memory_space<vmem>>, vector<2x128xf32>
    %95 = arith.maximumf %93, %94 : vector<2x128xf32>
    %96 = arith.truncf %95 : vector<2x128xf32> to vector<2x128xbf16>
    %c0_85 = arith.constant 0 : index
    %c640 = arith.constant 640 : index
    %97 = vector.load %arg17[%c0_85, %c640] : memref<2x2944xbf16, #tpu.memory_space<vmem>>, vector<2x128xbf16>
    tpu.vector_store %arg17[%c0_85, %c640], %96 {strides = array<i32>} : memref<2x2944xbf16, #tpu.memory_space<vmem>>, vector<2x128xbf16>,
    %c12 = arith.constant 12 : index
    %c0_86 = arith.constant 0 : index
    %98 = tpu.strided_load %arg16[%c12, %c0_86] {strides = array<i32: 48, 1>} : memref<94x128xf32, #tpu.memory_space<vmem>>, vector<2x128xf32>
    %c13 = arith.constant 13 : index
    %c0_87 = arith.constant 0 : index
    %99 = tpu.strided_load %arg16[%c13, %c0_87] {strides = array<i32: 48, 1>} : memref<94x128xf32, #tpu.memory_space<vmem>>, vector<2x128xf32>
    %100 = arith.maximumf %98, %99 : vector<2x128xf32>
    %101 = arith.truncf %100 : vector<2x128xf32> to vector<2x128xbf16>
    %c0_88 = arith.constant 0 : index
    %c768 = arith.constant 768 : index
    %102 = vector.load %arg17[%c0_88, %c768] : memref<2x2944xbf16, #tpu.memory_space<vmem>>, vector<2x128xbf16>
    tpu.vector_store %arg17[%c0_88, %c768], %101 {strides = array<i32>} : memref<2x2944xbf16, #tpu.memory_space<vmem>>, vector<2x128xbf16>,
    %c14 = arith.constant 14 : index
    %c0_89 = arith.constant 0 : index
    %103 = tpu.strided_load %arg16[%c14, %c0_89] {strides = array<i32: 48, 1>} : memref<94x128xf32, #tpu.memory_space<vmem>>, vector<2x128xf32>
    %c15 = arith.constant 15 : index
    %c0_90 = arith.constant 0 : index
    %104 = tpu.strided_load %arg16[%c15, %c0_90] {strides = array<i32: 48, 1>} : memref<94x128xf32, #tpu.memory_space<vmem>>, vector<2x128xf32>
    %105 = arith.maximumf %103, %104 : vector<2x128xf32>
    %106 = arith.truncf %105 : vector<2x128xf32> to vector<2x128xbf16>
    %c0_91 = arith.constant 0 : index
    %c896 = arith.constant 896 : index
    %107 = vector.load %arg17[%c0_91, %c896] : memref<2x2944xbf16, #tpu.memory_space<vmem>>, vector<2x128xbf16>
    tpu.vector_store %arg17[%c0_91, %c896], %106 {strides = array<i32>} : memref<2x2944xbf16, #tpu.memory_space<vmem>>, vector<2x128xbf16>,
    %c16 = arith.constant 16 : index
    %c0_92 = arith.constant 0 : index
    %108 = tpu.strided_load %arg16[%c16, %c0_92] {strides = array<i32: 48, 1>} : memref<94x128xf32, #tpu.memory_space<vmem>>, vector<2x128xf32>
    %c17 = arith.constant 17 : index
    %c0_93 = arith.constant 0 : index
    %109 = tpu.strided_load %arg16[%c17, %c0_93] {strides = array<i32: 48, 1>} : memref<94x128xf32, #tpu.memory_space<vmem>>, vector<2x128xf32>
    %110 = arith.maximumf %108, %109 : vector<2x128xf32>
    %111 = arith.truncf %110 : vector<2x128xf32> to vector<2x128xbf16>
    %c0_94 = arith.constant 0 : index
    %c1024 = arith.constant 1024 : index
    %112 = vector.load %arg17[%c0_94, %c1024] : memref<2x2944xbf16, #tpu.memory_space<vmem>>, vector<2x128xbf16>
    tpu.vector_store %arg17[%c0_94, %c1024], %111 {strides = array<i32>} : memref<2x2944xbf16, #tpu.memory_space<vmem>>, vector<2x128xbf16>,
    %c18 = arith.constant 18 : index
    %c0_95 = arith.constant 0 : index
    %113 = tpu.strided_load %arg16[%c18, %c0_95] {strides = array<i32: 48, 1>} : memref<94x128xf32, #tpu.memory_space<vmem>>, vector<2x128xf32>
    %c19 = arith.constant 19 : index
    %c0_96 = arith.constant 0 : index
    %114 = tpu.strided_load %arg16[%c19, %c0_96] {strides = array<i32: 48, 1>} : memref<94x128xf32, #tpu.memory_space<vmem>>, vector<2x128xf32>
    %115 = arith.maximumf %113, %114 : vector<2x128xf32>
    %116 = arith.truncf %115 : vector<2x128xf32> to vector<2x128xbf16>
    %c0_97 = arith.constant 0 : index
    %c1152 = arith.constant 1152 : index
    %117 = vector.load %arg17[%c0_97, %c1152] : memref<2x2944xbf16, #tpu.memory_space<vmem>>, vector<2x128xbf16>
    tpu.vector_store %arg17[%c0_97, %c1152], %116 {strides = array<i32>} : memref<2x2944xbf16, #tpu.memory_space<vmem>>, vector<2x128xbf16>,
    %c20 = arith.constant 20 : index
    %c0_98 = arith.constant 0 : index
    %118 = tpu.strided_load %arg16[%c20, %c0_98] {strides = array<i32: 48, 1>} : memref<94x128xf32, #tpu.memory_space<vmem>>, vector<2x128xf32>
    %c21 = arith.constant 21 : index
    %c0_99 = arith.constant 0 : index
    %119 = tpu.strided_load %arg16[%c21, %c0_99] {strides = array<i32: 48, 1>} : memref<94x128xf32, #tpu.memory_space<vmem>>, vector<2x128xf32>
    %120 = arith.maximumf %118, %119 : vector<2x128xf32>
    %121 = arith.truncf %120 : vector<2x128xf32> to vector<2x128xbf16>
    %c0_100 = arith.constant 0 : index
    %c1280 = arith.constant 1280 : index
    %122 = vector.load %arg17[%c0_100, %c1280] : memref<2x2944xbf16, #tpu.memory_space<vmem>>, vector<2x128xbf16>
    tpu.vector_store %arg17[%c0_100, %c1280], %121 {strides = array<i32>} : memref<2x2944xbf16, #tpu.memory_space<vmem>>, vector<2x128xbf16>,
    %c22 = arith.constant 22 : index
    %c0_101 = arith.constant 0 : index
    %123 = tpu.strided_load %arg16[%c22, %c0_101] {strides = array<i32: 48, 1>} : memref<94x128xf32, #tpu.memory_space<vmem>>, vector<2x128xf32>
    %c23 = arith.constant 23 : index
    %c0_102 = arith.constant 0 : index
    %124 = tpu.strided_load %arg16[%c23, %c0_102] {strides = array<i32: 48, 1>} : memref<94x128xf32, #tpu.memory_space<vmem>>, vector<2x128xf32>
    %125 = arith.maximumf %123, %124 : vector<2x128xf32>
    %126 = arith.truncf %125 : vector<2x128xf32> to vector<2x128xbf16>
    %c0_103 = arith.constant 0 : index
    %c1408 = arith.constant 1408 : index
    %127 = vector.load %arg17[%c0_103, %c1408] : memref<2x2944xbf16, #tpu.memory_space<vmem>>, vector<2x128xbf16>
    tpu.vector_store %arg17[%c0_103, %c1408], %126 {strides = array<i32>} : memref<2x2944xbf16, #tpu.memory_space<vmem>>, vector<2x128xbf16>,
    %c24 = arith.constant 24 : index
    %c0_104 = arith.constant 0 : index
    %128 = tpu.strided_load %arg16[%c24, %c0_104] {strides = array<i32: 48, 1>} : memref<94x128xf32, #tpu.memory_space<vmem>>, vector<2x128xf32>
    %c25 = arith.constant 25 : index
    %c0_105 = arith.constant 0 : index
    %129 = tpu.strided_load %arg16[%c25, %c0_105] {strides = array<i32: 48, 1>} : memref<94x128xf32, #tpu.memory_space<vmem>>, vector<2x128xf32>
    %130 = arith.maximumf %128, %129 : vector<2x128xf32>
    %131 = arith.truncf %130 : vector<2x128xf32> to vector<2x128xbf16>
    %c0_106 = arith.constant 0 : index
    %c1536 = arith.constant 1536 : index
    %132 = vector.load %arg17[%c0_106, %c1536] : memref<2x2944xbf16, #tpu.memory_space<vmem>>, vector<2x128xbf16>
    tpu.vector_store %arg17[%c0_106, %c1536], %131 {strides = array<i32>} : memref<2x2944xbf16, #tpu.memory_space<vmem>>, vector<2x128xbf16>,
    %c26 = arith.constant 26 : index
    %c0_107 = arith.constant 0 : index
    %133 = tpu.strided_load %arg16[%c26, %c0_107] {strides = array<i32: 48, 1>} : memref<94x128xf32, #tpu.memory_space<vmem>>, vector<2x128xf32>
    %c27 = arith.constant 27 : index
    %c0_108 = arith.constant 0 : index
    %134 = tpu.strided_load %arg16[%c27, %c0_108] {strides = array<i32: 48, 1>} : memref<94x128xf32, #tpu.memory_space<vmem>>, vector<2x128xf32>
    %135 = arith.maximumf %133, %134 : vector<2x128xf32>
    %136 = arith.truncf %135 : vector<2x128xf32> to vector<2x128xbf16>
    %c0_109 = arith.constant 0 : index
    %c1664 = arith.constant 1664 : index
    %137 = vector.load %arg17[%c0_109, %c1664] : memref<2x2944xbf16, #tpu.memory_space<vmem>>, vector<2x128xbf16>
    tpu.vector_store %arg17[%c0_109, %c1664], %136 {strides = array<i32>} : memref<2x2944xbf16, #tpu.memory_space<vmem>>, vector<2x128xbf16>,
    %c28 = arith.constant 28 : index
    %c0_110 = arith.constant 0 : index
    %138 = tpu.strided_load %arg16[%c28, %c0_110] {strides = array<i32: 48, 1>} : memref<94x128xf32, #tpu.memory_space<vmem>>, vector<2x128xf32>
    %c29 = arith.constant 29 : index
    %c0_111 = arith.constant 0 : index
    %139 = tpu.strided_load %arg16[%c29, %c0_111] {strides = array<i32: 48, 1>} : memref<94x128xf32, #tpu.memory_space<vmem>>, vector<2x128xf32>
    %140 = arith.maximumf %138, %139 : vector<2x128xf32>
    %141 = arith.truncf %140 : vector<2x128xf32> to vector<2x128xbf16>
    %c0_112 = arith.constant 0 : index
    %c1792 = arith.constant 1792 : index
    %142 = vector.load %arg17[%c0_112, %c1792] : memref<2x2944xbf16, #tpu.memory_space<vmem>>, vector<2x128xbf16>
    tpu.vector_store %arg17[%c0_112, %c1792], %141 {strides = array<i32>} : memref<2x2944xbf16, #tpu.memory_space<vmem>>, vector<2x128xbf16>,
    %c30 = arith.constant 30 : index
    %c0_113 = arith.constant 0 : index
    %143 = tpu.strided_load %arg16[%c30, %c0_113] {strides = array<i32: 48, 1>} : memref<94x128xf32, #tpu.memory_space<vmem>>, vector<2x128xf32>
    %c31 = arith.constant 31 : index
    %c0_114 = arith.constant 0 : index
    %144 = tpu.strided_load %arg16[%c31, %c0_114] {strides = array<i32: 48, 1>} : memref<94x128xf32, #tpu.memory_space<vmem>>, vector<2x128xf32>
    %145 = arith.maximumf %143, %144 : vector<2x128xf32>
    %146 = arith.truncf %145 : vector<2x128xf32> to vector<2x128xbf16>
    %c0_115 = arith.constant 0 : index
    %c1920 = arith.constant 1920 : index
    %147 = vector.load %arg17[%c0_115, %c1920] : memref<2x2944xbf16, #tpu.memory_space<vmem>>, vector<2x128xbf16>
    tpu.vector_store %arg17[%c0_115, %c1920], %146 {strides = array<i32>} : memref<2x2944xbf16, #tpu.memory_space<vmem>>, vector<2x128xbf16>,
    %c32 = arith.constant 32 : index
    %c0_116 = arith.constant 0 : index
    %148 = tpu.strided_load %arg16[%c32, %c0_116] {strides = array<i32: 48, 1>} : memref<94x128xf32, #tpu.memory_space<vmem>>, vector<2x128xf32>
    %c33 = arith.constant 33 : index
    %c0_117 = arith.constant 0 : index
    %149 = tpu.strided_load %arg16[%c33, %c0_117] {strides = array<i32: 48, 1>} : memref<94x128xf32, #tpu.memory_space<vmem>>, vector<2x128xf32>
    %150 = arith.maximumf %148, %149 : vector<2x128xf32>
    %151 = arith.truncf %150 : vector<2x128xf32> to vector<2x128xbf16>
    %c0_118 = arith.constant 0 : index
    %c2048 = arith.constant 2048 : index
    %152 = vector.load %arg17[%c0_118, %c2048] : memref<2x2944xbf16, #tpu.memory_space<vmem>>, vector<2x128xbf16>
    tpu.vector_store %arg17[%c0_118, %c2048], %151 {strides = array<i32>} : memref<2x2944xbf16, #tpu.memory_space<vmem>>, vector<2x128xbf16>,
    %c34 = arith.constant 34 : index
    %c0_119 = arith.constant 0 : index
    %153 = tpu.strided_load %arg16[%c34, %c0_119] {strides = array<i32: 48, 1>} : memref<94x128xf32, #tpu.memory_space<vmem>>, vector<2x128xf32>
    %c35 = arith.constant 35 : index
    %c0_120 = arith.constant 0 : index
    %154 = tpu.strided_load %arg16[%c35, %c0_120] {strides = array<i32: 48, 1>} : memref<94x128xf32, #tpu.memory_space<vmem>>, vector<2x128xf32>
    %155 = arith.maximumf %153, %154 : vector<2x128xf32>
    %156 = arith.truncf %155 : vector<2x128xf32> to vector<2x128xbf16>
    %c0_121 = arith.constant 0 : index
    %c2176 = arith.constant 2176 : index
    %157 = vector.load %arg17[%c0_121, %c2176] : memref<2x2944xbf16, #tpu.memory_space<vmem>>, vector<2x128xbf16>
    tpu.vector_store %arg17[%c0_121, %c2176], %156 {strides = array<i32>} : memref<2x2944xbf16, #tpu.memory_space<vmem>>, vector<2x128xbf16>,
    %c36 = arith.constant 36 : index
    %c0_122 = arith.constant 0 : index
    %158 = tpu.strided_load %arg16[%c36, %c0_122] {strides = array<i32: 48, 1>} : memref<94x128xf32, #tpu.memory_space<vmem>>, vector<2x128xf32>
    %c37 = arith.constant 37 : index
    %c0_123 = arith.constant 0 : index
    %159 = tpu.strided_load %arg16[%c37, %c0_123] {strides = array<i32: 48, 1>} : memref<94x128xf32, #tpu.memory_space<vmem>>, vector<2x128xf32>
    %160 = arith.maximumf %158, %159 : vector<2x128xf32>
    %161 = arith.truncf %160 : vector<2x128xf32> to vector<2x128xbf16>
    %c0_124 = arith.constant 0 : index
    %c2304 = arith.constant 2304 : index
    %162 = vector.load %arg17[%c0_124, %c2304] : memref<2x2944xbf16, #tpu.memory_space<vmem>>, vector<2x128xbf16>
    tpu.vector_store %arg17[%c0_124, %c2304], %161 {strides = array<i32>} : memref<2x2944xbf16, #tpu.memory_space<vmem>>, vector<2x128xbf16>,
    %c38 = arith.constant 38 : index
    %c0_125 = arith.constant 0 : index
    %163 = tpu.strided_load %arg16[%c38, %c0_125] {strides = array<i32: 48, 1>} : memref<94x128xf32, #tpu.memory_space<vmem>>, vector<2x128xf32>
    %c39 = arith.constant 39 : index
    %c0_126 = arith.constant 0 : index
    %164 = tpu.strided_load %arg16[%c39, %c0_126] {strides = array<i32: 48, 1>} : memref<94x128xf32, #tpu.memory_space<vmem>>, vector<2x128xf32>
    %165 = arith.maximumf %163, %164 : vector<2x128xf32>
    %166 = arith.truncf %165 : vector<2x128xf32> to vector<2x128xbf16>
    %c0_127 = arith.constant 0 : index
    %c2432 = arith.constant 2432 : index
    %167 = vector.load %arg17[%c0_127, %c2432] : memref<2x2944xbf16, #tpu.memory_space<vmem>>, vector<2x128xbf16>
    tpu.vector_store %arg17[%c0_127, %c2432], %166 {strides = array<i32>} : memref<2x2944xbf16, #tpu.memory_space<vmem>>, vector<2x128xbf16>,
    %c40 = arith.constant 40 : index
    %c0_128 = arith.constant 0 : index
    %168 = tpu.strided_load %arg16[%c40, %c0_128] {strides = array<i32: 48, 1>} : memref<94x128xf32, #tpu.memory_space<vmem>>, vector<2x128xf32>
    %c41 = arith.constant 41 : index
    %c0_129 = arith.constant 0 : index
    %169 = tpu.strided_load %arg16[%c41, %c0_129] {strides = array<i32: 48, 1>} : memref<94x128xf32, #tpu.memory_space<vmem>>, vector<2x128xf32>
    %170 = arith.maximumf %168, %169 : vector<2x128xf32>
    %171 = arith.truncf %170 : vector<2x128xf32> to vector<2x128xbf16>
    %c0_130 = arith.constant 0 : index
    %c2560 = arith.constant 2560 : index
    %172 = vector.load %arg17[%c0_130, %c2560] : memref<2x2944xbf16, #tpu.memory_space<vmem>>, vector<2x128xbf16>
    tpu.vector_store %arg17[%c0_130, %c2560], %171 {strides = array<i32>} : memref<2x2944xbf16, #tpu.memory_space<vmem>>, vector<2x128xbf16>,
    %c42 = arith.constant 42 : index
    %c0_131 = arith.constant 0 : index
    %173 = tpu.strided_load %arg16[%c42, %c0_131] {strides = array<i32: 48, 1>} : memref<94x128xf32, #tpu.memory_space<vmem>>, vector<2x128xf32>
    %c43 = arith.constant 43 : index
    %c0_132 = arith.constant 0 : index
    %174 = tpu.strided_load %arg16[%c43, %c0_132] {strides = array<i32: 48, 1>} : memref<94x128xf32, #tpu.memory_space<vmem>>, vector<2x128xf32>
    %175 = arith.maximumf %173, %174 : vector<2x128xf32>
    %176 = arith.truncf %175 : vector<2x128xf32> to vector<2x128xbf16>
    %c0_133 = arith.constant 0 : index
    %c2688 = arith.constant 2688 : index
    %177 = vector.load %arg17[%c0_133, %c2688] : memref<2x2944xbf16, #tpu.memory_space<vmem>>, vector<2x128xbf16>
    tpu.vector_store %arg17[%c0_133, %c2688], %176 {strides = array<i32>} : memref<2x2944xbf16, #tpu.memory_space<vmem>>, vector<2x128xbf16>,
    %c44 = arith.constant 44 : index
    %c0_134 = arith.constant 0 : index
    %178 = tpu.strided_load %arg16[%c44, %c0_134] {strides = array<i32: 48, 1>} : memref<94x128xf32, #tpu.memory_space<vmem>>, vector<2x128xf32>
    %c45 = arith.constant 45 : index
    %c0_135 = arith.constant 0 : index
    %179 = tpu.strided_load %arg16[%c45, %c0_135] {strides = array<i32: 48, 1>} : memref<94x128xf32, #tpu.memory_space<vmem>>, vector<2x128xf32>
    %180 = arith.maximumf %178, %179 : vector<2x128xf32>
    %181 = arith.truncf %180 : vector<2x128xf32> to vector<2x128xbf16>
    %c0_136 = arith.constant 0 : index
    %c2816 = arith.constant 2816 : index
    %182 = vector.load %arg17[%c0_136, %c2816] : memref<2x2944xbf16, #tpu.memory_space<vmem>>, vector<2x128xbf16>
    tpu.vector_store %arg17[%c0_136, %c2816], %181 {strides = array<i32>} : memref<2x2944xbf16, #tpu.memory_space<vmem>>, vector<2x128xbf16>,
    %c0_137 = arith.constant 0 : index
    %c0_138 = arith.constant 0 : index
    %183 = vector.load %arg17[%c0_137, %c0_138] : memref<2x2944xbf16, #tpu.memory_space<vmem>>, vector<2x2944xbf16>
    %c0_139 = arith.constant 0 : index
    %c0_140 = arith.constant 0 : index
    %184 = vector.load %arg7[%c0_139, %c0_140] : memref<2944x32xbf16, #tpu.memory_space<vmem>>, vector<2944x32xbf16>
    %cst_141 = arith.constant dense<0.000000e+00> : vector<2x32xf32>
    %185 = tpu.matmul %183, %184, %cst_141 {dimension_numbers = #tpu.dot_dimension_numbers<[1], [0], [0], [1], [0, 0, 1, 1], [], []>} : vector<2x2944xbf16>, vector<2944x32xbf16>, vector<2x32xf32> -> vector<2x32xf32>
    %c0_142 = arith.constant 0 : index
    %c0_143 = arith.constant 0 : index
    %186 = vector.load %arg8[%c0_142, %c0_143] : memref<1x32xf32, #tpu.memory_space<vmem>>, vector<1x32xf32>
    %187 = vector.broadcast %186 : vector<1x32xf32> to vector<2x32xf32>
    %188 = arith.addf %185, %187 : vector<2x32xf32>
    %cst_144 = arith.constant 0.000000e+00 : f32
    %189 = vector.broadcast %cst_144 : f32 to vector<2x32xf32>
    %190 = arith.cmpf ogt, %188, %189 : vector<2x32xf32>
    %cst_145 = arith.constant 0.00999999977 : f32
    %191 = vector.broadcast %cst_145 : f32 to vector<2x32xf32>
    %192 = arith.mulf %191, %188 : vector<2x32xf32>
    %193 = arith.select %190, %188, %192 : vector<2x32xi1>, vector<2x32xf32>
    %194 = arith.truncf %193 : vector<2x32xf32> to vector<2x32xbf16>
    %c0_146 = arith.constant 0 : index
    %c0_147 = arith.constant 0 : index
    %195 = vector.load %arg9[%c0_146, %c0_147] : memref<32x2xbf16, #tpu.memory_space<vmem>>, vector<32x2xbf16>
    %cst_148 = arith.constant dense<0.000000e+00> : vector<2x2xf32>
    %196 = tpu.matmul %194, %195, %cst_148 {dimension_numbers = #tpu.dot_dimension_numbers<[1], [0], [0], [1], [0, 0, 1, 1], [], []>} : vector<2x32xbf16>, vector<32x2xbf16>, vector<2x2xf32> -> vector<2x2xf32>
    %c0_149 = arith.constant 0 : index
    %c0_150 = arith.constant 0 : index
    %197 = vector.load %arg10[%c0_149, %c0_150] : memref<1x2xf32, #tpu.memory_space<vmem>>, vector<1x2xf32>
    %198 = vector.broadcast %197 : vector<1x2xf32> to vector<2x2xf32>
    %199 = arith.addf %196, %198 : vector<2x2xf32>
    %c0_151 = arith.constant 0 : index
    %c0_152 = arith.constant 0 : index
    %200 = vector.load %arg11[%c0_151, %c0_152] : memref<2x2xf32, #tpu.memory_space<vmem>>, vector<2x2xf32>
    tpu.vector_store %arg11[%c0_151, %c0_152], %199 {strides = array<i32>} : memref<2x2xf32, #tpu.memory_space<vmem>>, vector<2x2xf32>,
    return
  }
}

</mosaic_0001>

<llo_original>
// kernel: tpu_custom_call.1
$region0: #{tpu_custom_call.1}
  #allocation0 [shape = 'u32[]', space=smem, size = 0x4, offset = 0x4, fixed_abs, tag = 'smem constant byte address 0x4 - core index']
  #allocation1 [shape = 'u32[144,128]{1,0:T(1,128)}', space=vmem, size = 0x12000, scoped, tag = 'internal scratch']
  #allocation2 [shape = 'f32[382,16]{1,0:T(8,128)}', space=vmem, size = 0x30000, scoped, tag = 'scratch operand']
  #allocation3 [shape = 'f32[192,16]{1,0:T(8,128)}', space=vmem, size = 0x18000, scoped, tag = 'scratch operand']
  #allocation4 [shape = 'f32[190,64]{1,0:T(8,128)}', space=vmem, size = 0x18000, scoped, tag = 'scratch operand']
  #allocation5 [shape = 'f32[96,64]{1,0:T(8,128)}', space=vmem, size = 0xc000, scoped, tag = 'scratch operand']
  #allocation6 [shape = 'f32[94,128]{1,0:T(8,128)}', space=vmem, size = 0xc000, scoped, tag = 'scratch operand']
  #allocation7 [shape = 'bf16[2,2944]{1,0:T(2,128)(2,1)}', space=vmem, size = 0x2e00, scoped, tag = 'scratch operand']
  %s0 = inlined_call_operand.vmem [shape: f32[384,1], index: 0, kind: input, shape index: {}]
  %s1 = inlined_call_operand.vmem [shape: bf16[3,16], index: 1, kind: input, shape index: {}]
  %s2 = inlined_call_operand.vmem [shape: f32[1,16], index: 2, kind: input, shape index: {}]
  %s3 = inlined_call_operand.vmem [shape: bf16[48,64], index: 3, kind: input, shape index: {}]
  %s4 = inlined_call_operand.vmem [shape: f32[1,64], index: 4, kind: input, shape index: {}]
  %s5 = inlined_call_operand.vmem [shape: bf16[192,128], index: 5, kind: input, shape index: {}]
  %s6 = inlined_call_operand.vmem [shape: f32[1,128], index: 6, kind: input, shape index: {}]
  %s7 = inlined_call_operand.vmem [shape: bf16[2944,32], index: 7, kind: input, shape index: {}]
  %s8 = inlined_call_operand.vmem [shape: f32[1,32], index: 8, kind: input, shape index: {}]
  %s9 = inlined_call_operand.vmem [shape: bf16[32,2], index: 9, kind: input, shape index: {}]
  %s10 = inlined_call_operand.vmem [shape: f32[1,2], index: 10, kind: input, shape index: {}]
  %s11 = inlined_call_operand.hbm [shape: f32[2,2], index: 11, kind: output, shape index: {}]
  %s12 = sld [smem:[#allocation0]]
  $region54: #{tpu_custom_call.1} parent=0
    _
  %s14 = ssub.s32 1, %s12
  %s15 = scalar_select 0, %s14, %s12
  $region1: #{tpu_custom_call.1} parent=0
    #allocation8 [shape = 'u8[1024]{0}', space=vmem, size = 0x400, scoped, tag = 'output window, operand 0, single buffered']
    #allocation9 [shape = 's32[1]{0}', space=sflag, size = 0x4, scoped, tag = 'scoped memory for tpu_custom_call.1']
    %16 = vsyncpa [#allocation9], 0
    // Predicated region
    $region2: #{tpu_custom_call.1} parent=1 // pred_check
      _
    $region3: #{tpu_custom_call.1} parent=1 // pred_check_branch
      %18 = sbr.rel (0) target = $region5
    $region4: #{tpu_custom_call.1} parent=1 // pred_region
      _
    $region5: #{tpu_custom_call.1} parent=1 // pred_fallthru
      _
    // Predicated region
    $region6: #{tpu_custom_call.1} parent=1 // pred_check
      _
    $region7: #{tpu_custom_call.1} parent=1 // pred_check_branch
      %20 = sbr.rel (0) target = $region9
    $region8: #{tpu_custom_call.1} parent=1 // pred_region
      _
    $region9: #{tpu_custom_call.1} parent=1 // pred_fallthru
      _
    // Predicated region
    $region10: #{tpu_custom_call.1} parent=1 // pred_check
      _
    $region11: #{tpu_custom_call.1} parent=1 // pred_check_branch
      %22 = sbr.rel (0) target = $region13
    $region12: #{tpu_custom_call.1} parent=1 // pred_region
      _
    $region13: #{tpu_custom_call.1} parent=1 // pred_fallthru
      _
    // Predicated region
    $region14: #{tpu_custom_call.1} parent=1 // pred_check
      _
    $region15: #{tpu_custom_call.1} parent=1 // pred_check_branch
      %24 = sbr.rel (0) target = $region17
    $region16: #{tpu_custom_call.1} parent=1 // pred_region
      _
    $region17: #{tpu_custom_call.1} parent=1 // pred_fallthru
      _
    // Predicated region
    $region18: #{tpu_custom_call.1} parent=1 // pred_check
      _
    $region19: #{tpu_custom_call.1} parent=1 // pred_check_branch
      %26 = sbr.rel (0) target = $region21
    $region20: #{tpu_custom_call.1} parent=1 // pred_region
      _
    $region21: #{tpu_custom_call.1} parent=1 // pred_fallthru
      _
    // Predicated region
    $region22: #{tpu_custom_call.1} parent=1 // pred_check
      _
    $region23: #{tpu_custom_call.1} parent=1 // pred_check_branch
      %28 = sbr.rel (0) target = $region25
    $region24: #{tpu_custom_call.1} parent=1 // pred_region
      _
    $region25: #{tpu_custom_call.1} parent=1 // pred_fallthru
      _
    // Predicated region
    $region26: #{tpu_custom_call.1} parent=1 // pred_check
      _
    $region27: #{tpu_custom_call.1} parent=1 // pred_check_branch
      %30 = sbr.rel (0) target = $region29
    $region28: #{tpu_custom_call.1} parent=1 // pred_region
      _
    $region29: #{tpu_custom_call.1} parent=1 // pred_fallthru
      _
    // Predicated region
    $region30: #{tpu_custom_call.1} parent=1 // pred_check
      _
    $region31: #{tpu_custom_call.1} parent=1 // pred_check_branch
      %32 = sbr.rel (0) target = $region33
    $region32: #{tpu_custom_call.1} parent=1 // pred_region
      _
    $region33: #{tpu_custom_call.1} parent=1 // pred_fallthru
      _
    // Predicated region
    $region34: #{tpu_custom_call.1} parent=1 // pred_check
      _
    $region35: #{tpu_custom_call.1} parent=1 // pred_check_branch
      %34 = sbr.rel (0) target = $region37
    $region36: #{tpu_custom_call.1} parent=1 // pred_region
      _
    $region37: #{tpu_custom_call.1} parent=1 // pred_fallthru
      _
    // Predicated region
    $region38: #{tpu_custom_call.1} parent=1 // pred_check
      _
    $region39: #{tpu_custom_call.1} parent=1 // pred_check_branch
      %36 = sbr.rel (0) target = $region41
    $region40: #{tpu_custom_call.1} parent=1 // pred_region
      _
    $region41: #{tpu_custom_call.1} parent=1 // pred_fallthru
      _
    // Predicated region
    $region42: #{tpu_custom_call.1} parent=1 // pred_check
      _
    $region43: #{tpu_custom_call.1} parent=1 // pred_check_branch
      %38 = sbr.rel (0) target = $region45
    $region44: #{tpu_custom_call.1} parent=1 // pred_region
      _
    $region45: #{tpu_custom_call.1} parent=1 // pred_fallthru
      _
    %vm40 = vcmask 130048
    %41 = vst.msk [vmem:[#allocation3] sm:$0xff] %vm40, 0.0
    %42 = vst.msk [vmem:[#allocation3 + $0x8] sm:$0xff] %vm40, 0.0
    %43 = vst.msk [vmem:[#allocation3 + $0x10] sm:$0xff] %vm40, 0.0
    %44 = vst.msk [vmem:[#allocation3 + $0x18] sm:$0xff] %vm40, 0.0
    %45 = vst.msk [vmem:[#allocation3 + $0x20] sm:$0xff] %vm40, 0.0
    %46 = vst.msk [vmem:[#allocation3 + $0x28] sm:$0xff] %vm40, 0.0
    %47 = vst.msk [vmem:[#allocation3 + $0x30] sm:$0xff] %vm40, 0.0
    %48 = vst.msk [vmem:[#allocation3 + $0x38] sm:$0xff] %vm40, 0.0
    %49 = vst.msk [vmem:[#allocation3 + $0x40] sm:$0xff] %vm40, 0.0
    %50 = vst.msk [vmem:[#allocation3 + $0x48] sm:$0xff] %vm40, 0.0
    %51 = vst.msk [vmem:[#allocation3 + $0x50] sm:$0xff] %vm40, 0.0
    %52 = vst.msk [vmem:[#allocation3 + $0x58] sm:$0xff] %vm40, 0.0
    %53 = vst.msk [vmem:[#allocation3 + $0x60] sm:$0xff] %vm40, 0.0
    %54 = vst.msk [vmem:[#allocation3 + $0x68] sm:$0xff] %vm40, 0.0
    %55 = vst.msk [vmem:[#allocation3 + $0x70] sm:$0xff] %vm40, 0.0
    %56 = vst.msk [vmem:[#allocation3 + $0x78] sm:$0xff] %vm40, 0.0
    %57 = vst.msk [vmem:[#allocation3 + $0x80] sm:$0xff] %vm40, 0.0
    %58 = vst.msk [vmem:[#allocation3 + $0x88] sm:$0xff] %vm40, 0.0
    %59 = vst.msk [vmem:[#allocation3 + $0x90] sm:$0xff] %vm40, 0.0
    %60 = vst.msk [vmem:[#allocation3 + $0x98] sm:$0xff] %vm40, 0.0
    %61 = vst.msk [vmem:[#allocation3 + $0xa0] sm:$0xff] %vm40, 0.0
    %62 = vst.msk [vmem:[#allocation3 + $0xa8] sm:$0xff] %vm40, 0.0
    %63 = vst.msk [vmem:[#allocation3 + $0xb0] sm:$0xff] %vm40, 0.0
    %64 = vst.msk [vmem:[#allocation3 + $0xb8] sm:$0xff] %vm40, 0.0
    %vm65 = vcmask 523264
    %66 = vst.msk [vmem:[#allocation5] sm:$0xff] %vm65, 0.0
    %67 = vst.msk [vmem:[#allocation5 + $0x8] sm:$0xff] %vm65, 0.0
    %68 = vst.msk [vmem:[#allocation5 + $0x10] sm:$0xff] %vm65, 0.0
    %69 = vst.msk [vmem:[#allocation5 + $0x18] sm:$0xff] %vm65, 0.0
    %70 = vst.msk [vmem:[#allocation5 + $0x20] sm:$0xff] %vm65, 0.0
    %71 = vst.msk [vmem:[#allocation5 + $0x28] sm:$0xff] %vm65, 0.0
    %72 = vst.msk [vmem:[#allocation5 + $0x30] sm:$0xff] %vm65, 0.0
    %73 = vst.msk [vmem:[#allocation5 + $0x38] sm:$0xff] %vm65, 0.0
    %74 = vst.msk [vmem:[#allocation5 + $0x40] sm:$0xff] %vm65, 0.0
    %75 = vst.msk [vmem:[#allocation5 + $0x48] sm:$0xff] %vm65, 0.0
    %76 = vst.msk [vmem:[#allocation5 + $0x50] sm:$0xff] %vm65, 0.0
    %77 = vst.msk [vmem:[#allocation5 + $0x58] sm:$0xff] %vm65, 0.0
    %v78 = vld [vmem:[%s0] sm:$0xff]
    %v79 = vld [vmem:[%s0 + $0x8] sm:$0xff]
    %v80 = vld [vmem:[%s0 + $0x10] sm:$0xff]
    %v81 = vld [vmem:[%s0 + $0x18] sm:$0xff]
    %v82 = vld [vmem:[%s0 + $0x20] sm:$0xff]
    %v83 = vld [vmem:[%s0 + $0x28] sm:$0xff]
    %v84 = vld [vmem:[%s0 + $0x30] sm:$0xff]
    %v85 = vld [vmem:[%s0 + $0x38] sm:$0xff]
    %v86 = vld [vmem:[%s0 + $0x40] sm:$0xff]
    %v87 = vld [vmem:[%s0 + $0x48] sm:$0xff]
    %v88 = vld [vmem:[%s0 + $0x50] sm:$0xff]
    %v89 = vld [vmem:[%s0 + $0x58] sm:$0xff]
    %v90 = vld [vmem:[%s0 + $0x60] sm:$0xff]
    %v91 = vld [vmem:[%s0 + $0x68] sm:$0xff]
    %v92 = vld [vmem:[%s0 + $0x70] sm:$0xff]
    %v93 = vld [vmem:[%s0 + $0x78] sm:$0xff]
    %v94 = vld [vmem:[%s0 + $0x80] sm:$0xff]
    %v95 = vld [vmem:[%s0 + $0x88] sm:$0xff]
    %v96 = vld [vmem:[%s0 + $0x90] sm:$0xff]
    %v97 = vld [vmem:[%s0 + $0x98] sm:$0xff]
    %v98 = vld [vmem:[%s0 + $0xa0] sm:$0xff]
    %v99 = vld [vmem:[%s0 + $0xa8] sm:$0xff]
    %v100 = vld [vmem:[%s0 + $0xb0] sm:$0xff]
    %v101 = vld [vmem:[%s0 + $0xb8] sm:$0xff]
    %v102 = vld [vmem:[%s0 + $0xc0] sm:$0xff]
    %v103 = vld [vmem:[%s0 + $0xc8] sm:$0xff]
    %v104 = vld [vmem:[%s0 + $0xd0] sm:$0xff]
    %v105 = vld [vmem:[%s0 + $0xd8] sm:$0xff]
    %v106 = vld [vmem:[%s0 + $0xe0] sm:$0xff]
    %v107 = vld [vmem:[%s0 + $0xe8] sm:$0xff]
    %v108 = vld [vmem:[%s0 + $0xf0] sm:$0xff]
    %v109 = vld [vmem:[%s0 + $0xf8] sm:$0xff]
    %v110 = vld [vmem:[%s0 + $0x100] sm:$0xff]
    %v111 = vld [vmem:[%s0 + $0x108] sm:$0xff]
    %v112 = vld [vmem:[%s0 + $0x110] sm:$0xff]
    %v113 = vld [vmem:[%s0 + $0x118] sm:$0xff]
    %v114 = vld [vmem:[%s0 + $0x120] sm:$0xff]
    %v115 = vld [vmem:[%s0 + $0x128] sm:$0xff]
    %v116 = vld [vmem:[%s0 + $0x130] sm:$0xff]
    %v117 = vld [vmem:[%s0 + $0x138] sm:$0xff]
    %v118 = vld [vmem:[%s0 + $0x140] sm:$0xff]
    %v119 = vld [vmem:[%s0 + $0x148] sm:$0xff]
    %v120 = vld [vmem:[%s0 + $0x150] sm:$0xff]
    %v121 = vld [vmem:[%s0 + $0x158] sm:$0xff]
    %v122 = vld [vmem:[%s0 + $0x160] sm:$0xff]
    %v123 = vld [vmem:[%s0 + $0x168] sm:$0xff]
    %v124 = vld [vmem:[%s0 + $0x170] sm:$0xff]
    %v125 = vld [vmem:[%s0 + $0x178] sm:$0x3f]
    %v126 = vld [vmem:[%s0 + $0x1] sm:$0xff]
    %v127 = vld [vmem:[%s0 + $0x9] sm:$0xff]
    %v128 = vld [vmem:[%s0 + $0x11] sm:$0xff]
    %v129 = vld [vmem:[%s0 + $0x19] sm:$0xff]
    %v130 = vld [vmem:[%s0 + $0x21] sm:$0xff]
    %v131 = vld [vmem:[%s0 + $0x29] sm:$0xff]
    %v132 = vld [vmem:[%s0 + $0x31] sm:$0xff]
    %v133 = vld [vmem:[%s0 + $0x39] sm:$0xff]
    %v134 = vld [vmem:[%s0 + $0x41] sm:$0xff]
    %v135 = vld [vmem:[%s0 + $0x49] sm:$0xff]
    %v136 = vld [vmem:[%s0 + $0x51] sm:$0xff]
    %v137 = vld [vmem:[%s0 + $0x59] sm:$0xff]
    %v138 = vld [vmem:[%s0 + $0x61] sm:$0xff]
    %v139 = vld [vmem:[%s0 + $0x69] sm:$0xff]
    %v140 = vld [vmem:[%s0 + $0x71] sm:$0xff]
    %v141 = vld [vmem:[%s0 + $0x79] sm:$0xff]
    %v142 = vld [vmem:[%s0 + $0x81] sm:$0xff]
    %v143 = vld [vmem:[%s0 + $0x89] sm:$0xff]
    %v144 = vld [vmem:[%s0 + $0x91] sm:$0xff]
    %v145 = vld [vmem:[%s0 + $0x99] sm:$0xff]
    %v146 = vld [vmem:[%s0 + $0xa1] sm:$0xff]
    %v147 = vld [vmem:[%s0 + $0xa9] sm:$0xff]
    %v148 = vld [vmem:[%s0 + $0xb1] sm:$0xff]
    %v149 = vld [vmem:[%s0 + $0xb9] sm:$0xff]
    %v150 = vld [vmem:[%s0 + $0xc1] sm:$0xff]
    %v151 = vld [vmem:[%s0 + $0xc9] sm:$0xff]
    %v152 = vld [vmem:[%s0 + $0xd1] sm:$0xff]
    %v153 = vld [vmem:[%s0 + $0xd9] sm:$0xff]
    %v154 = vld [vmem:[%s0 + $0xe1] sm:$0xff]
    %v155 = vld [vmem:[%s0 + $0xe9] sm:$0xff]
    %v156 = vld [vmem:[%s0 + $0xf1] sm:$0xff]
    %v157 = vld [vmem:[%s0 + $0xf9] sm:$0xff]
    %v158 = vld [vmem:[%s0 + $0x101] sm:$0xff]
    %v159 = vld [vmem:[%s0 + $0x109] sm:$0xff]
    %v160 = vld [vmem:[%s0 + $0x111] sm:$0xff]
    %v161 = vld [vmem:[%s0 + $0x119] sm:$0xff]
    %v162 = vld [vmem:[%s0 + $0x121] sm:$0xff]
    %v163 = vld [vmem:[%s0 + $0x129] sm:$0xff]
    %v164 = vld [vmem:[%s0 + $0x131] sm:$0xff]
    %v165 = vld [vmem:[%s0 + $0x139] sm:$0xff]
    %v166 = vld [vmem:[%s0 + $0x141] sm:$0xff]
    %v167 = vld [vmem:[%s0 + $0x149] sm:$0xff]
    %v168 = vld [vmem:[%s0 + $0x151] sm:$0xff]
    %v169 = vld [vmem:[%s0 + $0x159] sm:$0xff]
    %v170 = vld [vmem:[%s0 + $0x161] sm:$0xff]
    %v171 = vld [vmem:[%s0 + $0x169] sm:$0xff]
    %v172 = vld [vmem:[%s0 + $0x171] sm:$0xff]
    %v173 = vld [vmem:[%s0 + $0x179] sm:$0x3f]
    %v174 = vld [vmem:[%s0 + $0x2] sm:$0xff]
    %v175 = vld [vmem:[%s0 + $0xa] sm:$0xff]
    %v176 = vld [vmem:[%s0 + $0x12] sm:$0xff]
    %v177 = vld [vmem:[%s0 + $0x1a] sm:$0xff]
    %v178 = vld [vmem:[%s0 + $0x22] sm:$0xff]
    %v179 = vld [vmem:[%s0 + $0x2a] sm:$0xff]
    %v180 = vld [vmem:[%s0 + $0x32] sm:$0xff]
    %v181 = vld [vmem:[%s0 + $0x3a] sm:$0xff]
    %v182 = vld [vmem:[%s0 + $0x42] sm:$0xff]
    %v183 = vld [vmem:[%s0 + $0x4a] sm:$0xff]
    %v184 = vld [vmem:[%s0 + $0x52] sm:$0xff]
    %v185 = vld [vmem:[%s0 + $0x5a] sm:$0xff]
    %v186 = vld [vmem:[%s0 + $0x62] sm:$0xff]
    %v187 = vld [vmem:[%s0 + $0x6a] sm:$0xff]
    %v188 = vld [vmem:[%s0 + $0x72] sm:$0xff]
    %v189 = vld [vmem:[%s0 + $0x7a] sm:$0xff]
    %v190 = vld [vmem:[%s0 + $0x82] sm:$0xff]
    %v191 = vld [vmem:[%s0 + $0x8a] sm:$0xff]
    %v192 = vld [vmem:[%s0 + $0x92] sm:$0xff]
    %v193 = vld [vmem:[%s0 + $0x9a] sm:$0xff]
    %v194 = vld [vmem:[%s0 + $0xa2] sm:$0xff]
    %v195 = vld [vmem:[%s0 + $0xaa] sm:$0xff]
    %v196 = vld [vmem:[%s0 + $0xb2] sm:$0xff]
    %v197 = vld [vmem:[%s0 + $0xba] sm:$0xff]
    %v198 = vld [vmem:[%s0 + $0xc2] sm:$0xff]
    %v199 = vld [vmem:[%s0 + $0xca] sm:$0xff]
    %v200 = vld [vmem:[%s0 + $0xd2] sm:$0xff]
    %v201 = vld [vmem:[%s0 + $0xda] sm:$0xff]
    %v202 = vld [vmem:[%s0 + $0xe2] sm:$0xff]
    %v203 = vld [vmem:[%s0 + $0xea] sm:$0xff]
    %v204 = vld [vmem:[%s0 + $0xf2] sm:$0xff]
    %v205 = vld [vmem:[%s0 + $0xfa] sm:$0xff]
    %v206 = vld [vmem:[%s0 + $0x102] sm:$0xff]
    %v207 = vld [vmem:[%s0 + $0x10a] sm:$0xff]
    %v208 = vld [vmem:[%s0 + $0x112] sm:$0xff]
    %v209 = vld [vmem:[%s0 + $0x11a] sm:$0xff]
    %v210 = vld [vmem:[%s0 + $0x122] sm:$0xff]
    %v211 = vld [vmem:[%s0 + $0x12a] sm:$0xff]
    %v212 = vld [vmem:[%s0 + $0x132] sm:$0xff]
    %v213 = vld [vmem:[%s0 + $0x13a] sm:$0xff]
    %v214 = vld [vmem:[%s0 + $0x142] sm:$0xff]
    %v215 = vld [vmem:[%s0 + $0x14a] sm:$0xff]
    %v216 = vld [vmem:[%s0 + $0x152] sm:$0xff]
    %v217 = vld [vmem:[%s0 + $0x15a] sm:$0xff]
    %v218 = vld [vmem:[%s0 + $0x162] sm:$0xff]
    %v219 = vld [vmem:[%s0 + $0x16a] sm:$0xff]
    %v220 = vld [vmem:[%s0 + $0x172] sm:$0xff]
    %v221 = vld [vmem:[%s0 + $0x17a] sm:$0x3f]
    %v222 = vld [vmem:[%s1] sm:$0x1]
    %v223 = vunpack.c.l.bf16 %v222
    %225 = vset.pattern.permute.xlu0 0
    %226 = vperm.xlu0 %225, %v78
    %v227 = vpop.permute.xlu0 %226
    %230 = vset.pattern.permute.xlu0 0
    %231 = vperm.xlu0 %230, %v79
    %v232 = vpop.permute.xlu0 %231
    %235 = vset.pattern.permute.xlu0 0
    %236 = vperm.xlu0 %235, %v80
    %v237 = vpop.permute.xlu0 %236
    %240 = vset.pattern.permute.xlu0 0
    %241 = vperm.xlu0 %240, %v81
    %v242 = vpop.permute.xlu0 %241
    %245 = vset.pattern.permute.xlu0 0
    %246 = vperm.xlu0 %245, %v82
    %v247 = vpop.permute.xlu0 %246
    %250 = vset.pattern.permute.xlu0 0
    %251 = vperm.xlu0 %250, %v83
    %v252 = vpop.permute.xlu0 %251
    %255 = vset.pattern.permute.xlu0 0
    %256 = vperm.xlu0 %255, %v84
    %v257 = vpop.permute.xlu0 %256
    %260 = vset.pattern.permute.xlu0 0
    %261 = vperm.xlu0 %260, %v85
    %v262 = vpop.permute.xlu0 %261
    %265 = vset.pattern.permute.xlu0 0
    %266 = vperm.xlu0 %265, %v86
    %v267 = vpop.permute.xlu0 %266
    %270 = vset.pattern.permute.xlu0 0
    %271 = vperm.xlu0 %270, %v87
    %v272 = vpop.permute.xlu0 %271
    %275 = vset.pattern.permute.xlu0 0
    %276 = vperm.xlu0 %275, %v88
    %v277 = vpop.permute.xlu0 %276
    %280 = vset.pattern.permute.xlu0 0
    %281 = vperm.xlu0 %280, %v89
    %v282 = vpop.permute.xlu0 %281
    %285 = vset.pattern.permute.xlu0 0
    %286 = vperm.xlu0 %285, %v90
    %v287 = vpop.permute.xlu0 %286
    %290 = vset.pattern.permute.xlu0 0
    %291 = vperm.xlu0 %290, %v91
    %v292 = vpop.permute.xlu0 %291
    %295 = vset.pattern.permute.xlu0 0
    %296 = vperm.xlu0 %295, %v92
    %v297 = vpop.permute.xlu0 %296
    %300 = vset.pattern.permute.xlu0 0
    %301 = vperm.xlu0 %300, %v93
    %v302 = vpop.permute.xlu0 %301
    %305 = vset.pattern.permute.xlu0 0
    %306 = vperm.xlu0 %305, %v94
    %v307 = vpop.permute.xlu0 %306
    %310 = vset.pattern.permute.xlu0 0
    %311 = vperm.xlu0 %310, %v95
    %v312 = vpop.permute.xlu0 %311
    %315 = vset.pattern.permute.xlu0 0
    %316 = vperm.xlu0 %315, %v96
    %v317 = vpop.permute.xlu0 %316
    %320 = vset.pattern.permute.xlu0 0
    %321 = vperm.xlu0 %320, %v97
    %v322 = vpop.permute.xlu0 %321
    %325 = vset.pattern.permute.xlu0 0
    %326 = vperm.xlu0 %325, %v98
    %v327 = vpop.permute.xlu0 %326
    %330 = vset.pattern.permute.xlu0 0
    %331 = vperm.xlu0 %330, %v99
    %v332 = vpop.permute.xlu0 %331
    %335 = vset.pattern.permute.xlu0 0
    %336 = vperm.xlu0 %335, %v100
    %v337 = vpop.permute.xlu0 %336
    %340 = vset.pattern.permute.xlu0 0
    %341 = vperm.xlu0 %340, %v101
    %v342 = vpop.permute.xlu0 %341
    %345 = vset.pattern.permute.xlu0 0
    %346 = vperm.xlu0 %345, %v102
    %v347 = vpop.permute.xlu0 %346
    %350 = vset.pattern.permute.xlu0 0
    %351 = vperm.xlu0 %350, %v103
    %v352 = vpop.permute.xlu0 %351
    %355 = vset.pattern.permute.xlu0 0
    %356 = vperm.xlu0 %355, %v104
    %v357 = vpop.permute.xlu0 %356
    %360 = vset.pattern.permute.xlu0 0
    %361 = vperm.xlu0 %360, %v105
    %v362 = vpop.permute.xlu0 %361
    %365 = vset.pattern.permute.xlu0 0
    %366 = vperm.xlu0 %365, %v106
    %v367 = vpop.permute.xlu0 %366
    %370 = vset.pattern.permute.xlu0 0
    %371 = vperm.xlu0 %370, %v107
    %v372 = vpop.permute.xlu0 %371
    %375 = vset.pattern.permute.xlu0 0
    %376 = vperm.xlu0 %375, %v108
    %v377 = vpop.permute.xlu0 %376
    %380 = vset.pattern.permute.xlu0 0
    %381 = vperm.xlu0 %380, %v109
    %v382 = vpop.permute.xlu0 %381
    %385 = vset.pattern.permute.xlu0 0
    %386 = vperm.xlu0 %385, %v110
    %v387 = vpop.permute.xlu0 %386
    %390 = vset.pattern.permute.xlu0 0
    %391 = vperm.xlu0 %390, %v111
    %v392 = vpop.permute.xlu0 %391
    %395 = vset.pattern.permute.xlu0 0
    %396 = vperm.xlu0 %395, %v112
    %v397 = vpop.permute.xlu0 %396
    %400 = vset.pattern.permute.xlu0 0
    %401 = vperm.xlu0 %400, %v113
    %v402 = vpop.permute.xlu0 %401
    %405 = vset.pattern.permute.xlu0 0
    %406 = vperm.xlu0 %405, %v114
    %v407 = vpop.permute.xlu0 %406
    %410 = vset.pattern.permute.xlu0 0
    %411 = vperm.xlu0 %410, %v115
    %v412 = vpop.permute.xlu0 %411
    %415 = vset.pattern.permute.xlu0 0
    %416 = vperm.xlu0 %415, %v116
    %v417 = vpop.permute.xlu0 %416
    %420 = vset.pattern.permute.xlu0 0
    %421 = vperm.xlu0 %420, %v117
    %v422 = vpop.permute.xlu0 %421
    %425 = vset.pattern.permute.xlu0 0
    %426 = vperm.xlu0 %425, %v118
    %v427 = vpop.permute.xlu0 %426
    %430 = vset.pattern.permute.xlu0 0
    %431 = vperm.xlu0 %430, %v119
    %v432 = vpop.permute.xlu0 %431
    %435 = vset.pattern.permute.xlu0 0
    %436 = vperm.xlu0 %435, %v120
    %v437 = vpop.permute.xlu0 %436
    %440 = vset.pattern.permute.xlu0 0
    %441 = vperm.xlu0 %440, %v121
    %v442 = vpop.permute.xlu0 %441
    %445 = vset.pattern.permute.xlu0 0
    %446 = vperm.xlu0 %445, %v122
    %v447 = vpop.permute.xlu0 %446
    %450 = vset.pattern.permute.xlu0 0
    %451 = vperm.xlu0 %450, %v123
    %v452 = vpop.permute.xlu0 %451
    %455 = vset.pattern.permute.xlu0 0
    %456 = vperm.xlu0 %455, %v124
    %v457 = vpop.permute.xlu0 %456
    %460 = vset.pattern.permute.xlu0 0
    %461 = vperm.xlu0 %460, %v125
    %v462 = vpop.permute.xlu0 %461
    %v464 = vlaneseq
    %v465 = vshrl.u32 %v464, 7
    %v466 = vsub.s32 0, %v465
    %v467 = vrot.slane %v223, %v466
    %v468 = vmul.f32 %v227, %v467
    %v469 = vmul.f32 %v232, %v467
    %v470 = vmul.f32 %v237, %v467
    %v471 = vmul.f32 %v242, %v467
    %v472 = vmul.f32 %v247, %v467
    %v473 = vmul.f32 %v252, %v467
    %v474 = vmul.f32 %v257, %v467
    %v475 = vmul.f32 %v262, %v467
    %v476 = vmul.f32 %v267, %v467
    %v477 = vmul.f32 %v272, %v467
    %v478 = vmul.f32 %v277, %v467
    %v479 = vmul.f32 %v282, %v467
    %v480 = vmul.f32 %v287, %v467
    %v481 = vmul.f32 %v292, %v467
    %v482 = vmul.f32 %v297, %v467
    %v483 = vmul.f32 %v302, %v467
    %v484 = vmul.f32 %v307, %v467
    %v485 = vmul.f32 %v312, %v467
    %v486 = vmul.f32 %v317, %v467
    %v487 = vmul.f32 %v322, %v467
    %v488 = vmul.f32 %v327, %v467
    %v489 = vmul.f32 %v332, %v467
    %v490 = vmul.f32 %v337, %v467
    %v491 = vmul.f32 %v342, %v467
    %v492 = vmul.f32 %v347, %v467
    %v493 = vmul.f32 %v352, %v467
    %v494 = vmul.f32 %v357, %v467
    %v495 = vmul.f32 %v362, %v467
    %v496 = vmul.f32 %v367, %v467
    %v497 = vmul.f32 %v372, %v467
    %v498 = vmul.f32 %v377, %v467
    %v499 = vmul.f32 %v382, %v467
    %v500 = vmul.f32 %v387, %v467
    %v501 = vmul.f32 %v392, %v467
    %v502 = vmul.f32 %v397, %v467
    %v503 = vmul.f32 %v402, %v467
    %v504 = vmul.f32 %v407, %v467
    %v505 = vmul.f32 %v412, %v467
    %v506 = vmul.f32 %v417, %v467
    %v507 = vmul.f32 %v422, %v467
    %v508 = vmul.f32 %v427, %v467
    %v509 = vmul.f32 %v432, %v467
    %v510 = vmul.f32 %v437, %v467
    %v511 = vmul.f32 %v442, %v467
    %v512 = vmul.f32 %v447, %v467
    %v513 = vmul.f32 %v452, %v467
    %v514 = vmul.f32 %v457, %v467
    %v515 = vmul.f32 %v462, %v467
    %v516 = vadd.f32 %v468, 0.0
    %v517 = vadd.f32 %v469, 0.0
    %v518 = vadd.f32 %v470, 0.0
    %v519 = vadd.f32 %v471, 0.0
    %v520 = vadd.f32 %v472, 0.0
    %v521 = vadd.f32 %v473, 0.0
    %v522 = vadd.f32 %v474, 0.0
    %v523 = vadd.f32 %v475, 0.0
    %v524 = vadd.f32 %v476, 0.0
    %v525 = vadd.f32 %v477, 0.0
    %v526 = vadd.f32 %v478, 0.0
    %v527 = vadd.f32 %v479, 0.0
    %v528 = vadd.f32 %v480, 0.0
    %v529 = vadd.f32 %v481, 0.0
    %v530 = vadd.f32 %v482, 0.0
    %v531 = vadd.f32 %v483, 0.0
    %v532 = vadd.f32 %v484, 0.0
    %v533 = vadd.f32 %v485, 0.0
    %v534 = vadd.f32 %v486, 0.0
    %v535 = vadd.f32 %v487, 0.0
    %v536 = vadd.f32 %v488, 0.0
    %v537 = vadd.f32 %v489, 0.0
    %v538 = vadd.f32 %v490, 0.0
    %v539 = vadd.f32 %v491, 0.0
    %v540 = vadd.f32 %v492, 0.0
    %v541 = vadd.f32 %v493, 0.0
    %v542 = vadd.f32 %v494, 0.0
    %v543 = vadd.f32 %v495, 0.0
    %v544 = vadd.f32 %v496, 0.0
    %v545 = vadd.f32 %v497, 0.0
    %v546 = vadd.f32 %v498, 0.0
    %v547 = vadd.f32 %v499, 0.0
    %v548 = vadd.f32 %v500, 0.0
    %v549 = vadd.f32 %v501, 0.0
    %v550 = vadd.f32 %v502, 0.0
    %v551 = vadd.f32 %v503, 0.0
    %v552 = vadd.f32 %v504, 0.0
    %v553 = vadd.f32 %v505, 0.0
    %v554 = vadd.f32 %v506, 0.0
    %v555 = vadd.f32 %v507, 0.0
    %v556 = vadd.f32 %v508, 0.0
    %v557 = vadd.f32 %v509, 0.0
    %v558 = vadd.f32 %v510, 0.0
    %v559 = vadd.f32 %v511, 0.0
    %v560 = vadd.f32 %v512, 0.0
    %v561 = vadd.f32 %v513, 0.0
    %v562 = vadd.f32 %v514, 0.0
    %v563 = vadd.f32 %v515, 0.0
    %565 = vset.pattern.permute.xlu0 0
    %566 = vperm.xlu0 %565, %v126
    %v567 = vpop.permute.xlu0 %566
    %570 = vset.pattern.permute.xlu0 0
    %571 = vperm.xlu0 %570, %v127
    %v572 = vpop.permute.xlu0 %571
    %575 = vset.pattern.permute.xlu0 0
    %576 = vperm.xlu0 %575, %v128
    %v577 = vpop.permute.xlu0 %576
    %580 = vset.pattern.permute.xlu0 0
    %581 = vperm.xlu0 %580, %v129
    %v582 = vpop.permute.xlu0 %581
    %585 = vset.pattern.permute.xlu0 0
    %586 = vperm.xlu0 %585, %v130
    %v587 = vpop.permute.xlu0 %586
    %590 = vset.pattern.permute.xlu0 0
    %591 = vperm.xlu0 %590, %v131
    %v592 = vpop.permute.xlu0 %591
    %595 = vset.pattern.permute.xlu0 0
    %596 = vperm.xlu0 %595, %v132
    %v597 = vpop.permute.xlu0 %596
    %600 = vset.pattern.permute.xlu0 0
    %601 = vperm.xlu0 %600, %v133
    %v602 = vpop.permute.xlu0 %601
    %605 = vset.pattern.permute.xlu0 0
    %606 = vperm.xlu0 %605, %v134
    %v607 = vpop.permute.xlu0 %606
    %610 = vset.pattern.permute.xlu0 0
    %611 = vperm.xlu0 %610, %v135
    %v612 = vpop.permute.xlu0 %611
    %615 = vset.pattern.permute.xlu0 0
    %616 = vperm.xlu0 %615, %v136
    %v617 = vpop.permute.xlu0 %616
    %620 = vset.pattern.permute.xlu0 0
    %621 = vperm.xlu0 %620, %v137
    %v622 = vpop.permute.xlu0 %621
    %625 = vset.pattern.permute.xlu0 0
    %626 = vperm.xlu0 %625, %v138
    %v627 = vpop.permute.xlu0 %626
    %630 = vset.pattern.permute.xlu0 0
    %631 = vperm.xlu0 %630, %v139
    %v632 = vpop.permute.xlu0 %631
    %635 = vset.pattern.permute.xlu0 0
    %636 = vperm.xlu0 %635, %v140
    %v637 = vpop.permute.xlu0 %636
    %640 = vset.pattern.permute.xlu0 0
    %641 = vperm.xlu0 %640, %v141
    %v642 = vpop.permute.xlu0 %641
    %645 = vset.pattern.permute.xlu0 0
    %646 = vperm.xlu0 %645, %v142
    %v647 = vpop.permute.xlu0 %646
    %650 = vset.pattern.permute.xlu0 0
    %651 = vperm.xlu0 %650, %v143
    %v652 = vpop.permute.xlu0 %651
    %655 = vset.pattern.permute.xlu0 0
    %656 = vperm.xlu0 %655, %v144
    %v657 = vpop.permute.xlu0 %656
    %660 = vset.pattern.permute.xlu0 0
    %661 = vperm.xlu0 %660, %v145
    %v662 = vpop.permute.xlu0 %661
    %665 = vset.pattern.permute.xlu0 0
    %666 = vperm.xlu0 %665, %v146
    %v667 = vpop.permute.xlu0 %666
    %670 = vset.pattern.permute.xlu0 0
    %671 = vperm.xlu0 %670, %v147
    %v672 = vpop.permute.xlu0 %671
    %675 = vset.pattern.permute.xlu0 0
    %676 = vperm.xlu0 %675, %v148
    %v677 = vpop.permute.xlu0 %676
    %680 = vset.pattern.permute.xlu0 0
    %681 = vperm.xlu0 %680, %v149
    %v682 = vpop.permute.xlu0 %681
    %685 = vset.pattern.permute.xlu0 0
    %686 = vperm.xlu0 %685, %v150
    %v687 = vpop.permute.xlu0 %686
    %690 = vset.pattern.permute.xlu0 0
    %691 = vperm.xlu0 %690, %v151
    %v692 = vpop.permute.xlu0 %691
    %695 = vset.pattern.permute.xlu0 0
    %696 = vperm.xlu0 %695, %v152
    %v697 = vpop.permute.xlu0 %696
    %700 = vset.pattern.permute.xlu0 0
    %701 = vperm.xlu0 %700, %v153
    %v702 = vpop.permute.xlu0 %701
    %705 = vset.pattern.permute.xlu0 0
    %706 = vperm.xlu0 %705, %v154
    %v707 = vpop.permute.xlu0 %706
    %710 = vset.pattern.permute.xlu0 0
    %711 = vperm.xlu0 %710, %v155
    %v712 = vpop.permute.xlu0 %711
    %715 = vset.pattern.permute.xlu0 0
    %716 = vperm.xlu0 %715, %v156
    %v717 = vpop.permute.xlu0 %716
    %720 = vset.pattern.permute.xlu0 0
    %721 = vperm.xlu0 %720, %v157
    %v722 = vpop.permute.xlu0 %721
    %725 = vset.pattern.permute.xlu0 0
    %726 = vperm.xlu0 %725, %v158
    %v727 = vpop.permute.xlu0 %726
    %730 = vset.pattern.permute.xlu0 0
    %731 = vperm.xlu0 %730, %v159
    %v732 = vpop.permute.xlu0 %731
    %735 = vset.pattern.permute.xlu0 0
    %736 = vperm.xlu0 %735, %v160
    %v737 = vpop.permute.xlu0 %736
    %740 = vset.pattern.permute.xlu0 0
    %741 = vperm.xlu0 %740, %v161
    %v742 = vpop.permute.xlu0 %741
    %745 = vset.pattern.permute.xlu0 0
    %746 = vperm.xlu0 %745, %v162
    %v747 = vpop.permute.xlu0 %746
    %750 = vset.pattern.permute.xlu0 0
    %751 = vperm.xlu0 %750, %v163
    %v752 = vpop.permute.xlu0 %751
    %755 = vset.pattern.permute.xlu0 0
    %756 = vperm.xlu0 %755, %v164
    %v757 = vpop.permute.xlu0 %756
    %760 = vset.pattern.permute.xlu0 0
    %761 = vperm.xlu0 %760, %v165
    %v762 = vpop.permute.xlu0 %761
    %765 = vset.pattern.permute.xlu0 0
    %766 = vperm.xlu0 %765, %v166
    %v767 = vpop.permute.xlu0 %766
    %770 = vset.pattern.permute.xlu0 0
    %771 = vperm.xlu0 %770, %v167
    %v772 = vpop.permute.xlu0 %771
    %775 = vset.pattern.permute.xlu0 0
    %776 = vperm.xlu0 %775, %v168
    %v777 = vpop.permute.xlu0 %776
    %780 = vset.pattern.permute.xlu0 0
    %781 = vperm.xlu0 %780, %v169
    %v782 = vpop.permute.xlu0 %781
    %785 = vset.pattern.permute.xlu0 0
    %786 = vperm.xlu0 %785, %v170
    %v787 = vpop.permute.xlu0 %786
    %790 = vset.pattern.permute.xlu0 0
    %791 = vperm.xlu0 %790, %v171
    %v792 = vpop.permute.xlu0 %791
    %795 = vset.pattern.permute.xlu0 0
    %796 = vperm.xlu0 %795, %v172
    %v797 = vpop.permute.xlu0 %796
    %800 = vset.pattern.permute.xlu0 0
    %801 = vperm.xlu0 %800, %v173
    %v802 = vpop.permute.xlu0 %801
    %v804 = vlaneseq
    %v805 = vshrl.u32 %v804, 7
    %v806 = vsub.s32 1, %v805
    %v807 = vrot.slane %v223, %v806
    %v808 = vmul.f32 %v567, %v807
    %v809 = vmul.f32 %v572, %v807
    %v810 = vmul.f32 %v577, %v807
    %v811 = vmul.f32 %v582, %v807
    %v812 = vmul.f32 %v587, %v807
    %v813 = vmul.f32 %v592, %v807
    %v814 = vmul.f32 %v597, %v807
    %v815 = vmul.f32 %v602, %v807
    %v816 = vmul.f32 %v607, %v807
    %v817 = vmul.f32 %v612, %v807
    %v818 = vmul.f32 %v617, %v807
    %v819 = vmul.f32 %v622, %v807
    %v820 = vmul.f32 %v627, %v807
    %v821 = vmul.f32 %v632, %v807
    %v822 = vmul.f32 %v637, %v807
    %v823 = vmul.f32 %v642, %v807
    %v824 = vmul.f32 %v647, %v807
    %v825 = vmul.f32 %v652, %v807
    %v826 = vmul.f32 %v657, %v807
    %v827 = vmul.f32 %v662, %v807
    %v828 = vmul.f32 %v667, %v807
    %v829 = vmul.f32 %v672, %v807
    %v830 = vmul.f32 %v677, %v807
    %v831 = vmul.f32 %v682, %v807
    %v832 = vmul.f32 %v687, %v807
    %v833 = vmul.f32 %v692, %v807
    %v834 = vmul.f32 %v697, %v807
    %v835 = vmul.f32 %v702, %v807
    %v836 = vmul.f32 %v707, %v807
    %v837 = vmul.f32 %v712, %v807
    %v838 = vmul.f32 %v717, %v807
    %v839 = vmul.f32 %v722, %v807
    %v840 = vmul.f32 %v727, %v807
    %v841 = vmul.f32 %v732, %v807
    %v842 = vmul.f32 %v737, %v807
    %v843 = vmul.f32 %v742, %v807
    %v844 = vmul.f32 %v747, %v807
    %v845 = vmul.f32 %v752, %v807
    %v846 = vmul.f32 %v757, %v807
    %v847 = vmul.f32 %v762, %v807
    %v848 = vmul.f32 %v767, %v807
    %v849 = vmul.f32 %v772, %v807
    %v850 = vmul.f32 %v777, %v807
    %v851 = vmul.f32 %v782, %v807
    %v852 = vmul.f32 %v787, %v807
    %v853 = vmul.f32 %v792, %v807
    %v854 = vmul.f32 %v797, %v807
    %v855 = vmul.f32 %v802, %v807
    %v856 = vadd.f32 %v516, %v808
    %v857 = vadd.f32 %v517, %v809
    %v858 = vadd.f32 %v518, %v810
    %v859 = vadd.f32 %v519, %v811
    %v860 = vadd.f32 %v520, %v812
    %v861 = vadd.f32 %v521, %v813
    %v862 = vadd.f32 %v522, %v814
    %v863 = vadd.f32 %v523, %v815
    %v864 = vadd.f32 %v524, %v816
    %v865 = vadd.f32 %v525, %v817
    %v866 = vadd.f32 %v526, %v818
    %v867 = vadd.f32 %v527, %v819
    %v868 = vadd.f32 %v528, %v820
    %v869 = vadd.f32 %v529, %v821
    %v870 = vadd.f32 %v530, %v822
    %v871 = vadd.f32 %v531, %v823
    %v872 = vadd.f32 %v532, %v824
    %v873 = vadd.f32 %v533, %v825
    %v874 = vadd.f32 %v534, %v826
    %v875 = vadd.f32 %v535, %v827
    %v876 = vadd.f32 %v536, %v828
    %v877 = vadd.f32 %v537, %v829
    %v878 = vadd.f32 %v538, %v830
    %v879 = vadd.f32 %v539, %v831
    %v880 = vadd.f32 %v540, %v832
    %v881 = vadd.f32 %v541, %v833
    %v882 = vadd.f32 %v542, %v834
    %v883 = vadd.f32 %v543, %v835
    %v884 = vadd.f32 %v544, %v836
    %v885 = vadd.f32 %v545, %v837
    %v886 = vadd.f32 %v546, %v838
    %v887 = vadd.f32 %v547, %v839
    %v888 = vadd.f32 %v548, %v840
    %v889 = vadd.f32 %v549, %v841
    %v890 = vadd.f32 %v550, %v842
    %v891 = vadd.f32 %v551, %v843
    %v892 = vadd.f32 %v552, %v844
    %v893 = vadd.f32 %v553, %v845
    %v894 = vadd.f32 %v554, %v846
    %v895 = vadd.f32 %v555, %v847
    %v896 = vadd.f32 %v556, %v848
    %v897 = vadd.f32 %v557, %v849
    %v898 = vadd.f32 %v558, %v850
    %v899 = vadd.f32 %v559, %v851
    %v900 = vadd.f32 %v560, %v852
    %v901 = vadd.f32 %v561, %v853
    %v902 = vadd.f32 %v562, %v854
    %v903 = vadd.f32 %v563, %v855
    %v904 = vld [vmem:[%s1] sm:$0x2]
    %v905 = vunpack.c.l.bf16 %v904
    %907 = vset.pattern.permute.xlu0 0
    %908 = vperm.xlu0 %907, %v174
    %v909 = vpop.permute.xlu0 %908
    %912 = vset.pattern.permute.xlu0 0
    %913 = vperm.xlu0 %912, %v175
    %v914 = vpop.permute.xlu0 %913
    %917 = vset.pattern.permute.xlu0 0
    %918 = vperm.xlu0 %917, %v176
    %v919 = vpop.permute.xlu0 %918
    %922 = vset.pattern.permute.xlu0 0
    %923 = vperm.xlu0 %922, %v177
    %v924 = vpop.permute.xlu0 %923
    %927 = vset.pattern.permute.xlu0 0
    %928 = vperm.xlu0 %927, %v178
    %v929 = vpop.permute.xlu0 %928
    %932 = vset.pattern.permute.xlu0 0
    %933 = vperm.xlu0 %932, %v179
    %v934 = vpop.permute.xlu0 %933
    %937 = vset.pattern.permute.xlu0 0
    %938 = vperm.xlu0 %937, %v180
    %v939 = vpop.permute.xlu0 %938
    %942 = vset.pattern.permute.xlu0 0
    %943 = vperm.xlu0 %942, %v181
    %v944 = vpop.permute.xlu0 %943
    %947 = vset.pattern.permute.xlu0 0
    %948 = vperm.xlu0 %947, %v182
    %v949 = vpop.permute.xlu0 %948
    %952 = vset.pattern.permute.xlu0 0
    %953 = vperm.xlu0 %952, %v183
    %v954 = vpop.permute.xlu0 %953
    %957 = vset.pattern.permute.xlu0 0
    %958 = vperm.xlu0 %957, %v184
    %v959 = vpop.permute.xlu0 %958
    %962 = vset.pattern.permute.xlu0 0
    %963 = vperm.xlu0 %962, %v185
    %v964 = vpop.permute.xlu0 %963
    %967 = vset.pattern.permute.xlu0 0
    %968 = vperm.xlu0 %967, %v186
    %v969 = vpop.permute.xlu0 %968
    %972 = vset.pattern.permute.xlu0 0
    %973 = vperm.xlu0 %972, %v187
    %v974 = vpop.permute.xlu0 %973
    %977 = vset.pattern.permute.xlu0 0
    %978 = vperm.xlu0 %977, %v188
    %v979 = vpop.permute.xlu0 %978
    %982 = vset.pattern.permute.xlu0 0
    %983 = vperm.xlu0 %982, %v189
    %v984 = vpop.permute.xlu0 %983
    %987 = vset.pattern.permute.xlu0 0
    %988 = vperm.xlu0 %987, %v190
    %v989 = vpop.permute.xlu0 %988
    %992 = vset.pattern.permute.xlu0 0
    %993 = vperm.xlu0 %992, %v191
    %v994 = vpop.permute.xlu0 %993
    %997 = vset.pattern.permute.xlu0 0
    %998 = vperm.xlu0 %997, %v192
    %v999 = vpop.permute.xlu0 %998
    %1002 = vset.pattern.permute.xlu0 0
    %1003 = vperm.xlu0 %1002, %v193
    %v1004 = vpop.permute.xlu0 %1003
    %1007 = vset.pattern.permute.xlu0 0
    %1008 = vperm.xlu0 %1007, %v194
    %v1009 = vpop.permute.xlu0 %1008
    %1012 = vset.pattern.permute.xlu0 0
    %1013 = vperm.xlu0 %1012, %v195
    %v1014 = vpop.permute.xlu0 %1013
    %1017 = vset.pattern.permute.xlu0 0
    %1018 = vperm.xlu0 %1017, %v196
    %v1019 = vpop.permute.xlu0 %1018
    %1022 = vset.pattern.permute.xlu0 0
    %1023 = vperm.xlu0 %1022, %v197
    %v1024 = vpop.permute.xlu0 %1023
    %1027 = vset.pattern.permute.xlu0 0
    %1028 = vperm.xlu0 %1027, %v198
    %v1029 = vpop.permute.xlu0 %1028
    %1032 = vset.pattern.permute.xlu0 0
    %1033 = vperm.xlu0 %1032, %v199
    %v1034 = vpop.permute.xlu0 %1033
    %1037 = vset.pattern.permute.xlu0 0
    %1038 = vperm.xlu0 %1037, %v200
    %v1039 = vpop.permute.xlu0 %1038
    %1042 = vset.pattern.permute.xlu0 0
    %1043 = vperm.xlu0 %1042, %v201
    %v1044 = vpop.permute.xlu0 %1043
    %1047 = vset.pattern.permute.xlu0 0
    %1048 = vperm.xlu0 %1047, %v202
    %v1049 = vpop.permute.xlu0 %1048
    %1052 = vset.pattern.permute.xlu0 0
    %1053 = vperm.xlu0 %1052, %v203
    %v1054 = vpop.permute.xlu0 %1053
    %1057 = vset.pattern.permute.xlu0 0
    %1058 = vperm.xlu0 %1057, %v204
    %v1059 = vpop.permute.xlu0 %1058
    %1062 = vset.pattern.permute.xlu0 0
    %1063 = vperm.xlu0 %1062, %v205
    %v1064 = vpop.permute.xlu0 %1063
    %1067 = vset.pattern.permute.xlu0 0
    %1068 = vperm.xlu0 %1067, %v206
    %v1069 = vpop.permute.xlu0 %1068
    %1072 = vset.pattern.permute.xlu0 0
    %1073 = vperm.xlu0 %1072, %v207
    %v1074 = vpop.permute.xlu0 %1073
    %1077 = vset.pattern.permute.xlu0 0
    %1078 = vperm.xlu0 %1077, %v208
    %v1079 = vpop.permute.xlu0 %1078
    %1082 = vset.pattern.permute.xlu0 0
    %1083 = vperm.xlu0 %1082, %v209
    %v1084 = vpop.permute.xlu0 %1083
    %1087 = vset.pattern.permute.xlu0 0
    %1088 = vperm.xlu0 %1087, %v210
    %v1089 = vpop.permute.xlu0 %1088
    %1092 = vset.pattern.permute.xlu0 0
    %1093 = vperm.xlu0 %1092, %v211
    %v1094 = vpop.permute.xlu0 %1093
    %1097 = vset.pattern.permute.xlu0 0
    %1098 = vperm.xlu0 %1097, %v212
    %v1099 = vpop.permute.xlu0 %1098
    %1102 = vset.pattern.permute.xlu0 0
    %1103 = vperm.xlu0 %1102, %v213
    %v1104 = vpop.permute.xlu0 %1103
    %1107 = vset.pattern.permute.xlu0 0
    %1108 = vperm.xlu0 %1107, %v214
    %v1109 = vpop.permute.xlu0 %1108
    %1112 = vset.pattern.permute.xlu0 0
    %1113 = vperm.xlu0 %1112, %v215
    %v1114 = vpop.permute.xlu0 %1113
    %1117 = vset.pattern.permute.xlu0 0
    %1118 = vperm.xlu0 %1117, %v216
    %v1119 = vpop.permute.xlu0 %1118
    %1122 = vset.pattern.permute.xlu0 0
    %1123 = vperm.xlu0 %1122, %v217
    %v1124 = vpop.permute.xlu0 %1123
    %1127 = vset.pattern.permute.xlu0 0
    %1128 = vperm.xlu0 %1127, %v218
    %v1129 = vpop.permute.xlu0 %1128
    %1132 = vset.pattern.permute.xlu0 0
    %1133 = vperm.xlu0 %1132, %v219
    %v1134 = vpop.permute.xlu0 %1133
    %1137 = vset.pattern.permute.xlu0 0
    %1138 = vperm.xlu0 %1137, %v220
    %v1139 = vpop.permute.xlu0 %1138
    %1142 = vset.pattern.permute.xlu0 0
    %1143 = vperm.xlu0 %1142, %v221
    %v1144 = vpop.permute.xlu0 %1143
    %v1146 = vlaneseq
    %v1147 = vshrl.u32 %v1146, 7
    %v1148 = vsub.s32 2, %v1147
    %v1149 = vrot.slane %v905, %v1148
    %v1150 = vmul.f32 %v909, %v1149
    %v1151 = vmul.f32 %v914, %v1149
    %v1152 = vmul.f32 %v919, %v1149
    %v1153 = vmul.f32 %v924, %v1149
    %v1154 = vmul.f32 %v929, %v1149
    %v1155 = vmul.f32 %v934, %v1149
    %v1156 = vmul.f32 %v939, %v1149
    %v1157 = vmul.f32 %v944, %v1149
    %v1158 = vmul.f32 %v949, %v1149
    %v1159 = vmul.f32 %v954, %v1149
    %v1160 = vmul.f32 %v959, %v1149
    %v1161 = vmul.f32 %v964, %v1149
    %v1162 = vmul.f32 %v969, %v1149
    %v1163 = vmul.f32 %v974, %v1149
    %v1164 = vmul.f32 %v979, %v1149
    %v1165 = vmul.f32 %v984, %v1149
    %v1166 = vmul.f32 %v989, %v1149
    %v1167 = vmul.f32 %v994, %v1149
    %v1168 = vmul.f32 %v999, %v1149
    %v1169 = vmul.f32 %v1004, %v1149
    %v1170 = vmul.f32 %v1009, %v1149
    %v1171 = vmul.f32 %v1014, %v1149
    %v1172 = vmul.f32 %v1019, %v1149
    %v1173 = vmul.f32 %v1024, %v1149
    %v1174 = vmul.f32 %v1029, %v1149
    %v1175 = vmul.f32 %v1034, %v1149
    %v1176 = vmul.f32 %v1039, %v1149
    %v1177 = vmul.f32 %v1044, %v1149
    %v1178 = vmul.f32 %v1049, %v1149
    %v1179 = vmul.f32 %v1054, %v1149
    %v1180 = vmul.f32 %v1059, %v1149
    %v1181 = vmul.f32 %v1064, %v1149
    %v1182 = vmul.f32 %v1069, %v1149
    %v1183 = vmul.f32 %v1074, %v1149
    %v1184 = vmul.f32 %v1079, %v1149
    %v1185 = vmul.f32 %v1084, %v1149
    %v1186 = vmul.f32 %v1089, %v1149
    %v1187 = vmul.f32 %v1094, %v1149
    %v1188 = vmul.f32 %v1099, %v1149
    %v1189 = vmul.f32 %v1104, %v1149
    %v1190 = vmul.f32 %v1109, %v1149
    %v1191 = vmul.f32 %v1114, %v1149
    %v1192 = vmul.f32 %v1119, %v1149
    %v1193 = vmul.f32 %v1124, %v1149
    %v1194 = vmul.f32 %v1129, %v1149
    %v1195 = vmul.f32 %v1134, %v1149
    %v1196 = vmul.f32 %v1139, %v1149
    %v1197 = vmul.f32 %v1144, %v1149
    %v1198 = vadd.f32 %v856, %v1150
    %v1199 = vadd.f32 %v857, %v1151
    %v1200 = vadd.f32 %v858, %v1152
    %v1201 = vadd.f32 %v859, %v1153
    %v1202 = vadd.f32 %v860, %v1154
    %v1203 = vadd.f32 %v861, %v1155
    %v1204 = vadd.f32 %v862, %v1156
    %v1205 = vadd.f32 %v863, %v1157
    %v1206 = vadd.f32 %v864, %v1158
    %v1207 = vadd.f32 %v865, %v1159
    %v1208 = vadd.f32 %v866, %v1160
    %v1209 = vadd.f32 %v867, %v1161
    %v1210 = vadd.f32 %v868, %v1162
    %v1211 = vadd.f32 %v869, %v1163
    %v1212 = vadd.f32 %v870, %v1164
    %v1213 = vadd.f32 %v871, %v1165
    %v1214 = vadd.f32 %v872, %v1166
    %v1215 = vadd.f32 %v873, %v1167
    %v1216 = vadd.f32 %v874, %v1168
    %v1217 = vadd.f32 %v875, %v1169
    %v1218 = vadd.f32 %v876, %v1170
    %v1219 = vadd.f32 %v877, %v1171
    %v1220 = vadd.f32 %v878, %v1172
    %v1221 = vadd.f32 %v879, %v1173
    %v1222 = vadd.f32 %v880, %v1174
    %v1223 = vadd.f32 %v881, %v1175
    %v1224 = vadd.f32 %v882, %v1176
    %v1225 = vadd.f32 %v883, %v1177
    %v1226 = vadd.f32 %v884, %v1178
    %v1227 = vadd.f32 %v885, %v1179
    %v1228 = vadd.f32 %v886, %v1180
    %v1229 = vadd.f32 %v887, %v1181
    %v1230 = vadd.f32 %v888, %v1182
    %v1231 = vadd.f32 %v889, %v1183
    %v1232 = vadd.f32 %v890, %v1184
    %v1233 = vadd.f32 %v891, %v1185
    %v1234 = vadd.f32 %v892, %v1186
    %v1235 = vadd.f32 %v893, %v1187
    %v1236 = vadd.f32 %v894, %v1188
    %v1237 = vadd.f32 %v895, %v1189
    %v1238 = vadd.f32 %v896, %v1190
    %v1239 = vadd.f32 %v897, %v1191
    %v1240 = vadd.f32 %v898, %v1192
    %v1241 = vadd.f32 %v899, %v1193
    %v1242 = vadd.f32 %v900, %v1194
    %v1243 = vadd.f32 %v901, %v1195
    %v1244 = vadd.f32 %v902, %v1196
    %v1245 = vadd.f32 %v903, %v1197
    %v1246 = vld [vmem:[%s2] sm:$0x1]
    %v1248 = vlaneseq
    %v1249 = vshrl.u32 %v1248, 7
    %v1250 = vsub.s32 0, %v1249
    %v1251 = vrot.slane %v1246, %v1250
    %v1253 = vadd.f32 %v1198, %v1251
    %v1254 = vadd.f32 %v1199, %v1251
    %v1255 = vadd.f32 %v1200, %v1251
    %v1256 = vadd.f32 %v1201, %v1251
    %v1257 = vadd.f32 %v1202, %v1251
    %v1258 = vadd.f32 %v1203, %v1251
    %v1259 = vadd.f32 %v1204, %v1251
    %v1260 = vadd.f32 %v1205, %v1251
    %v1261 = vadd.f32 %v1206, %v1251
    %v1262 = vadd.f32 %v1207, %v1251
    %v1263 = vadd.f32 %v1208, %v1251
    %v1264 = vadd.f32 %v1209, %v1251
    %v1265 = vadd.f32 %v1210, %v1251
    %v1266 = vadd.f32 %v1211, %v1251
    %v1267 = vadd.f32 %v1212, %v1251
    %v1268 = vadd.f32 %v1213, %v1251
    %v1269 = vadd.f32 %v1214, %v1251
    %v1270 = vadd.f32 %v1215, %v1251
    %v1271 = vadd.f32 %v1216, %v1251
    %v1272 = vadd.f32 %v1217, %v1251
    %v1273 = vadd.f32 %v1218, %v1251
    %v1274 = vadd.f32 %v1219, %v1251
    %v1275 = vadd.f32 %v1220, %v1251
    %v1276 = vadd.f32 %v1221, %v1251
    %v1277 = vadd.f32 %v1222, %v1251
    %v1278 = vadd.f32 %v1223, %v1251
    %v1279 = vadd.f32 %v1224, %v1251
    %v1280 = vadd.f32 %v1225, %v1251
    %v1281 = vadd.f32 %v1226, %v1251
    %v1282 = vadd.f32 %v1227, %v1251
    %v1283 = vadd.f32 %v1228, %v1251
    %v1284 = vadd.f32 %v1229, %v1251
    %v1285 = vadd.f32 %v1230, %v1251
    %v1286 = vadd.f32 %v1231, %v1251
    %v1287 = vadd.f32 %v1232, %v1251
    %v1288 = vadd.f32 %v1233, %v1251
    %v1289 = vadd.f32 %v1234, %v1251
    %v1290 = vadd.f32 %v1235, %v1251
    %v1291 = vadd.f32 %v1236, %v1251
    %v1292 = vadd.f32 %v1237, %v1251
    %v1293 = vadd.f32 %v1238, %v1251
    %v1294 = vadd.f32 %v1239, %v1251
    %v1295 = vadd.f32 %v1240, %v1251
    %v1296 = vadd.f32 %v1241, %v1251
    %v1297 = vadd.f32 %v1242, %v1251
    %v1298 = vadd.f32 %v1243, %v1251
    %v1299 = vadd.f32 %v1244, %v1251
    %v1300 = vadd.f32 %v1245, %v1251
    %1301 = vst.msk [vmem:[#allocation2] sm:$0xff] %vm40, %v1253
    %1302 = vst.msk [vmem:[#allocation2 + $0x8] sm:$0xff] %vm40, %v1254
    %1303 = vst.msk [vmem:[#allocation2 + $0x10] sm:$0xff] %vm40, %v1255
    %1304 = vst.msk [vmem:[#allocation2 + $0x18] sm:$0xff] %vm40, %v1256
    %1305 = vst.msk [vmem:[#allocation2 + $0x20] sm:$0xff] %vm40, %v1257
    %1306 = vst.msk [vmem:[#allocation2 + $0x28] sm:$0xff] %vm40, %v1258
    %1307 = vst.msk [vmem:[#allocation2 + $0x30] sm:$0xff] %vm40, %v1259
    %1308 = vst.msk [vmem:[#allocation2 + $0x38] sm:$0xff] %vm40, %v1260
    %1309 = vst.msk [vmem:[#allocation2 + $0x40] sm:$0xff] %vm40, %v1261
    %1310 = vst.msk [vmem:[#allocation2 + $0x48] sm:$0xff] %vm40, %v1262
    %1311 = vst.msk [vmem:[#allocation2 + $0x50] sm:$0xff] %vm40, %v1263
    %1312 = vst.msk [vmem:[#allocation2 + $0x58] sm:$0xff] %vm40, %v1264
    %1313 = vst.msk [vmem:[#allocation2 + $0x60] sm:$0xff] %vm40, %v1265
    %1314 = vst.msk [vmem:[#allocation2 + $0x68] sm:$0xff] %vm40, %v1266
    %1315 = vst.msk [vmem:[#allocation2 + $0x70] sm:$0xff] %vm40, %v1267
    %1316 = vst.msk [vmem:[#allocation2 + $0x78] sm:$0xff] %vm40, %v1268
    %1317 = vst.msk [vmem:[#allocation2 + $0x80] sm:$0xff] %vm40, %v1269
    %1318 = vst.msk [vmem:[#allocation2 + $0x88] sm:$0xff] %vm40, %v1270
    %1319 = vst.msk [vmem:[#allocation2 + $0x90] sm:$0xff] %vm40, %v1271
    %1320 = vst.msk [vmem:[#allocation2 + $0x98] sm:$0xff] %vm40, %v1272
    %1321 = vst.msk [vmem:[#allocation2 + $0xa0] sm:$0xff] %vm40, %v1273
    %1322 = vst.msk [vmem:[#allocation2 + $0xa8] sm:$0xff] %vm40, %v1274
    %1323 = vst.msk [vmem:[#allocation2 + $0xb0] sm:$0xff] %vm40, %v1275
    %1324 = vst.msk [vmem:[#allocation2 + $0xb8] sm:$0xff] %vm40, %v1276
    %1325 = vst.msk [vmem:[#allocation2 + $0xc0] sm:$0xff] %vm40, %v1277
    %1326 = vst.msk [vmem:[#allocation2 + $0xc8] sm:$0xff] %vm40, %v1278
    %1327 = vst.msk [vmem:[#allocation2 + $0xd0] sm:$0xff] %vm40, %v1279
    %1328 = vst.msk [vmem:[#allocation2 + $0xd8] sm:$0xff] %vm40, %v1280
    %1329 = vst.msk [vmem:[#allocation2 + $0xe0] sm:$0xff] %vm40, %v1281
    %1330 = vst.msk [vmem:[#allocation2 + $0xe8] sm:$0xff] %vm40, %v1282
    %1331 = vst.msk [vmem:[#allocation2 + $0xf0] sm:$0xff] %vm40, %v1283
    %1332 = vst.msk [vmem:[#allocation2 + $0xf8] sm:$0xff] %vm40, %v1284
    %1333 = vst.msk [vmem:[#allocation2 + $0x100] sm:$0xff] %vm40, %v1285
    %1334 = vst.msk [vmem:[#allocation2 + $0x108] sm:$0xff] %vm40, %v1286
    %1335 = vst.msk [vmem:[#allocation2 + $0x110] sm:$0xff] %vm40, %v1287
    %1336 = vst.msk [vmem:[#allocation2 + $0x118] sm:$0xff] %vm40, %v1288
    %1337 = vst.msk [vmem:[#allocation2 + $0x120] sm:$0xff] %vm40, %v1289
    %1338 = vst.msk [vmem:[#allocation2 + $0x128] sm:$0xff] %vm40, %v1290
    %1339 = vst.msk [vmem:[#allocation2 + $0x130] sm:$0xff] %vm40, %v1291
    %1340 = vst.msk [vmem:[#allocation2 + $0x138] sm:$0xff] %vm40, %v1292
    %1341 = vst.msk [vmem:[#allocation2 + $0x140] sm:$0xff] %vm40, %v1293
    %1342 = vst.msk [vmem:[#allocation2 + $0x148] sm:$0xff] %vm40, %v1294
    %1343 = vst.msk [vmem:[#allocation2 + $0x150] sm:$0xff] %vm40, %v1295
    %1344 = vst.msk [vmem:[#allocation2 + $0x158] sm:$0xff] %vm40, %v1296
    %1345 = vst.msk [vmem:[#allocation2 + $0x160] sm:$0xff] %vm40, %v1297
    %1346 = vst.msk [vmem:[#allocation2 + $0x168] sm:$0xff] %vm40, %v1298
    %1347 = vst.msk [vmem:[#allocation2 + $0x170] sm:$0xff] %vm40, %v1299
    %vm1348 = vcmask 128000
    %1349 = vst.msk [vmem:[#allocation2 + $0x178] sm:$0x3f] %vm1348, %v1300
    %v1350 = vld [vmem:[#allocation2] ss:$2 sm:$0xff]
    %s1351 = scalar_lea.vmem [#allocation2], 16
    %v1352 = vld [vmem:[%s1351] ss:$2 sm:$0xff]
    %s1353 = scalar_lea.vmem [#allocation2], 32
    %v1354 = vld [vmem:[%s1353] ss:$2 sm:$0xff]
    %s1355 = scalar_lea.vmem [#allocation2], 48
    %v1356 = vld [vmem:[%s1355] ss:$2 sm:$0xff]
    %s1357 = scalar_lea.vmem [#allocation2], 64
    %v1358 = vld [vmem:[%s1357] ss:$2 sm:$0xff]
    %s1359 = scalar_lea.vmem [#allocation2], 80
    %v1360 = vld [vmem:[%s1359] ss:$2 sm:$0xff]
    %s1361 = scalar_lea.vmem [#allocation2], 96
    %v1362 = vld [vmem:[%s1361] ss:$2 sm:$0xff]
    %s1363 = scalar_lea.vmem [#allocation2], 112
    %v1364 = vld [vmem:[%s1363] ss:$2 sm:$0xff]
    %s1365 = scalar_lea.vmem [#allocation2], 128
    %v1366 = vld [vmem:[%s1365] ss:$2 sm:$0xff]
    %s1367 = scalar_lea.vmem [#allocation2], 144
    %v1368 = vld [vmem:[%s1367] ss:$2 sm:$0xff]
    %s1369 = scalar_lea.vmem [#allocation2], 160
    %v1370 = vld [vmem:[%s1369] ss:$2 sm:$0xff]
    %s1371 = scalar_lea.vmem [#allocation2], 176
    %v1372 = vld [vmem:[%s1371] ss:$2 sm:$0x1f]
    %s1373 = scalar_lea.vmem [#allocation2], 1
    %v1374 = vld [vmem:[%s1373] ss:$2 sm:$0xff]
    %s1375 = scalar_lea.vmem [#allocation2], 17
    %v1376 = vld [vmem:[%s1375] ss:$2 sm:$0xff]
    %s1377 = scalar_lea.vmem [#allocation2], 33
    %v1378 = vld [vmem:[%s1377] ss:$2 sm:$0xff]
    %s1379 = scalar_lea.vmem [#allocation2], 49
    %v1380 = vld [vmem:[%s1379] ss:$2 sm:$0xff]
    %s1381 = scalar_lea.vmem [#allocation2], 65
    %v1382 = vld [vmem:[%s1381] ss:$2 sm:$0xff]
    %s1383 = scalar_lea.vmem [#allocation2], 81
    %v1384 = vld [vmem:[%s1383] ss:$2 sm:$0xff]
    %s1385 = scalar_lea.vmem [#allocation2], 97
    %v1386 = vld [vmem:[%s1385] ss:$2 sm:$0xff]
    %s1387 = scalar_lea.vmem [#allocation2], 113
    %v1388 = vld [vmem:[%s1387] ss:$2 sm:$0xff]
    %s1389 = scalar_lea.vmem [#allocation2], 129
    %v1390 = vld [vmem:[%s1389] ss:$2 sm:$0xff]
    %s1391 = scalar_lea.vmem [#allocation2], 145
    %v1392 = vld [vmem:[%s1391] ss:$2 sm:$0xff]
    %s1393 = scalar_lea.vmem [#allocation2], 161
    %v1394 = vld [vmem:[%s1393] ss:$2 sm:$0xff]
    %s1395 = scalar_lea.vmem [#allocation2], 177
    %v1396 = vld [vmem:[%s1395] ss:$2 sm:$0x1f]
    %v1397 = vmax.f32 %v1350, %v1374
    %v1398 = vmax.f32 %v1352, %v1376
    %v1399 = vmax.f32 %v1354, %v1378
    %v1400 = vmax.f32 %v1356, %v1380
    %v1401 = vmax.f32 %v1358, %v1382
    %v1402 = vmax.f32 %v1360, %v1384
    %v1403 = vmax.f32 %v1362, %v1386
    %v1404 = vmax.f32 %v1364, %v1388
    %v1405 = vmax.f32 %v1366, %v1390
    %v1406 = vmax.f32 %v1368, %v1392
    %v1407 = vmax.f32 %v1370, %v1394
    %v1408 = vmax.f32 %v1372, %v1396
    %1409 = vst.msk [vmem:[#allocation3 + $0x1] sm:$0xff] %vm40, %v1397
    %1410 = vst.msk [vmem:[#allocation3 + $0x9] sm:$0xff] %vm40, %v1398
    %1411 = vst.msk [vmem:[#allocation3 + $0x11] sm:$0xff] %vm40, %v1399
    %1412 = vst.msk [vmem:[#allocation3 + $0x19] sm:$0xff] %vm40, %v1400
    %1413 = vst.msk [vmem:[#allocation3 + $0x21] sm:$0xff] %vm40, %v1401
    %1414 = vst.msk [vmem:[#allocation3 + $0x29] sm:$0xff] %vm40, %v1402
    %1415 = vst.msk [vmem:[#allocation3 + $0x31] sm:$0xff] %vm40, %v1403
    %1416 = vst.msk [vmem:[#allocation3 + $0x39] sm:$0xff] %vm40, %v1404
    %1417 = vst.msk [vmem:[#allocation3 + $0x41] sm:$0xff] %vm40, %v1405
    %1418 = vst.msk [vmem:[#allocation3 + $0x49] sm:$0xff] %vm40, %v1406
    %1419 = vst.msk [vmem:[#allocation3 + $0x51] sm:$0xff] %vm40, %v1407
    %vm1420 = vcmask 126976
    %1421 = vst.msk [vmem:[#allocation3 + $0x59] sm:$0x1f] %vm1420, %v1408
    %s1422 = scalar_lea.vmem [#allocation2], 192
    %v1423 = vld [vmem:[%s1422] ss:$2 sm:$0xff]
    %s1424 = scalar_lea.vmem [#allocation2], 208
    %v1425 = vld [vmem:[%s1424] ss:$2 sm:$0xff]
    %s1426 = scalar_lea.vmem [#allocation2], 224
    %v1427 = vld [vmem:[%s1426] ss:$2 sm:$0xff]
    %s1428 = scalar_lea.vmem [#allocation2], 240
    %v1429 = vld [vmem:[%s1428] ss:$2 sm:$0xff]
    %s1430 = scalar_lea.vmem [#allocation2], 256
    %v1431 = vld [vmem:[%s1430] ss:$2 sm:$0xff]
    %s1432 = scalar_lea.vmem [#allocation2], 272
    %v1433 = vld [vmem:[%s1432] ss:$2 sm:$0xff]
    %s1434 = scalar_lea.vmem [#allocation2], 288
    %v1435 = vld [vmem:[%s1434] ss:$2 sm:$0xff]
    %s1436 = scalar_lea.vmem [#allocation2], 304
    %v1437 = vld [vmem:[%s1436] ss:$2 sm:$0xff]
    %s1438 = scalar_lea.vmem [#allocation2], 320
    %v1439 = vld [vmem:[%s1438] ss:$2 sm:$0xff]
    %s1440 = scalar_lea.vmem [#allocation2], 336
    %v1441 = vld [vmem:[%s1440] ss:$2 sm:$0xff]
    %s1442 = scalar_lea.vmem [#allocation2], 352
    %v1443 = vld [vmem:[%s1442] ss:$2 sm:$0xff]
    %s1444 = scalar_lea.vmem [#allocation2], 368
    %v1445 = vld [vmem:[%s1444] ss:$2 sm:$0x1f]
    %s1446 = scalar_lea.vmem [#allocation2], 193
    %v1447 = vld [vmem:[%s1446] ss:$2 sm:$0xff]
    %s1448 = scalar_lea.vmem [#allocation2], 209
    %v1449 = vld [vmem:[%s1448] ss:$2 sm:$0xff]
    %s1450 = scalar_lea.vmem [#allocation2], 225
    %v1451 = vld [vmem:[%s1450] ss:$2 sm:$0xff]
    %s1452 = scalar_lea.vmem [#allocation2], 241
    %v1453 = vld [vmem:[%s1452] ss:$2 sm:$0xff]
    %s1454 = scalar_lea.vmem [#allocation2], 257
    %v1455 = vld [vmem:[%s1454] ss:$2 sm:$0xff]
    %s1456 = scalar_lea.vmem [#allocation2], 273
    %v1457 = vld [vmem:[%s1456] ss:$2 sm:$0xff]
    %s1458 = scalar_lea.vmem [#allocation2], 289
    %v1459 = vld [vmem:[%s1458] ss:$2 sm:$0xff]
    %s1460 = scalar_lea.vmem [#allocation2], 305
    %v1461 = vld [vmem:[%s1460] ss:$2 sm:$0xff]
    %s1462 = scalar_lea.vmem [#allocation2], 321
    %v1463 = vld [vmem:[%s1462] ss:$2 sm:$0xff]
    %s1464 = scalar_lea.vmem [#allocation2], 337
    %v1465 = vld [vmem:[%s1464] ss:$2 sm:$0xff]
    %s1466 = scalar_lea.vmem [#allocation2], 353
    %v1467 = vld [vmem:[%s1466] ss:$2 sm:$0xff]
    %s1468 = scalar_lea.vmem [#allocation2], 369
    %v1469 = vld [vmem:[%s1468] ss:$2 sm:$0x1f]
    %v1470 = vmax.f32 %v1423, %v1447
    %v1471 = vmax.f32 %v1425, %v1449
    %v1472 = vmax.f32 %v1427, %v1451
    %v1473 = vmax.f32 %v1429, %v1453
    %v1474 = vmax.f32 %v1431, %v1455
    %v1475 = vmax.f32 %v1433, %v1457
    %v1476 = vmax.f32 %v1435, %v1459
    %v1477 = vmax.f32 %v1437, %v1461
    %v1478 = vmax.f32 %v1439, %v1463
    %v1479 = vmax.f32 %v1441, %v1465
    %v1480 = vmax.f32 %v1443, %v1467
    %v1481 = vmax.f32 %v1445, %v1469
    %1482 = vst.msk [vmem:[#allocation3 + $0x61] sm:$0xff] %vm40, %v1470
    %1483 = vst.msk [vmem:[#allocation3 + $0x69] sm:$0xff] %vm40, %v1471
    %1484 = vst.msk [vmem:[#allocation3 + $0x71] sm:$0xff] %vm40, %v1472
    %1485 = vst.msk [vmem:[#allocation3 + $0x79] sm:$0xff] %vm40, %v1473
    %1486 = vst.msk [vmem:[#allocation3 + $0x81] sm:$0xff] %vm40, %v1474
    %1487 = vst.msk [vmem:[#allocation3 + $0x89] sm:$0xff] %vm40, %v1475
    %1488 = vst.msk [vmem:[#allocation3 + $0x91] sm:$0xff] %vm40, %v1476
    %1489 = vst.msk [vmem:[#allocation3 + $0x99] sm:$0xff] %vm40, %v1477
    %1490 = vst.msk [vmem:[#allocation3 + $0xa1] sm:$0xff] %vm40, %v1478
    %1491 = vst.msk [vmem:[#allocation3 + $0xa9] sm:$0xff] %vm40, %v1479
    %1492 = vst.msk [vmem:[#allocation3 + $0xb1] sm:$0xff] %vm40, %v1480
    %1493 = vst.msk [vmem:[#allocation3 + $0xb9] sm:$0x1f] %vm1420, %v1481
    %v1494 = vld [vmem:[#allocation3] sm:$0xff]
    %v1495 = vld [vmem:[#allocation3 + $0x8] sm:$0xff]
    %v1496 = vld [vmem:[#allocation3 + $0x10] sm:$0xff]
    %v1497 = vld [vmem:[#allocation3 + $0x18] sm:$0xff]
    %v1498 = vld [vmem:[#allocation3 + $0x20] sm:$0xff]
    %v1499 = vld [vmem:[#allocation3 + $0x28] sm:$0xff]
    %v1500 = vld [vmem:[#allocation3 + $0x30] sm:$0xff]
    %v1501 = vld [vmem:[#allocation3 + $0x38] sm:$0xff]
    %v1502 = vld [vmem:[#allocation3 + $0x40] sm:$0xff]
    %v1503 = vld [vmem:[#allocation3 + $0x48] sm:$0xff]
    %v1504 = vld [vmem:[#allocation3 + $0x50] sm:$0xff]
    %v1505 = vld [vmem:[#allocation3 + $0x58] sm:$0xff]
    %v1506 = vld [vmem:[#allocation3 + $0x60] sm:$0xff]
    %v1507 = vld [vmem:[#allocation3 + $0x68] sm:$0xff]
    %v1508 = vld [vmem:[#allocation3 + $0x70] sm:$0xff]
    %v1509 = vld [vmem:[#allocation3 + $0x78] sm:$0xff]
    %v1510 = vld [vmem:[#allocation3 + $0x80] sm:$0xff]
    %v1511 = vld [vmem:[#allocation3 + $0x88] sm:$0xff]
    %v1512 = vld [vmem:[#allocation3 + $0x90] sm:$0xff]
    %v1513 = vld [vmem:[#allocation3 + $0x98] sm:$0xff]
    %v1514 = vld [vmem:[#allocation3 + $0xa0] sm:$0xff]
    %v1515 = vld [vmem:[#allocation3 + $0xa8] sm:$0xff]
    %v1516 = vld [vmem:[#allocation3 + $0xb0] sm:$0xff]
    %v1517 = vld [vmem:[#allocation3 + $0xb8] sm:$0x3f]
    %v1518 = vld [vmem:[#allocation3 + $0x1] sm:$0xff]
    %v1519 = vld [vmem:[#allocation3 + $0x9] sm:$0xff]
    %v1520 = vld [vmem:[#allocation3 + $0x11] sm:$0xff]
    %v1521 = vld [vmem:[#allocation3 + $0x19] sm:$0xff]
    %v1522 = vld [vmem:[#allocation3 + $0x21] sm:$0xff]
    %v1523 = vld [vmem:[#allocation3 + $0x29] sm:$0xff]
    %v1524 = vld [vmem:[#allocation3 + $0x31] sm:$0xff]
    %v1525 = vld [vmem:[#allocation3 + $0x39] sm:$0xff]
    %v1526 = vld [vmem:[#allocation3 + $0x41] sm:$0xff]
    %v1527 = vld [vmem:[#allocation3 + $0x49] sm:$0xff]
    %v1528 = vld [vmem:[#allocation3 + $0x51] sm:$0xff]
    %v1529 = vld [vmem:[#allocation3 + $0x59] sm:$0xff]
    %v1530 = vld [vmem:[#allocation3 + $0x61] sm:$0xff]
    %v1531 = vld [vmem:[#allocation3 + $0x69] sm:$0xff]
    %v1532 = vld [vmem:[#allocation3 + $0x71] sm:$0xff]
    %v1533 = vld [vmem:[#allocation3 + $0x79] sm:$0xff]
    %v1534 = vld [vmem:[#allocation3 + $0x81] sm:$0xff]
    %v1535 = vld [vmem:[#allocation3 + $0x89] sm:$0xff]
    %v1536 = vld [vmem:[#allocation3 + $0x91] sm:$0xff]
    %v1537 = vld [vmem:[#allocation3 + $0x99] sm:$0xff]
    %v1538 = vld [vmem:[#allocation3 + $0xa1] sm:$0xff]
    %v1539 = vld [vmem:[#allocation3 + $0xa9] sm:$0xff]
    %v1540 = vld [vmem:[#allocation3 + $0xb1] sm:$0xff]
    %v1541 = vld [vmem:[#allocation3 + $0xb9] sm:$0x3f]
    %v1542 = vld [vmem:[#allocation3 + $0x2] sm:$0xff]
    %v1543 = vld [vmem:[#allocation3 + $0xa] sm:$0xff]
    %v1544 = vld [vmem:[#allocation3 + $0x12] sm:$0xff]
    %v1545 = vld [vmem:[#allocation3 + $0x1a] sm:$0xff]
    %v1546 = vld [vmem:[#allocation3 + $0x22] sm:$0xff]
    %v1547 = vld [vmem:[#allocation3 + $0x2a] sm:$0xff]
    %v1548 = vld [vmem:[#allocation3 + $0x32] sm:$0xff]
    %v1549 = vld [vmem:[#allocation3 + $0x3a] sm:$0xff]
    %v1550 = vld [vmem:[#allocation3 + $0x42] sm:$0xff]
    %v1551 = vld [vmem:[#allocation3 + $0x4a] sm:$0xff]
    %v1552 = vld [vmem:[#allocation3 + $0x52] sm:$0xff]
    %v1553 = vld [vmem:[#allocation3 + $0x5a] sm:$0xff]
    %v1554 = vld [vmem:[#allocation3 + $0x62] sm:$0xff]
    %v1555 = vld [vmem:[#allocation3 + $0x6a] sm:$0xff]
    %v1556 = vld [vmem:[#allocation3 + $0x72] sm:$0xff]
    %v1557 = vld [vmem:[#allocation3 + $0x7a] sm:$0xff]
    %v1558 = vld [vmem:[#allocation3 + $0x82] sm:$0xff]
    %v1559 = vld [vmem:[#allocation3 + $0x8a] sm:$0xff]
    %v1560 = vld [vmem:[#allocation3 + $0x92] sm:$0xff]
    %v1561 = vld [vmem:[#allocation3 + $0x9a] sm:$0xff]
    %v1562 = vld [vmem:[#allocation3 + $0xa2] sm:$0xff]
    %v1563 = vld [vmem:[#allocation3 + $0xaa] sm:$0xff]
    %v1564 = vld [vmem:[#allocation3 + $0xb2] sm:$0xff]
    %v1565 = vld [vmem:[#allocation3 + $0xba] sm:$0x3f]
    %1590 = vrot.lane.b32.xlu0 %v1518, 16
    %v1591 = vpop.permute.xlu0 %1590
    %1592 = vrot.lane.b32.xlu0 %v1519, 16
    %v1593 = vpop.permute.xlu0 %1592
    %1594 = vrot.lane.b32.xlu0 %v1520, 16
    %v1595 = vpop.permute.xlu0 %1594
    %1596 = vrot.lane.b32.xlu0 %v1521, 16
    %v1597 = vpop.permute.xlu0 %1596
    %1598 = vrot.lane.b32.xlu0 %v1522, 16
    %v1599 = vpop.permute.xlu0 %1598
    %1600 = vrot.lane.b32.xlu0 %v1523, 16
    %v1601 = vpop.permute.xlu0 %1600
    %1602 = vrot.lane.b32.xlu0 %v1524, 16
    %v1603 = vpop.permute.xlu0 %1602
    %1604 = vrot.lane.b32.xlu0 %v1525, 16
    %v1605 = vpop.permute.xlu0 %1604
    %1606 = vrot.lane.b32.xlu0 %v1526, 16
    %v1607 = vpop.permute.xlu0 %1606
    %1608 = vrot.lane.b32.xlu0 %v1527, 16
    %v1609 = vpop.permute.xlu0 %1608
    %1610 = vrot.lane.b32.xlu0 %v1528, 16
    %v1611 = vpop.permute.xlu0 %1610
    %1612 = vrot.lane.b32.xlu0 %v1529, 16
    %v1613 = vpop.permute.xlu0 %1612
    %1614 = vrot.lane.b32.xlu0 %v1530, 16
    %v1615 = vpop.permute.xlu0 %1614
    %1616 = vrot.lane.b32.xlu0 %v1531, 16
    %v1617 = vpop.permute.xlu0 %1616
    %1618 = vrot.lane.b32.xlu0 %v1532, 16
    %v1619 = vpop.permute.xlu0 %1618
    %1620 = vrot.lane.b32.xlu0 %v1533, 16
    %v1621 = vpop.permute.xlu0 %1620
    %1622 = vrot.lane.b32.xlu0 %v1534, 16
    %v1623 = vpop.permute.xlu0 %1622
    %1624 = vrot.lane.b32.xlu0 %v1535, 16
    %v1625 = vpop.permute.xlu0 %1624
    %1626 = vrot.lane.b32.xlu0 %v1536, 16
    %v1627 = vpop.permute.xlu0 %1626
    %1628 = vrot.lane.b32.xlu0 %v1537, 16
    %v1629 = vpop.permute.xlu0 %1628
    %1630 = vrot.lane.b32.xlu0 %v1538, 16
    %v1631 = vpop.permute.xlu0 %1630
    %1632 = vrot.lane.b32.xlu0 %v1539, 16
    %v1633 = vpop.permute.xlu0 %1632
    %1634 = vrot.lane.b32.xlu0 %v1540, 16
    %v1635 = vpop.permute.xlu0 %1634
    %1636 = vrot.lane.b32.xlu0 %v1541, 16
    %v1637 = vpop.permute.xlu0 %1636
    %1686 = vrot.lane.b32.xlu0 %v1542, 32
    %v1687 = vpop.permute.xlu0 %1686
    %1688 = vrot.lane.b32.xlu0 %v1543, 32
    %v1689 = vpop.permute.xlu0 %1688
    %1690 = vrot.lane.b32.xlu0 %v1544, 32
    %v1691 = vpop.permute.xlu0 %1690
    %1692 = vrot.lane.b32.xlu0 %v1545, 32
    %v1693 = vpop.permute.xlu0 %1692
    %1694 = vrot.lane.b32.xlu0 %v1546, 32
    %v1695 = vpop.permute.xlu0 %1694
    %1696 = vrot.lane.b32.xlu0 %v1547, 32
    %v1697 = vpop.permute.xlu0 %1696
    %1698 = vrot.lane.b32.xlu0 %v1548, 32
    %v1699 = vpop.permute.xlu0 %1698
    %1700 = vrot.lane.b32.xlu0 %v1549, 32
    %v1701 = vpop.permute.xlu0 %1700
    %1702 = vrot.lane.b32.xlu0 %v1550, 32
    %v1703 = vpop.permute.xlu0 %1702
    %1704 = vrot.lane.b32.xlu0 %v1551, 32
    %v1705 = vpop.permute.xlu0 %1704
    %1706 = vrot.lane.b32.xlu0 %v1552, 32
    %v1707 = vpop.permute.xlu0 %1706
    %1708 = vrot.lane.b32.xlu0 %v1553, 32
    %v1709 = vpop.permute.xlu0 %1708
    %1710 = vrot.lane.b32.xlu0 %v1554, 32
    %v1711 = vpop.permute.xlu0 %1710
    %1712 = vrot.lane.b32.xlu0 %v1555, 32
    %v1713 = vpop.permute.xlu0 %1712
    %1714 = vrot.lane.b32.xlu0 %v1556, 32
    %v1715 = vpop.permute.xlu0 %1714
    %1716 = vrot.lane.b32.xlu0 %v1557, 32
    %v1717 = vpop.permute.xlu0 %1716
    %1718 = vrot.lane.b32.xlu0 %v1558, 32
    %v1719 = vpop.permute.xlu0 %1718
    %1720 = vrot.lane.b32.xlu0 %v1559, 32
    %v1721 = vpop.permute.xlu0 %1720
    %1722 = vrot.lane.b32.xlu0 %v1560, 32
    %v1723 = vpop.permute.xlu0 %1722
    %1724 = vrot.lane.b32.xlu0 %v1561, 32
    %v1725 = vpop.permute.xlu0 %1724
    %1726 = vrot.lane.b32.xlu0 %v1562, 32
    %v1727 = vpop.permute.xlu0 %1726
    %1728 = vrot.lane.b32.xlu0 %v1563, 32
    %v1729 = vpop.permute.xlu0 %1728
    %1730 = vrot.lane.b32.xlu0 %v1564, 32
    %v1731 = vpop.permute.xlu0 %1730
    %1732 = vrot.lane.b32.xlu0 %v1565, 32
    %v1733 = vpop.permute.xlu0 %1732
    %v1758 = vsel %vm40, %v1494, %v1591
    %v1759 = vsel %vm40, %v1495, %v1593
    %v1760 = vsel %vm40, %v1496, %v1595
    %v1761 = vsel %vm40, %v1497, %v1597
    %v1762 = vsel %vm40, %v1498, %v1599
    %v1763 = vsel %vm40, %v1499, %v1601
    %v1764 = vsel %vm40, %v1500, %v1603
    %v1765 = vsel %vm40, %v1501, %v1605
    %v1766 = vsel %vm40, %v1502, %v1607
    %v1767 = vsel %vm40, %v1503, %v1609
    %v1768 = vsel %vm40, %v1504, %v1611
    %v1769 = vsel %vm40, %v1505, %v1613
    %v1770 = vsel %vm40, %v1506, %v1615
    %v1771 = vsel %vm40, %v1507, %v1617
    %v1772 = vsel %vm40, %v1508, %v1619
    %v1773 = vsel %vm40, %v1509, %v1621
    %v1774 = vsel %vm40, %v1510, %v1623
    %v1775 = vsel %vm40, %v1511, %v1625
    %v1776 = vsel %vm40, %v1512, %v1627
    %v1777 = vsel %vm40, %v1513, %v1629
    %v1778 = vsel %vm40, %v1514, %v1631
    %v1779 = vsel %vm40, %v1515, %v1633
    %v1780 = vsel %vm40, %v1516, %v1635
    %v1781 = vsel %vm40, %v1517, %v1637
    %vm1782 = vcmask 261120
    %v1783 = vsel %vm1782, %v1758, %v1687
    %v1784 = vsel %vm1782, %v1759, %v1689
    %v1785 = vsel %vm1782, %v1760, %v1691
    %v1786 = vsel %vm1782, %v1761, %v1693
    %v1787 = vsel %vm1782, %v1762, %v1695
    %v1788 = vsel %vm1782, %v1763, %v1697
    %v1789 = vsel %vm1782, %v1764, %v1699
    %v1790 = vsel %vm1782, %v1765, %v1701
    %v1791 = vsel %vm1782, %v1766, %v1703
    %v1792 = vsel %vm1782, %v1767, %v1705
    %v1793 = vsel %vm1782, %v1768, %v1707
    %v1794 = vsel %vm1782, %v1769, %v1709
    %v1795 = vsel %vm1782, %v1770, %v1711
    %v1796 = vsel %vm1782, %v1771, %v1713
    %v1797 = vsel %vm1782, %v1772, %v1715
    %v1798 = vsel %vm1782, %v1773, %v1717
    %v1799 = vsel %vm1782, %v1774, %v1719
    %v1800 = vsel %vm1782, %v1775, %v1721
    %v1801 = vsel %vm1782, %v1776, %v1723
    %v1802 = vsel %vm1782, %v1777, %v1725
    %v1803 = vsel %vm1782, %v1778, %v1727
    %v1804 = vsel %vm1782, %v1779, %v1729
    %v1805 = vsel %vm1782, %v1780, %v1731
    %v1806 = vsel %vm1782, %v1781, %v1733
    %v1807 = vpack.c.bf16 %v1784, %v1783
    %v1808 = vpack.c.bf16 %v1786, %v1785
    %v1809 = vpack.c.bf16 %v1788, %v1787
    %v1810 = vpack.c.bf16 %v1790, %v1789
    %v1811 = vpack.c.bf16 %v1792, %v1791
    %v1812 = vpack.c.bf16 %v1794, %v1793
    %v1813 = vpack.c.bf16 %v1796, %v1795
    %v1814 = vpack.c.bf16 %v1798, %v1797
    %v1815 = vpack.c.bf16 %v1800, %v1799
    %v1816 = vpack.c.bf16 %v1802, %v1801
    %v1817 = vpack.c.bf16 %v1804, %v1803
    %v1818 = vpack.c.bf16 %v1806, %v1805
    %v1819 = vld [vmem:[%s3] sm:$0xf]
    %v1820 = vld [vmem:[%s3 + $0x4] sm:$0xf]
    %v1821 = vld [vmem:[%s3 + $0x8] sm:$0xf]
    %v1822 = vld [vmem:[%s3 + $0xc] sm:$0xf]
    %v1823 = vld [vmem:[%s3 + $0x10] sm:$0xf]
    %v1824 = vld [vmem:[%s3 + $0x14] sm:$0xf]
    %v1825 = vld [vmem:[%s4] sm:$0x1]
    %v1827 = vlaneseq
    %v1828 = vshrl.u32 %v1827, 7
    %v1829 = vsub.s32 0, %v1828
    %v1830 = vrot.slane %v1825, %v1829
    %v1838 = vunpack.c.l.b16 %v1819
    %v1839 = vunpack.c.l.b16 %v1820
    %v1840 = vunpack.c.l.b16 %v1821
    %v1841 = vunpack.c.l.b16 %v1822
    %v1842 = vunpack.c.l.b16 %v1823
    %v1843 = vunpack.c.l.b16 %v1824
    %v1844 = vpack.c.b16 %v1839, %v1838
    %v1845 = vpack.c.b16 %v1841, %v1840
    %v1846 = vpack.c.b16 %v1843, %v1842
    %vm1850 = vcmask 392192
    %v1852 = vsel %vm1850, %v1807, 0
    %v1855 = vsel %vm1850, %v1808, 0
    %v1858 = vsel %vm1850, %v1809, 0
    %v1861 = vsel %vm1850, %v1810, 0
    %v1864 = vsel %vm1850, %v1811, 0
    %v1867 = vsel %vm1850, %v1812, 0
    %v1870 = vsel %vm1850, %v1813, 0
    %v1873 = vsel %vm1850, %v1814, 0
    %v1876 = vsel %vm1850, %v1815, 0
    %v1879 = vsel %vm1850, %v1816, 0
    %v1882 = vsel %vm1850, %v1817, 0
    %v1885 = vsel %vm1850, %v1818, 0
    %1887 = vmatprep.subr.bf16.mxu0 0
    %1888 = vmatpush1.bf16.msra.mxu0 0
    %1889 = vmatprep.subr.bf16.mxu0 0
    %1890 = vmatpush1.bf16.msra.mxu0 0
    %1891 = vmatprep.subr.bf16.mxu0 0
    %1892 = vmatpush1.bf16.msra.mxu0 0
    %1893 = vmatprep.subr.bf16.mxu0 0
    %1894 = vmatpush1.bf16.msra.mxu0 0
    %1895 = vmatprep.subr.bf16.mxu0 0
    %1896 = vmatpush1.bf16.msra.mxu0 0
    %1897 = vmatprep.subr.bf16.mxu0 0
    %1898 = vmatpush1.bf16.msra.mxu0 %v1846
    %1899 = vmatprep.subr.bf16.mxu0 0
    %1900 = vmatpush1.bf16.msra.mxu0 %v1845
    %1901 = vmatprep.subr.bf16.mxu0 0
    %1902 = vmatpush1.bf16.msra.mxu0 %v1844
    %1903 = vmatprep.subr.bf16.mxu0 0
    %1904 = vmatpush2.bf16.msra.mxu0 0
    %1905 = vmatprep.subr.bf16.mxu0 0
    %1906 = vmatpush2.bf16.msra.mxu0 0
    %1907 = vmatprep.subr.bf16.mxu0 0
    %1908 = vmatpush2.bf16.msra.mxu0 0
    %1909 = vmatprep.subr.bf16.mxu0 0
    %1910 = vmatpush2.bf16.msra.mxu0 0
    %1911 = vmatprep.subr.bf16.mxu0 0
    %1912 = vmatpush2.bf16.msra.mxu0 0
    %1913 = vmatprep.subr.bf16.mxu0 0
    %1914 = vmatpush2.bf16.msra.mxu0 0
    %1915 = vmatprep.subr.bf16.mxu0 0
    %1916 = vmatpush2.bf16.msra.mxu0 0
    %1917 = vmatprep.subr.bf16.mxu0 0
    %1918 = vmatpush2.bf16.msra.mxu0 0
    %1919 = vmatprep.mubr.bf16.mxu0 0
    %1920 = vmatmul.mubr.bf16.gmra.mxu0 %v1852
    %v1921 = vpop.f32.mrf.mxu0
    %v1922 = vadd.f32 %v1830, %v1921
    %v1923 = vpop.f32.mrf.mxu0
    %v1924 = vpop.f32.mrf.mxu0
    %v1925 = vadd.f32 %v1830, %v1924
    %v1926 = vpop.f32.mrf.mxu0
    %1927 = vmatprep.mubr.bf16.mxu0 0
    %1928 = vmatmul.mubr.bf16.gmra.mxu0 %v1855
    %v1929 = vpop.f32.mrf.mxu0
    %v1930 = vadd.f32 %v1830, %v1929
    %v1931 = vpop.f32.mrf.mxu0
    %v1932 = vpop.f32.mrf.mxu0
    %v1933 = vadd.f32 %v1830, %v1932
    %v1934 = vpop.f32.mrf.mxu0
    %1935 = vmatprep.mubr.bf16.mxu0 0
    %1936 = vmatmul.mubr.bf16.gmra.mxu0 %v1858
    %v1937 = vpop.f32.mrf.mxu0
    %v1938 = vadd.f32 %v1830, %v1937
    %v1939 = vpop.f32.mrf.mxu0
    %v1940 = vpop.f32.mrf.mxu0
    %v1941 = vadd.f32 %v1830, %v1940
    %v1942 = vpop.f32.mrf.mxu0
    %1943 = vmatprep.mubr.bf16.mxu0 0
    %1944 = vmatmul.mubr.bf16.gmra.mxu0 %v1861
    %v1945 = vpop.f32.mrf.mxu0
    %v1946 = vadd.f32 %v1830, %v1945
    %v1947 = vpop.f32.mrf.mxu0
    %v1948 = vpop.f32.mrf.mxu0
    %v1949 = vadd.f32 %v1830, %v1948
    %v1950 = vpop.f32.mrf.mxu0
    %1951 = vmatprep.mubr.bf16.mxu0 0
    %1952 = vmatmul.mubr.bf16.gmra.mxu0 %v1864
    %v1953 = vpop.f32.mrf.mxu0
    %v1954 = vadd.f32 %v1830, %v1953
    %v1955 = vpop.f32.mrf.mxu0
    %v1956 = vpop.f32.mrf.mxu0
    %v1957 = vadd.f32 %v1830, %v1956
    %v1958 = vpop.f32.mrf.mxu0
    %1959 = vmatprep.mubr.bf16.mxu0 0
    %1960 = vmatmul.mubr.bf16.gmra.mxu0 %v1867
    %v1961 = vpop.f32.mrf.mxu0
    %v1962 = vadd.f32 %v1830, %v1961
    %v1963 = vpop.f32.mrf.mxu0
    %v1964 = vpop.f32.mrf.mxu0
    %v1965 = vadd.f32 %v1830, %v1964
    %v1966 = vpop.f32.mrf.mxu0
    %1967 = vmatprep.mubr.bf16.mxu0 0
    %1968 = vmatmul.mubr.bf16.gmra.mxu0 %v1870
    %v1969 = vpop.f32.mrf.mxu0
    %v1970 = vadd.f32 %v1830, %v1969
    %v1971 = vpop.f32.mrf.mxu0
    %v1972 = vpop.f32.mrf.mxu0
    %v1973 = vadd.f32 %v1830, %v1972
    %v1974 = vpop.f32.mrf.mxu0
    %1975 = vmatprep.mubr.bf16.mxu0 0
    %1976 = vmatmul.mubr.bf16.gmra.mxu0 %v1873
    %v1977 = vpop.f32.mrf.mxu0
    %v1978 = vadd.f32 %v1830, %v1977
    %v1979 = vpop.f32.mrf.mxu0
    %v1980 = vpop.f32.mrf.mxu0
    %v1981 = vadd.f32 %v1830, %v1980
    %v1982 = vpop.f32.mrf.mxu0
    %1983 = vmatprep.mubr.bf16.mxu0 0
    %1984 = vmatmul.mubr.bf16.gmra.mxu0 %v1876
    %v1985 = vpop.f32.mrf.mxu0
    %v1986 = vadd.f32 %v1830, %v1985
    %v1987 = vpop.f32.mrf.mxu0
    %v1988 = vpop.f32.mrf.mxu0
    %v1989 = vadd.f32 %v1830, %v1988
    %v1990 = vpop.f32.mrf.mxu0
    %1991 = vmatprep.mubr.bf16.mxu0 0
    %1992 = vmatmul.mubr.bf16.gmra.mxu0 %v1879
    %v1993 = vpop.f32.mrf.mxu0
    %v1994 = vadd.f32 %v1830, %v1993
    %v1995 = vpop.f32.mrf.mxu0
    %v1996 = vpop.f32.mrf.mxu0
    %v1997 = vadd.f32 %v1830, %v1996
    %v1998 = vpop.f32.mrf.mxu0
    %1999 = vmatprep.mubr.bf16.mxu0 0
    %2000 = vmatmul.mubr.bf16.gmra.mxu0 %v1882
    %v2001 = vpop.f32.mrf.mxu0
    %v2002 = vadd.f32 %v1830, %v2001
    %v2003 = vpop.f32.mrf.mxu0
    %v2004 = vpop.f32.mrf.mxu0
    %v2005 = vadd.f32 %v1830, %v2004
    %v2006 = vpop.f32.mrf.mxu0
    %2007 = vmatprep.mubr.bf16.mxu0 0
    %2008 = vmatmul.mubr.bf16.gmra.mxu0 %v1885
    %v2009 = vpop.f32.mrf.mxu0
    %v2010 = vadd.f32 %v1830, %v2009
    %v2011 = vpop.f32.mrf.mxu0
    %v2012 = vpop.f32.mrf.mxu0
    %v2013 = vadd.f32 %v1830, %v2012
    %v2014 = vpop.f32.mrf.mxu0
    %2015 = vdwg.mxu0
    %2016 = vst.msk [vmem:[#allocation4] sm:$0xff] %vm65, %v1922
    %2017 = vst.msk [vmem:[#allocation4 + $0x8] sm:$0xff] %vm65, %v1925
    %2018 = vst.msk [vmem:[#allocation4 + $0x10] sm:$0xff] %vm65, %v1930
    %2019 = vst.msk [vmem:[#allocation4 + $0x18] sm:$0xff] %vm65, %v1933
    %2020 = vst.msk [vmem:[#allocation4 + $0x20] sm:$0xff] %vm65, %v1938
    %2021 = vst.msk [vmem:[#allocation4 + $0x28] sm:$0xff] %vm65, %v1941
    %2022 = vst.msk [vmem:[#allocation4 + $0x30] sm:$0xff] %vm65, %v1946
    %2023 = vst.msk [vmem:[#allocation4 + $0x38] sm:$0xff] %vm65, %v1949
    %2024 = vst.msk [vmem:[#allocation4 + $0x40] sm:$0xff] %vm65, %v1954
    %2025 = vst.msk [vmem:[#allocation4 + $0x48] sm:$0xff] %vm65, %v1957
    %2026 = vst.msk [vmem:[#allocation4 + $0x50] sm:$0xff] %vm65, %v1962
    %2027 = vst.msk [vmem:[#allocation4 + $0x58] sm:$0xff] %vm65, %v1965
    %2028 = vst.msk [vmem:[#allocation4 + $0x60] sm:$0xff] %vm65, %v1970
    %2029 = vst.msk [vmem:[#allocation4 + $0x68] sm:$0xff] %vm65, %v1973
    %2030 = vst.msk [vmem:[#allocation4 + $0x70] sm:$0xff] %vm65, %v1978
    %2031 = vst.msk [vmem:[#allocation4 + $0x78] sm:$0xff] %vm65, %v1981
    %2032 = vst.msk [vmem:[#allocation4 + $0x80] sm:$0xff] %vm65, %v1986
    %2033 = vst.msk [vmem:[#allocation4 + $0x88] sm:$0xff] %vm65, %v1989
    %2034 = vst.msk [vmem:[#allocation4 + $0x90] sm:$0xff] %vm65, %v1994
    %2035 = vst.msk [vmem:[#allocation4 + $0x98] sm:$0xff] %vm65, %v1997
    %2036 = vst.msk [vmem:[#allocation4 + $0xa0] sm:$0xff] %vm65, %v2002
    %2037 = vst.msk [vmem:[#allocation4 + $0xa8] sm:$0xff] %vm65, %v2005
    %2038 = vst.msk [vmem:[#allocation4 + $0xb0] sm:$0xff] %vm65, %v2010
    %vm2039 = vcmask 521216
    %2040 = vst.msk [vmem:[#allocation4 + $0xb8] sm:$0x3f] %vm2039, %v2013
    %v2041 = vld [vmem:[#allocation4] ss:$2 sm:$0xff]
    %s2042 = scalar_lea.vmem [#allocation4], 16
    %v2043 = vld [vmem:[%s2042] ss:$2 sm:$0xff]
    %s2044 = scalar_lea.vmem [#allocation4], 32
    %v2045 = vld [vmem:[%s2044] ss:$2 sm:$0xff]
    %s2046 = scalar_lea.vmem [#allocation4], 48
    %v2047 = vld [vmem:[%s2046] ss:$2 sm:$0xff]
    %s2048 = scalar_lea.vmem [#allocation4], 64
    %v2049 = vld [vmem:[%s2048] ss:$2 sm:$0xff]
    %s2050 = scalar_lea.vmem [#allocation4], 80
    %v2051 = vld [vmem:[%s2050] ss:$2 sm:$0x3f]
    %s2052 = scalar_lea.vmem [#allocation4], 1
    %v2053 = vld [vmem:[%s2052] ss:$2 sm:$0xff]
    %s2054 = scalar_lea.vmem [#allocation4], 17
    %v2055 = vld [vmem:[%s2054] ss:$2 sm:$0xff]
    %s2056 = scalar_lea.vmem [#allocation4], 33
    %v2057 = vld [vmem:[%s2056] ss:$2 sm:$0xff]
    %s2058 = scalar_lea.vmem [#allocation4], 49
    %v2059 = vld [vmem:[%s2058] ss:$2 sm:$0xff]
    %s2060 = scalar_lea.vmem [#allocation4], 65
    %v2061 = vld [vmem:[%s2060] ss:$2 sm:$0xff]
    %s2062 = scalar_lea.vmem [#allocation4], 81
    %v2063 = vld [vmem:[%s2062] ss:$2 sm:$0x3f]
    %v2064 = vmax.f32 %v2041, %v2053
    %v2065 = vmax.f32 %v2043, %v2055
    %v2066 = vmax.f32 %v2045, %v2057
    %v2067 = vmax.f32 %v2047, %v2059
    %v2068 = vmax.f32 %v2049, %v2061
    %v2069 = vmax.f32 %v2051, %v2063
    %2070 = vst.msk [vmem:[#allocation5 + $0x1] sm:$0xff] %vm65, %v2064
    %2071 = vst.msk [vmem:[#allocation5 + $0x9] sm:$0xff] %vm65, %v2065
    %2072 = vst.msk [vmem:[#allocation5 + $0x11] sm:$0xff] %vm65, %v2066
    %2073 = vst.msk [vmem:[#allocation5 + $0x19] sm:$0xff] %vm65, %v2067
    %2074 = vst.msk [vmem:[#allocation5 + $0x21] sm:$0xff] %vm65, %v2068
    %2075 = vst.msk [vmem:[#allocation5 + $0x29] sm:$0x3f] %vm2039, %v2069
    %s2076 = scalar_lea.vmem [#allocation4], 96
    %v2077 = vld [vmem:[%s2076] ss:$2 sm:$0xff]
    %s2078 = scalar_lea.vmem [#allocation4], 112
    %v2079 = vld [vmem:[%s2078] ss:$2 sm:$0xff]
    %s2080 = scalar_lea.vmem [#allocation4], 128
    %v2081 = vld [vmem:[%s2080] ss:$2 sm:$0xff]
    %s2082 = scalar_lea.vmem [#allocation4], 144
    %v2083 = vld [vmem:[%s2082] ss:$2 sm:$0xff]
    %s2084 = scalar_lea.vmem [#allocation4], 160
    %v2085 = vld [vmem:[%s2084] ss:$2 sm:$0xff]
    %s2086 = scalar_lea.vmem [#allocation4], 176
    %v2087 = vld [vmem:[%s2086] ss:$2 sm:$0x3f]
    %s2088 = scalar_lea.vmem [#allocation4], 97
    %v2089 = vld [vmem:[%s2088] ss:$2 sm:$0xff]
    %s2090 = scalar_lea.vmem [#allocation4], 113
    %v2091 = vld [vmem:[%s2090] ss:$2 sm:$0xff]
    %s2092 = scalar_lea.vmem [#allocation4], 129
    %v2093 = vld [vmem:[%s2092] ss:$2 sm:$0xff]
    %s2094 = scalar_lea.vmem [#allocation4], 145
    %v2095 = vld [vmem:[%s2094] ss:$2 sm:$0xff]
    %s2096 = scalar_lea.vmem [#allocation4], 161
    %v2097 = vld [vmem:[%s2096] ss:$2 sm:$0xff]
    %s2098 = scalar_lea.vmem [#allocation4], 177
    %v2099 = vld [vmem:[%s2098] ss:$2 sm:$0x3f]
    %v2100 = vmax.f32 %v2077, %v2089
    %v2101 = vmax.f32 %v2079, %v2091
    %v2102 = vmax.f32 %v2081, %v2093
    %v2103 = vmax.f32 %v2083, %v2095
    %v2104 = vmax.f32 %v2085, %v2097
    %v2105 = vmax.f32 %v2087, %v2099
    %2106 = vst.msk [vmem:[#allocation5 + $0x31] sm:$0xff] %vm65, %v2100
    %2107 = vst.msk [vmem:[#allocation5 + $0x39] sm:$0xff] %vm65, %v2101
    %2108 = vst.msk [vmem:[#allocation5 + $0x41] sm:$0xff] %vm65, %v2102
    %2109 = vst.msk [vmem:[#allocation5 + $0x49] sm:$0xff] %vm65, %v2103
    %2110 = vst.msk [vmem:[#allocation5 + $0x51] sm:$0xff] %vm65, %v2104
    %2111 = vst.msk [vmem:[#allocation5 + $0x59] sm:$0x3f] %vm2039, %v2105
    %v2112 = vld [vmem:[#allocation5] sm:$0xff]
    %v2113 = vld [vmem:[#allocation5 + $0x8] sm:$0xff]
    %v2114 = vld [vmem:[#allocation5 + $0x10] sm:$0xff]
    %v2115 = vld [vmem:[#allocation5 + $0x18] sm:$0xff]
    %v2116 = vld [vmem:[#allocation5 + $0x20] sm:$0xff]
    %v2117 = vld [vmem:[#allocation5 + $0x28] sm:$0xff]
    %v2118 = vld [vmem:[#allocation5 + $0x30] sm:$0xff]
    %v2119 = vld [vmem:[#allocation5 + $0x38] sm:$0xff]
    %v2120 = vld [vmem:[#allocation5 + $0x40] sm:$0xff]
    %v2121 = vld [vmem:[#allocation5 + $0x48] sm:$0xff]
    %v2122 = vld [vmem:[#allocation5 + $0x50] sm:$0xff]
    %v2123 = vld [vmem:[#allocation5 + $0x58] sm:$0x3f]
    %v2124 = vld [vmem:[#allocation5 + $0x1] sm:$0xff]
    %v2125 = vld [vmem:[#allocation5 + $0x9] sm:$0xff]
    %v2126 = vld [vmem:[#allocation5 + $0x11] sm:$0xff]
    %v2127 = vld [vmem:[#allocation5 + $0x19] sm:$0xff]
    %v2128 = vld [vmem:[#allocation5 + $0x21] sm:$0xff]
    %v2129 = vld [vmem:[#allocation5 + $0x29] sm:$0xff]
    %v2130 = vld [vmem:[#allocation5 + $0x31] sm:$0xff]
    %v2131 = vld [vmem:[#allocation5 + $0x39] sm:$0xff]
    %v2132 = vld [vmem:[#allocation5 + $0x41] sm:$0xff]
    %v2133 = vld [vmem:[#allocation5 + $0x49] sm:$0xff]
    %v2134 = vld [vmem:[#allocation5 + $0x51] sm:$0xff]
    %v2135 = vld [vmem:[#allocation5 + $0x59] sm:$0x3f]
    %v2136 = vld [vmem:[#allocation5 + $0x2] sm:$0xff]
    %v2137 = vld [vmem:[#allocation5 + $0xa] sm:$0xff]
    %v2138 = vld [vmem:[#allocation5 + $0x12] sm:$0xff]
    %v2139 = vld [vmem:[#allocation5 + $0x1a] sm:$0xff]
    %v2140 = vld [vmem:[#allocation5 + $0x22] sm:$0xff]
    %v2141 = vld [vmem:[#allocation5 + $0x2a] sm:$0xff]
    %v2142 = vld [vmem:[#allocation5 + $0x32] sm:$0xff]
    %v2143 = vld [vmem:[#allocation5 + $0x3a] sm:$0xff]
    %v2144 = vld [vmem:[#allocation5 + $0x42] sm:$0xff]
    %v2145 = vld [vmem:[#allocation5 + $0x4a] sm:$0xff]
    %v2146 = vld [vmem:[#allocation5 + $0x52] sm:$0xff]
    %v2147 = vld [vmem:[#allocation5 + $0x5a] sm:$0x3f]
    %2160 = vrot.lane.b32.xlu0 %v2124, 64
    %v2161 = vpop.permute.xlu0 %2160
    %2162 = vrot.lane.b32.xlu0 %v2125, 64
    %v2163 = vpop.permute.xlu0 %2162
    %2164 = vrot.lane.b32.xlu0 %v2126, 64
    %v2165 = vpop.permute.xlu0 %2164
    %2166 = vrot.lane.b32.xlu0 %v2127, 64
    %v2167 = vpop.permute.xlu0 %2166
    %2168 = vrot.lane.b32.xlu0 %v2128, 64
    %v2169 = vpop.permute.xlu0 %2168
    %2170 = vrot.lane.b32.xlu0 %v2129, 64
    %v2171 = vpop.permute.xlu0 %2170
    %2172 = vrot.lane.b32.xlu0 %v2130, 64
    %v2173 = vpop.permute.xlu0 %2172
    %2174 = vrot.lane.b32.xlu0 %v2131, 64
    %v2175 = vpop.permute.xlu0 %2174
    %2176 = vrot.lane.b32.xlu0 %v2132, 64
    %v2177 = vpop.permute.xlu0 %2176
    %2178 = vrot.lane.b32.xlu0 %v2133, 64
    %v2179 = vpop.permute.xlu0 %2178
    %2180 = vrot.lane.b32.xlu0 %v2134, 64
    %v2181 = vpop.permute.xlu0 %2180
    %2182 = vrot.lane.b32.xlu0 %v2135, 64
    %v2183 = vpop.permute.xlu0 %2182
    %v2196 = vsel %vm65, %v2112, %v2161
    %v2197 = vsel %vm65, %v2113, %v2163
    %v2198 = vsel %vm65, %v2114, %v2165
    %v2199 = vsel %vm65, %v2115, %v2167
    %v2200 = vsel %vm65, %v2116, %v2169
    %v2201 = vsel %vm65, %v2117, %v2171
    %v2202 = vsel %vm65, %v2118, %v2173
    %v2203 = vsel %vm65, %v2119, %v2175
    %v2204 = vsel %vm65, %v2120, %v2177
    %v2205 = vsel %vm65, %v2121, %v2179
    %v2206 = vsel %vm65, %v2122, %v2181
    %v2207 = vsel %vm65, %v2123, %v2183
    %v2208 = vpack.c.bf16 %v2197, %v2196
    %v2209 = vpack.c.bf16 %v2137, %v2136
    %v2210 = vpack.c.bf16 %v2199, %v2198
    %v2211 = vpack.c.bf16 %v2139, %v2138
    %v2212 = vpack.c.bf16 %v2201, %v2200
    %v2213 = vpack.c.bf16 %v2141, %v2140
    %v2214 = vpack.c.bf16 %v2203, %v2202
    %v2215 = vpack.c.bf16 %v2143, %v2142
    %v2216 = vpack.c.bf16 %v2205, %v2204
    %v2217 = vpack.c.bf16 %v2145, %v2144
    %v2218 = vpack.c.bf16 %v2207, %v2206
    %v2219 = vpack.c.bf16 %v2147, %v2146
    %v2220 = vld [vmem:[%s5] sm:$0xf]
    %v2221 = vld [vmem:[%s5 + $0x4] sm:$0xf]
    %v2222 = vld [vmem:[%s5 + $0x8] sm:$0xf]
    %v2223 = vld [vmem:[%s5 + $0xc] sm:$0xf]
    %v2224 = vld [vmem:[%s5 + $0x10] sm:$0xf]
    %v2225 = vld [vmem:[%s5 + $0x14] sm:$0xf]
    %v2226 = vld [vmem:[%s5 + $0x18] sm:$0xf]
    %v2227 = vld [vmem:[%s5 + $0x1c] sm:$0xf]
    %v2228 = vld [vmem:[%s5 + $0x20] sm:$0xf]
    %v2229 = vld [vmem:[%s5 + $0x24] sm:$0xf]
    %v2230 = vld [vmem:[%s5 + $0x28] sm:$0xf]
    %v2231 = vld [vmem:[%s5 + $0x2c] sm:$0xf]
    %v2232 = vld [vmem:[%s5 + $0x30] sm:$0xf]
    %v2233 = vld [vmem:[%s5 + $0x34] sm:$0xf]
    %v2234 = vld [vmem:[%s5 + $0x38] sm:$0xf]
    %v2235 = vld [vmem:[%s5 + $0x3c] sm:$0xf]
    %v2236 = vld [vmem:[%s5 + $0x40] sm:$0xf]
    %v2237 = vld [vmem:[%s5 + $0x44] sm:$0xf]
    %v2238 = vld [vmem:[%s5 + $0x48] sm:$0xf]
    %v2239 = vld [vmem:[%s5 + $0x4c] sm:$0xf]
    %v2240 = vld [vmem:[%s5 + $0x50] sm:$0xf]
    %v2241 = vld [vmem:[%s5 + $0x54] sm:$0xf]
    %v2242 = vld [vmem:[%s5 + $0x58] sm:$0xf]
    %v2243 = vld [vmem:[%s5 + $0x5c] sm:$0xf]
    %v2244 = vld [vmem:[%s6] sm:$0x1]
    %v2246 = vlaneseq
    %v2247 = vshrl.u32 %v2246, 7
    %v2248 = vsub.s32 0, %v2247
    %v2249 = vrot.slane %v2244, %v2248
    %v2275 = vunpack.c.l.b16 %v2220
    %v2276 = vunpack.c.l.b16 %v2221
    %v2277 = vunpack.c.l.b16 %v2222
    %v2278 = vunpack.c.l.b16 %v2223
    %v2279 = vunpack.c.l.b16 %v2224
    %v2280 = vunpack.c.l.b16 %v2225
    %v2281 = vunpack.c.l.b16 %v2226
    %v2282 = vunpack.c.l.b16 %v2227
    %v2283 = vunpack.c.l.b16 %v2228
    %v2284 = vunpack.c.l.b16 %v2229
    %v2285 = vunpack.c.l.b16 %v2230
    %v2286 = vunpack.c.l.b16 %v2231
    %v2287 = vunpack.c.l.b16 %v2232
    %v2288 = vunpack.c.l.b16 %v2233
    %v2289 = vunpack.c.l.b16 %v2234
    %v2290 = vunpack.c.l.b16 %v2235
    %v2291 = vunpack.c.l.b16 %v2236
    %v2292 = vunpack.c.l.b16 %v2237
    %v2293 = vunpack.c.l.b16 %v2238
    %v2294 = vunpack.c.l.b16 %v2239
    %v2295 = vunpack.c.l.b16 %v2240
    %v2296 = vunpack.c.l.b16 %v2241
    %v2297 = vunpack.c.l.b16 %v2242
    %v2298 = vunpack.c.l.b16 %v2243
    %v2299 = vpack.c.b16 %v2276, %v2275
    %v2300 = vpack.c.b16 %v2278, %v2277
    %v2301 = vpack.c.b16 %v2280, %v2279
    %v2302 = vpack.c.b16 %v2282, %v2281
    %v2303 = vpack.c.b16 %v2284, %v2283
    %v2304 = vpack.c.b16 %v2286, %v2285
    %v2305 = vpack.c.b16 %v2288, %v2287
    %v2306 = vpack.c.b16 %v2290, %v2289
    %v2307 = vpack.c.b16 %v2292, %v2291
    %v2308 = vpack.c.b16 %v2294, %v2293
    %v2309 = vpack.c.b16 %v2296, %v2295
    %v2310 = vpack.c.b16 %v2298, %v2297
    %v2324 = vsel %vm65, %v2209, 0
    %v2327 = vsel %vm65, %v2211, 0
    %v2330 = vsel %vm65, %v2213, 0
    %v2333 = vsel %vm65, %v2215, 0
    %v2336 = vsel %vm65, %v2217, 0
    %v2339 = vsel %vm65, %v2219, 0
    %2341 = vmatprep.subr.bf16.mxu0 0
    %2342 = vmatpush1.bf16.msra.mxu0 %v2306
    %2343 = vmatprep.subr.bf16.mxu0 0
    %2344 = vmatpush1.bf16.msra.mxu0 %v2305
    %2345 = vmatprep.subr.bf16.mxu0 0
    %2346 = vmatpush1.bf16.msra.mxu0 %v2304
    %2347 = vmatprep.subr.bf16.mxu0 0
    %2348 = vmatpush1.bf16.msra.mxu0 %v2303
    %2349 = vmatprep.subr.bf16.mxu0 0
    %2350 = vmatpush1.bf16.msra.mxu0 %v2302
    %2351 = vmatprep.subr.bf16.mxu0 0
    %2352 = vmatpush1.bf16.msra.mxu0 %v2301
    %2353 = vmatprep.subr.bf16.mxu0 0
    %2354 = vmatpush1.bf16.msra.mxu0 %v2300
    %2355 = vmatprep.subr.bf16.mxu0 0
    %2356 = vmatpush1.bf16.msra.mxu0 %v2299
    %2357 = vmatprep.subr.bf16.mxu0 0
    %2358 = vmatpush2.bf16.msra.mxu0 0
    %2359 = vmatprep.subr.bf16.mxu0 0
    %2360 = vmatpush2.bf16.msra.mxu0 0
    %2361 = vmatprep.subr.bf16.mxu0 0
    %2362 = vmatpush2.bf16.msra.mxu0 0
    %2363 = vmatprep.subr.bf16.mxu0 0
    %2364 = vmatpush2.bf16.msra.mxu0 0
    %2365 = vmatprep.subr.bf16.mxu0 0
    %2366 = vmatpush2.bf16.msra.mxu0 %v2310
    %2367 = vmatprep.subr.bf16.mxu0 0
    %2368 = vmatpush2.bf16.msra.mxu0 %v2309
    %2369 = vmatprep.subr.bf16.mxu0 0
    %2370 = vmatpush2.bf16.msra.mxu0 %v2308
    %2371 = vmatprep.subr.bf16.mxu0 0
    %2372 = vmatpush2.bf16.msra.mxu0 %v2307
    %2373 = vmatprep.mubr.bf16.mxu0 %v2324
    %2374 = vmatmul.mubr.bf16.gmra.mxu0 %v2208
    %v2375 = vpop.f32.mrf.mxu0
    %v2376 = vadd.f32 %v2249, %v2375
    %v2377 = vpop.f32.mrf.mxu0
    %v2378 = vpop.f32.mrf.mxu0
    %v2379 = vadd.f32 %v2249, %v2378
    %v2380 = vpop.f32.mrf.mxu0
    %2381 = vmatprep.mubr.bf16.mxu0 %v2327
    %2382 = vmatmul.mubr.bf16.gmra.mxu0 %v2210
    %v2383 = vpop.f32.mrf.mxu0
    %v2384 = vadd.f32 %v2249, %v2383
    %v2385 = vpop.f32.mrf.mxu0
    %v2386 = vpop.f32.mrf.mxu0
    %v2387 = vadd.f32 %v2249, %v2386
    %v2388 = vpop.f32.mrf.mxu0
    %2389 = vmatprep.mubr.bf16.mxu0 %v2330
    %2390 = vmatmul.mubr.bf16.gmra.mxu0 %v2212
    %v2391 = vpop.f32.mrf.mxu0
    %v2392 = vadd.f32 %v2249, %v2391
    %v2393 = vpop.f32.mrf.mxu0
    %v2394 = vpop.f32.mrf.mxu0
    %v2395 = vadd.f32 %v2249, %v2394
    %v2396 = vpop.f32.mrf.mxu0
    %2397 = vmatprep.mubr.bf16.mxu0 %v2333
    %2398 = vmatmul.mubr.bf16.gmra.mxu0 %v2214
    %v2399 = vpop.f32.mrf.mxu0
    %v2400 = vadd.f32 %v2249, %v2399
    %v2401 = vpop.f32.mrf.mxu0
    %v2402 = vpop.f32.mrf.mxu0
    %v2403 = vadd.f32 %v2249, %v2402
    %v2404 = vpop.f32.mrf.mxu0
    %2405 = vmatprep.mubr.bf16.mxu0 %v2336
    %2406 = vmatmul.mubr.bf16.gmra.mxu0 %v2216
    %v2407 = vpop.f32.mrf.mxu0
    %v2408 = vadd.f32 %v2249, %v2407
    %v2409 = vpop.f32.mrf.mxu0
    %v2410 = vpop.f32.mrf.mxu0
    %v2411 = vadd.f32 %v2249, %v2410
    %v2412 = vpop.f32.mrf.mxu0
    %2413 = vmatprep.mubr.bf16.mxu0 %v2339
    %2414 = vmatmul.mubr.bf16.gmra.mxu0 %v2218
    %v2415 = vpop.f32.mrf.mxu0
    %v2416 = vadd.f32 %v2249, %v2415
    %v2417 = vpop.f32.mrf.mxu0
    %v2418 = vpop.f32.mrf.mxu0
    %v2419 = vadd.f32 %v2249, %v2418
    %v2420 = vpop.f32.mrf.mxu0
    %2421 = vdwg.mxu0
    %2422 = vst [vmem:[#allocation6] sm:$0xff] %v2376
    %2423 = vst [vmem:[#allocation6 + $0x8] sm:$0xff] %v2379
    %2424 = vst [vmem:[#allocation6 + $0x10] sm:$0xff] %v2384
    %2425 = vst [vmem:[#allocation6 + $0x18] sm:$0xff] %v2387
    %2426 = vst [vmem:[#allocation6 + $0x20] sm:$0xff] %v2392
    %2427 = vst [vmem:[#allocation6 + $0x28] sm:$0xff] %v2395
    %2428 = vst [vmem:[#allocation6 + $0x30] sm:$0xff] %v2400
    %2429 = vst [vmem:[#allocation6 + $0x38] sm:$0xff] %v2403
    %2430 = vst [vmem:[#allocation6 + $0x40] sm:$0xff] %v2408
    %2431 = vst [vmem:[#allocation6 + $0x48] sm:$0xff] %v2411
    %2432 = vst [vmem:[#allocation6 + $0x50] sm:$0xff] %v2416
    %2433 = vst [vmem:[#allocation6 + $0x58] sm:$0x3f] %v2419
    %v2434 = vld [vmem:[#allocation6] ss:$48 sm:$0x3]
    %s2435 = scalar_lea.vmem [#allocation6], 1
    %v2436 = vld [vmem:[%s2435] ss:$48 sm:$0x3]
    %v2437 = vmax.f32 %v2434, %v2436
    %v2438 = vpack.c.bf16 %v2437, %v2437
    %2439 = vst [vmem:[#allocation7] sm:$0x1] %v2438
    %s2440 = scalar_lea.vmem [#allocation6], 2
    %v2441 = vld [vmem:[%s2440] ss:$48 sm:$0x3]
    %s2442 = scalar_lea.vmem [#allocation6], 3
    %v2443 = vld [vmem:[%s2442] ss:$48 sm:$0x3]
    %v2444 = vmax.f32 %v2441, %v2443
    %v2445 = vpack.c.bf16 %v2444, %v2444
    %2446 = vst [vmem:[#allocation7 + $0x1] sm:$0x1] %v2445
    %s2447 = scalar_lea.vmem [#allocation6], 4
    %v2448 = vld [vmem:[%s2447] ss:$48 sm:$0x3]
    %s2449 = scalar_lea.vmem [#allocation6], 5
    %v2450 = vld [vmem:[%s2449] ss:$48 sm:$0x3]
    %v2451 = vmax.f32 %v2448, %v2450
    %v2452 = vpack.c.bf16 %v2451, %v2451
    %2453 = vst [vmem:[#allocation7 + $0x2] sm:$0x1] %v2452
    %s2454 = scalar_lea.vmem [#allocation6], 6
    %v2455 = vld [vmem:[%s2454] ss:$48 sm:$0x3]
    %s2456 = scalar_lea.vmem [#allocation6], 7
    %v2457 = vld [vmem:[%s2456] ss:$48 sm:$0x3]
    %v2458 = vmax.f32 %v2455, %v2457
    %v2459 = vpack.c.bf16 %v2458, %v2458
    %2460 = vst [vmem:[#allocation7 + $0x3] sm:$0x1] %v2459
    %s2461 = scalar_lea.vmem [#allocation6], 8
    %v2462 = vld [vmem:[%s2461] ss:$48 sm:$0x3]
    %s2463 = scalar_lea.vmem [#allocation6], 9
    %v2464 = vld [vmem:[%s2463] ss:$48 sm:$0x3]
    %v2465 = vmax.f32 %v2462, %v2464
    %v2466 = vpack.c.bf16 %v2465, %v2465
    %2467 = vst [vmem:[#allocation7 + $0x4] sm:$0x1] %v2466
    %s2468 = scalar_lea.vmem [#allocation6], 10
    %v2469 = vld [vmem:[%s2468] ss:$48 sm:$0x3]
    %s2470 = scalar_lea.vmem [#allocation6], 11
    %v2471 = vld [vmem:[%s2470] ss:$48 sm:$0x3]
    %v2472 = vmax.f32 %v2469, %v2471
    %v2473 = vpack.c.bf16 %v2472, %v2472
    %2474 = vst [vmem:[#allocation7 + $0x5] sm:$0x1] %v2473
    %s2475 = scalar_lea.vmem [#allocation6], 12
    %v2476 = vld [vmem:[%s2475] ss:$48 sm:$0x3]
    %s2477 = scalar_lea.vmem [#allocation6], 13
    %v2478 = vld [vmem:[%s2477] ss:$48 sm:$0x3]
    %v2479 = vmax.f32 %v2476, %v2478
    %v2480 = vpack.c.bf16 %v2479, %v2479
    %2481 = vst [vmem:[#allocation7 + $0x6] sm:$0x1] %v2480
    %s2482 = scalar_lea.vmem [#allocation6], 14
    %v2483 = vld [vmem:[%s2482] ss:$48 sm:$0x3]
    %s2484 = scalar_lea.vmem [#allocation6], 15
    %v2485 = vld [vmem:[%s2484] ss:$48 sm:$0x3]
    %v2486 = vmax.f32 %v2483, %v2485
    %v2487 = vpack.c.bf16 %v2486, %v2486
    %2488 = vst [vmem:[#allocation7 + $0x7] sm:$0x1] %v2487
    %s2489 = scalar_lea.vmem [#allocation6], 16
    %v2490 = vld [vmem:[%s2489] ss:$48 sm:$0x3]
    %s2491 = scalar_lea.vmem [#allocation6], 17
    %v2492 = vld [vmem:[%s2491] ss:$48 sm:$0x3]
    %v2493 = vmax.f32 %v2490, %v2492
    %v2494 = vpack.c.bf16 %v2493, %v2493
    %2495 = vst [vmem:[#allocation7 + $0x8] sm:$0x1] %v2494
    %s2496 = scalar_lea.vmem [#allocation6], 18
    %v2497 = vld [vmem:[%s2496] ss:$48 sm:$0x3]
    %s2498 = scalar_lea.vmem [#allocation6], 19
    %v2499 = vld [vmem:[%s2498] ss:$48 sm:$0x3]
    %v2500 = vmax.f32 %v2497, %v2499
    %v2501 = vpack.c.bf16 %v2500, %v2500
    %2502 = vst [vmem:[#allocation7 + $0x9] sm:$0x1] %v2501
    %s2503 = scalar_lea.vmem [#allocation6], 20
    %v2504 = vld [vmem:[%s2503] ss:$48 sm:$0x3]
    %s2505 = scalar_lea.vmem [#allocation6], 21
    %v2506 = vld [vmem:[%s2505] ss:$48 sm:$0x3]
    %v2507 = vmax.f32 %v2504, %v2506
    %v2508 = vpack.c.bf16 %v2507, %v2507
    %2509 = vst [vmem:[#allocation7 + $0xa] sm:$0x1] %v2508
    %s2510 = scalar_lea.vmem [#allocation6], 22
    %v2511 = vld [vmem:[%s2510] ss:$48 sm:$0x3]
    %s2512 = scalar_lea.vmem [#allocation6], 23
    %v2513 = vld [vmem:[%s2512] ss:$48 sm:$0x3]
    %v2514 = vmax.f32 %v2511, %v2513
    %v2515 = vpack.c.bf16 %v2514, %v2514
    %2516 = vst [vmem:[#allocation7 + $0xb] sm:$0x1] %v2515
    %s2517 = scalar_lea.vmem [#allocation6], 24
    %v2518 = vld [vmem:[%s2517] ss:$48 sm:$0x3]
    %s2519 = scalar_lea.vmem [#allocation6], 25
    %v2520 = vld [vmem:[%s2519] ss:$48 sm:$0x3]
    %v2521 = vmax.f32 %v2518, %v2520
    %v2522 = vpack.c.bf16 %v2521, %v2521
    %2523 = vst [vmem:[#allocation7 + $0xc] sm:$0x1] %v2522
    %s2524 = scalar_lea.vmem [#allocation6], 26
    %v2525 = vld [vmem:[%s2524] ss:$48 sm:$0x3]
    %s2526 = scalar_lea.vmem [#allocation6], 27
    %v2527 = vld [vmem:[%s2526] ss:$48 sm:$0x3]
    %v2528 = vmax.f32 %v2525, %v2527
    %v2529 = vpack.c.bf16 %v2528, %v2528
    %2530 = vst [vmem:[#allocation7 + $0xd] sm:$0x1] %v2529
    %s2531 = scalar_lea.vmem [#allocation6], 28
    %v2532 = vld [vmem:[%s2531] ss:$48 sm:$0x3]
    %s2533 = scalar_lea.vmem [#allocation6], 29
    %v2534 = vld [vmem:[%s2533] ss:$48 sm:$0x3]
    %v2535 = vmax.f32 %v2532, %v2534
    %v2536 = vpack.c.bf16 %v2535, %v2535
    %2537 = vst [vmem:[#allocation7 + $0xe] sm:$0x1] %v2536
    %s2538 = scalar_lea.vmem [#allocation6], 30
    %v2539 = vld [vmem:[%s2538] ss:$48 sm:$0x3]
    %s2540 = scalar_lea.vmem [#allocation6], 31
    %v2541 = vld [vmem:[%s2540] ss:$48 sm:$0x3]
    %v2542 = vmax.f32 %v2539, %v2541
    %v2543 = vpack.c.bf16 %v2542, %v2542
    %2544 = vst [vmem:[#allocation7 + $0xf] sm:$0x1] %v2543
    %s2545 = scalar_lea.vmem [#allocation6], 32
    %v2546 = vld [vmem:[%s2545] ss:$48 sm:$0x3]
    %s2547 = scalar_lea.vmem [#allocation6], 33
    %v2548 = vld [vmem:[%s2547] ss:$48 sm:$0x3]
    %v2549 = vmax.f32 %v2546, %v2548
    %v2550 = vpack.c.bf16 %v2549, %v2549
    %2551 = vst [vmem:[#allocation7 + $0x10] sm:$0x1] %v2550
    %s2552 = scalar_lea.vmem [#allocation6], 34
    %v2553 = vld [vmem:[%s2552] ss:$48 sm:$0x3]
    %s2554 = scalar_lea.vmem [#allocation6], 35
    %v2555 = vld [vmem:[%s2554] ss:$48 sm:$0x3]
    %v2556 = vmax.f32 %v2553, %v2555
    %v2557 = vpack.c.bf16 %v2556, %v2556
    %2558 = vst [vmem:[#allocation7 + $0x11] sm:$0x1] %v2557
    %s2559 = scalar_lea.vmem [#allocation6], 36
    %v2560 = vld [vmem:[%s2559] ss:$48 sm:$0x3]
    %s2561 = scalar_lea.vmem [#allocation6], 37
    %v2562 = vld [vmem:[%s2561] ss:$48 sm:$0x3]
    %v2563 = vmax.f32 %v2560, %v2562
    %v2564 = vpack.c.bf16 %v2563, %v2563
    %2565 = vst [vmem:[#allocation7 + $0x12] sm:$0x1] %v2564
    %s2566 = scalar_lea.vmem [#allocation6], 38
    %v2567 = vld [vmem:[%s2566] ss:$48 sm:$0x3]
    %s2568 = scalar_lea.vmem [#allocation6], 39
    %v2569 = vld [vmem:[%s2568] ss:$48 sm:$0x3]
    %v2570 = vmax.f32 %v2567, %v2569
    %v2571 = vpack.c.bf16 %v2570, %v2570
    %2572 = vst [vmem:[#allocation7 + $0x13] sm:$0x1] %v2571
    %s2573 = scalar_lea.vmem [#allocation6], 40
    %v2574 = vld [vmem:[%s2573] ss:$48 sm:$0x3]
    %s2575 = scalar_lea.vmem [#allocation6], 41
    %v2576 = vld [vmem:[%s2575] ss:$48 sm:$0x3]
    %v2577 = vmax.f32 %v2574, %v2576
    %v2578 = vpack.c.bf16 %v2577, %v2577
    %2579 = vst [vmem:[#allocation7 + $0x14] sm:$0x1] %v2578
    %s2580 = scalar_lea.vmem [#allocation6], 42
    %v2581 = vld [vmem:[%s2580] ss:$48 sm:$0x3]
    %s2582 = scalar_lea.vmem [#allocation6], 43
    %v2583 = vld [vmem:[%s2582] ss:$48 sm:$0x3]
    %v2584 = vmax.f32 %v2581, %v2583
    %v2585 = vpack.c.bf16 %v2584, %v2584
    %2586 = vst [vmem:[#allocation7 + $0x15] sm:$0x1] %v2585
    %s2587 = scalar_lea.vmem [#allocation6], 44
    %v2588 = vld [vmem:[%s2587] ss:$48 sm:$0x3]
    %s2589 = scalar_lea.vmem [#allocation6], 45
    %v2590 = vld [vmem:[%s2589] ss:$48 sm:$0x3]
    %v2591 = vmax.f32 %v2588, %v2590
    %v2592 = vpack.c.bf16 %v2591, %v2591
    %2593 = vst [vmem:[#allocation7 + $0x16] sm:$0x1] %v2592
    %v2594 = vld [vmem:[#allocation7] sm:$0xff]
    %v2595 = vld [vmem:[#allocation7 + $0x8] sm:$0xff]
    %v2596 = vld [vmem:[#allocation7 + $0x10] sm:$0x7f]
    %v2597 = vld [vmem:[%s7] sm:$0xf]
    %v2598 = vld [vmem:[%s7 + $0x4] sm:$0xf]
    %v2599 = vld [vmem:[%s7 + $0x8] sm:$0xf]
    %v2600 = vld [vmem:[%s7 + $0xc] sm:$0xf]
    %v2601 = vld [vmem:[%s7 + $0x10] sm:$0xf]
    %v2602 = vld [vmem:[%s7 + $0x14] sm:$0xf]
    %v2603 = vld [vmem:[%s7 + $0x18] sm:$0xf]
    %v2604 = vld [vmem:[%s7 + $0x1c] sm:$0xf]
    %v2605 = vld [vmem:[%s7 + $0x20] sm:$0xf]
    %v2606 = vld [vmem:[%s7 + $0x24] sm:$0xf]
    %v2607 = vld [vmem:[%s7 + $0x28] sm:$0xf]
    %v2608 = vld [vmem:[%s7 + $0x2c] sm:$0xf]
    %v2609 = vld [vmem:[%s7 + $0x30] sm:$0xf]
    %v2610 = vld [vmem:[%s7 + $0x34] sm:$0xf]
    %v2611 = vld [vmem:[%s7 + $0x38] sm:$0xf]
    %v2612 = vld [vmem:[%s7 + $0x3c] sm:$0xf]
    %v2613 = vld [vmem:[%s7 + $0x40] sm:$0xf]
    %v2614 = vld [vmem:[%s7 + $0x44] sm:$0xf]
    %v2615 = vld [vmem:[%s7 + $0x48] sm:$0xf]
    %v2616 = vld [vmem:[%s7 + $0x4c] sm:$0xf]
    %v2617 = vld [vmem:[%s7 + $0x50] sm:$0xf]
    %v2618 = vld [vmem:[%s7 + $0x54] sm:$0xf]
    %v2619 = vld [vmem:[%s7 + $0x58] sm:$0xf]
    %v2620 = vld [vmem:[%s7 + $0x5c] sm:$0xf]
    %v2621 = vld [vmem:[%s7 + $0x60] sm:$0xf]
    %v2622 = vld [vmem:[%s7 + $0x64] sm:$0xf]
    %v2623 = vld [vmem:[%s7 + $0x68] sm:$0xf]
    %v2624 = vld [vmem:[%s7 + $0x6c] sm:$0xf]
    %v2625 = vld [vmem:[%s7 + $0x70] sm:$0xf]
    %v2626 = vld [vmem:[%s7 + $0x74] sm:$0xf]
    %v2627 = vld [vmem:[%s7 + $0x78] sm:$0xf]
    %v2628 = vld [vmem:[%s7 + $0x7c] sm:$0xf]
    %v2629 = vld [vmem:[%s7 + $0x80] sm:$0xf]
    %v2630 = vld [vmem:[%s7 + $0x84] sm:$0xf]
    %v2631 = vld [vmem:[%s7 + $0x88] sm:$0xf]
    %v2632 = vld [vmem:[%s7 + $0x8c] sm:$0xf]
    %v2633 = vld [vmem:[%s7 + $0x90] sm:$0xf]
    %v2634 = vld [vmem:[%s7 + $0x94] sm:$0xf]
    %v2635 = vld [vmem:[%s7 + $0x98] sm:$0xf]
    %v2636 = vld [vmem:[%s7 + $0x9c] sm:$0xf]
    %v2637 = vld [vmem:[%s7 + $0xa0] sm:$0xf]
    %v2638 = vld [vmem:[%s7 + $0xa4] sm:$0xf]
    %v2639 = vld [vmem:[%s7 + $0xa8] sm:$0xf]
    %v2640 = vld [vmem:[%s7 + $0xac] sm:$0xf]
    %v2641 = vld [vmem:[%s7 + $0xb0] sm:$0xf]
    %v2642 = vld [vmem:[%s7 + $0xb4] sm:$0xf]
    %v2643 = vld [vmem:[%s7 + $0xb8] sm:$0xf]
    %v2644 = vld [vmem:[%s7 + $0xbc] sm:$0xf]
    %v2645 = vld [vmem:[%s7 + $0xc0] sm:$0xf]
    %v2646 = vld [vmem:[%s7 + $0xc4] sm:$0xf]
    %v2647 = vld [vmem:[%s7 + $0xc8] sm:$0xf]
    %v2648 = vld [vmem:[%s7 + $0xcc] sm:$0xf]
    %v2649 = vld [vmem:[%s7 + $0xd0] sm:$0xf]
    %v2650 = vld [vmem:[%s7 + $0xd4] sm:$0xf]
    %v2651 = vld [vmem:[%s7 + $0xd8] sm:$0xf]
    %v2652 = vld [vmem:[%s7 + $0xdc] sm:$0xf]
    %v2653 = vld [vmem:[%s7 + $0xe0] sm:$0xf]
    %v2654 = vld [vmem:[%s7 + $0xe4] sm:$0xf]
    %v2655 = vld [vmem:[%s7 + $0xe8] sm:$0xf]
    %v2656 = vld [vmem:[%s7 + $0xec] sm:$0xf]
    %v2657 = vld [vmem:[%s7 + $0xf0] sm:$0xf]
    %v2658 = vld [vmem:[%s7 + $0xf4] sm:$0xf]
    %v2659 = vld [vmem:[%s7 + $0xf8] sm:$0xf]
    %v2660 = vld [vmem:[%s7 + $0xfc] sm:$0xf]
    %v2661 = vld [vmem:[%s7 + $0x100] sm:$0xf]
    %v2662 = vld [vmem:[%s7 + $0x104] sm:$0xf]
    %v2663 = vld [vmem:[%s7 + $0x108] sm:$0xf]
    %v2664 = vld [vmem:[%s7 + $0x10c] sm:$0xf]
    %v2665 = vld [vmem:[%s7 + $0x110] sm:$0xf]
    %v2666 = vld [vmem:[%s7 + $0x114] sm:$0xf]
    %v2667 = vld [vmem:[%s7 + $0x118] sm:$0xf]
    %v2668 = vld [vmem:[%s7 + $0x11c] sm:$0xf]
    %v2669 = vld [vmem:[%s7 + $0x120] sm:$0xf]
    %v2670 = vld [vmem:[%s7 + $0x124] sm:$0xf]
    %v2671 = vld [vmem:[%s7 + $0x128] sm:$0xf]
    %v2672 = vld [vmem:[%s7 + $0x12c] sm:$0xf]
    %v2673 = vld [vmem:[%s7 + $0x130] sm:$0xf]
    %v2674 = vld [vmem:[%s7 + $0x134] sm:$0xf]
    %v2675 = vld [vmem:[%s7 + $0x138] sm:$0xf]
    %v2676 = vld [vmem:[%s7 + $0x13c] sm:$0xf]
    %v2677 = vld [vmem:[%s7 + $0x140] sm:$0xf]
    %v2678 = vld [vmem:[%s7 + $0x144] sm:$0xf]
    %v2679 = vld [vmem:[%s7 + $0x148] sm:$0xf]
    %v2680 = vld [vmem:[%s7 + $0x14c] sm:$0xf]
    %v2681 = vld [vmem:[%s7 + $0x150] sm:$0xf]
    %v2682 = vld [vmem:[%s7 + $0x154] sm:$0xf]
    %v2683 = vld [vmem:[%s7 + $0x158] sm:$0xf]
    %v2684 = vld [vmem:[%s7 + $0x15c] sm:$0xf]
    %v2685 = vld [vmem:[%s7 + $0x160] sm:$0xf]
    %v2686 = vld [vmem:[%s7 + $0x164] sm:$0xf]
    %v2687 = vld [vmem:[%s7 + $0x168] sm:$0xf]
    %v2688 = vld [vmem:[%s7 + $0x16c] sm:$0xf]
    %v2689 = vld [vmem:[%s7 + $0x170] sm:$0xf]
    %v2690 = vld [vmem:[%s7 + $0x174] sm:$0xf]
    %v2691 = vld [vmem:[%s7 + $0x178] sm:$0xf]
    %v2692 = vld [vmem:[%s7 + $0x17c] sm:$0xf]
    %v2693 = vld [vmem:[%s7 + $0x180] sm:$0xf]
    %v2694 = vld [vmem:[%s7 + $0x184] sm:$0xf]
    %v2695 = vld [vmem:[%s7 + $0x188] sm:$0xf]
    %v2696 = vld [vmem:[%s7 + $0x18c] sm:$0xf]
    %v2697 = vld [vmem:[%s7 + $0x190] sm:$0xf]
    %v2698 = vld [vmem:[%s7 + $0x194] sm:$0xf]
    %v2699 = vld [vmem:[%s7 + $0x198] sm:$0xf]
    %v2700 = vld [vmem:[%s7 + $0x19c] sm:$0xf]
    %v2701 = vld [vmem:[%s7 + $0x1a0] sm:$0xf]
    %v2702 = vld [vmem:[%s7 + $0x1a4] sm:$0xf]
    %v2703 = vld [vmem:[%s7 + $0x1a8] sm:$0xf]
    %v2704 = vld [vmem:[%s7 + $0x1ac] sm:$0xf]
    %v2705 = vld [vmem:[%s7 + $0x1b0] sm:$0xf]
    %v2706 = vld [vmem:[%s7 + $0x1b4] sm:$0xf]
    %v2707 = vld [vmem:[%s7 + $0x1b8] sm:$0xf]
    %v2708 = vld [vmem:[%s7 + $0x1bc] sm:$0xf]
    %v2709 = vld [vmem:[%s7 + $0x1c0] sm:$0xf]
    %v2710 = vld [vmem:[%s7 + $0x1c4] sm:$0xf]
    %v2711 = vld [vmem:[%s7 + $0x1c8] sm:$0xf]
    %v2712 = vld [vmem:[%s7 + $0x1cc] sm:$0xf]
    %v2713 = vld [vmem:[%s7 + $0x1d0] sm:$0xf]
    %v2714 = vld [vmem:[%s7 + $0x1d4] sm:$0xf]
    %v2715 = vld [vmem:[%s7 + $0x1d8] sm:$0xf]
    %v2716 = vld [vmem:[%s7 + $0x1dc] sm:$0xf]
    %v2717 = vld [vmem:[%s7 + $0x1e0] sm:$0xf]
    %v2718 = vld [vmem:[%s7 + $0x1e4] sm:$0xf]
    %v2719 = vld [vmem:[%s7 + $0x1e8] sm:$0xf]
    %v2720 = vld [vmem:[%s7 + $0x1ec] sm:$0xf]
    %v2721 = vld [vmem:[%s7 + $0x1f0] sm:$0xf]
    %v2722 = vld [vmem:[%s7 + $0x1f4] sm:$0xf]
    %v2723 = vld [vmem:[%s7 + $0x1f8] sm:$0xf]
    %v2724 = vld [vmem:[%s7 + $0x1fc] sm:$0xf]
    %v2725 = vld [vmem:[%s7 + $0x200] sm:$0xf]
    %v2726 = vld [vmem:[%s7 + $0x204] sm:$0xf]
    %v2727 = vld [vmem:[%s7 + $0x208] sm:$0xf]
    %v2728 = vld [vmem:[%s7 + $0x20c] sm:$0xf]
    %v2729 = vld [vmem:[%s7 + $0x210] sm:$0xf]
    %v2730 = vld [vmem:[%s7 + $0x214] sm:$0xf]
    %v2731 = vld [vmem:[%s7 + $0x218] sm:$0xf]
    %v2732 = vld [vmem:[%s7 + $0x21c] sm:$0xf]
    %v2733 = vld [vmem:[%s7 + $0x220] sm:$0xf]
    %v2734 = vld [vmem:[%s7 + $0x224] sm:$0xf]
    %v2735 = vld [vmem:[%s7 + $0x228] sm:$0xf]
    %v2736 = vld [vmem:[%s7 + $0x22c] sm:$0xf]
    %v2737 = vld [vmem:[%s7 + $0x230] sm:$0xf]
    %v2738 = vld [vmem:[%s7 + $0x234] sm:$0xf]
    %v2739 = vld [vmem:[%s7 + $0x238] sm:$0xf]
    %v2740 = vld [vmem:[%s7 + $0x23c] sm:$0xf]
    %v2741 = vld [vmem:[%s7 + $0x240] sm:$0xf]
    %v2742 = vld [vmem:[%s7 + $0x244] sm:$0xf]
    %v2743 = vld [vmem:[%s7 + $0x248] sm:$0xf]
    %v2744 = vld [vmem:[%s7 + $0x24c] sm:$0xf]
    %v2745 = vld [vmem:[%s7 + $0x250] sm:$0xf]
    %v2746 = vld [vmem:[%s7 + $0x254] sm:$0xf]
    %v2747 = vld [vmem:[%s7 + $0x258] sm:$0xf]
    %v2748 = vld [vmem:[%s7 + $0x25c] sm:$0xf]
    %v2749 = vld [vmem:[%s7 + $0x260] sm:$0xf]
    %v2750 = vld [vmem:[%s7 + $0x264] sm:$0xf]
    %v2751 = vld [vmem:[%s7 + $0x268] sm:$0xf]
    %v2752 = vld [vmem:[%s7 + $0x26c] sm:$0xf]
    %v2753 = vld [vmem:[%s7 + $0x270] sm:$0xf]
    %v2754 = vld [vmem:[%s7 + $0x274] sm:$0xf]
    %v2755 = vld [vmem:[%s7 + $0x278] sm:$0xf]
    %v2756 = vld [vmem:[%s7 + $0x27c] sm:$0xf]
    %v2757 = vld [vmem:[%s7 + $0x280] sm:$0xf]
    %v2758 = vld [vmem:[%s7 + $0x284] sm:$0xf]
    %v2759 = vld [vmem:[%s7 + $0x288] sm:$0xf]
    %v2760 = vld [vmem:[%s7 + $0x28c] sm:$0xf]
    %v2761 = vld [vmem:[%s7 + $0x290] sm:$0xf]
    %v2762 = vld [vmem:[%s7 + $0x294] sm:$0xf]
    %v2763 = vld [vmem:[%s7 + $0x298] sm:$0xf]
    %v2764 = vld [vmem:[%s7 + $0x29c] sm:$0xf]
    %v2765 = vld [vmem:[%s7 + $0x2a0] sm:$0xf]
    %v2766 = vld [vmem:[%s7 + $0x2a4] sm:$0xf]
    %v2767 = vld [vmem:[%s7 + $0x2a8] sm:$0xf]
    %v2768 = vld [vmem:[%s7 + $0x2ac] sm:$0xf]
    %v2769 = vld [vmem:[%s7 + $0x2b0] sm:$0xf]
    %v2770 = vld [vmem:[%s7 + $0x2b4] sm:$0xf]
    %v2771 = vld [vmem:[%s7 + $0x2b8] sm:$0xf]
    %v2772 = vld [vmem:[%s7 + $0x2bc] sm:$0xf]
    %v2773 = vld [vmem:[%s7 + $0x2c0] sm:$0xf]
    %v2774 = vld [vmem:[%s7 + $0x2c4] sm:$0xf]
    %v2775 = vld [vmem:[%s7 + $0x2c8] sm:$0xf]
    %v2776 = vld [vmem:[%s7 + $0x2cc] sm:$0xf]
    %v2777 = vld [vmem:[%s7 + $0x2d0] sm:$0xf]
    %v2778 = vld [vmem:[%s7 + $0x2d4] sm:$0xf]
    %v2779 = vld [vmem:[%s7 + $0x2d8] sm:$0xf]
    %v2780 = vld [vmem:[%s7 + $0x2dc] sm:$0xf]
    %v2781 = vld [vmem:[%s7 + $0x2e0] sm:$0xf]
    %v2782 = vld [vmem:[%s7 + $0x2e4] sm:$0xf]
    %v2783 = vld [vmem:[%s7 + $0x2e8] sm:$0xf]
    %v2784 = vld [vmem:[%s7 + $0x2ec] sm:$0xf]
    %v2785 = vld [vmem:[%s7 + $0x2f0] sm:$0xf]
    %v2786 = vld [vmem:[%s7 + $0x2f4] sm:$0xf]
    %v2787 = vld [vmem:[%s7 + $0x2f8] sm:$0xf]
    %v2788 = vld [vmem:[%s7 + $0x2fc] sm:$0xf]
    %v2789 = vld [vmem:[%s7 + $0x300] sm:$0xf]
    %v2790 = vld [vmem:[%s7 + $0x304] sm:$0xf]
    %v2791 = vld [vmem:[%s7 + $0x308] sm:$0xf]
    %v2792 = vld [vmem:[%s7 + $0x30c] sm:$0xf]
    %v2793 = vld [vmem:[%s7 + $0x310] sm:$0xf]
    %v2794 = vld [vmem:[%s7 + $0x314] sm:$0xf]
    %v2795 = vld [vmem:[%s7 + $0x318] sm:$0xf]
    %v2796 = vld [vmem:[%s7 + $0x31c] sm:$0xf]
    %v2797 = vld [vmem:[%s7 + $0x320] sm:$0xf]
    %v2798 = vld [vmem:[%s7 + $0x324] sm:$0xf]
    %v2799 = vld [vmem:[%s7 + $0x328] sm:$0xf]
    %v2800 = vld [vmem:[%s7 + $0x32c] sm:$0xf]
    %v2801 = vld [vmem:[%s7 + $0x330] sm:$0xf]
    %v2802 = vld [vmem:[%s7 + $0x334] sm:$0xf]
    %v2803 = vld [vmem:[%s7 + $0x338] sm:$0xf]
    %v2804 = vld [vmem:[%s7 + $0x33c] sm:$0xf]
    %v2805 = vld [vmem:[%s7 + $0x340] sm:$0xf]
    %v2806 = vld [vmem:[%s7 + $0x344] sm:$0xf]
    %v2807 = vld [vmem:[%s7 + $0x348] sm:$0xf]
    %v2808 = vld [vmem:[%s7 + $0x34c] sm:$0xf]
    %v2809 = vld [vmem:[%s7 + $0x350] sm:$0xf]
    %v2810 = vld [vmem:[%s7 + $0x354] sm:$0xf]
    %v2811 = vld [vmem:[%s7 + $0x358] sm:$0xf]
    %v2812 = vld [vmem:[%s7 + $0x35c] sm:$0xf]
    %v2813 = vld [vmem:[%s7 + $0x360] sm:$0xf]
    %v2814 = vld [vmem:[%s7 + $0x364] sm:$0xf]
    %v2815 = vld [vmem:[%s7 + $0x368] sm:$0xf]
    %v2816 = vld [vmem:[%s7 + $0x36c] sm:$0xf]
    %v2817 = vld [vmem:[%s7 + $0x370] sm:$0xf]
    %v2818 = vld [vmem:[%s7 + $0x374] sm:$0xf]
    %v2819 = vld [vmem:[%s7 + $0x378] sm:$0xf]
    %v2820 = vld [vmem:[%s7 + $0x37c] sm:$0xf]
    %v2821 = vld [vmem:[%s7 + $0x380] sm:$0xf]
    %v2822 = vld [vmem:[%s7 + $0x384] sm:$0xf]
    %v2823 = vld [vmem:[%s7 + $0x388] sm:$0xf]
    %v2824 = vld [vmem:[%s7 + $0x38c] sm:$0xf]
    %v2825 = vld [vmem:[%s7 + $0x390] sm:$0xf]
    %v2826 = vld [vmem:[%s7 + $0x394] sm:$0xf]
    %v2827 = vld [vmem:[%s7 + $0x398] sm:$0xf]
    %v2828 = vld [vmem:[%s7 + $0x39c] sm:$0xf]
    %v2829 = vld [vmem:[%s7 + $0x3a0] sm:$0xf]
    %v2830 = vld [vmem:[%s7 + $0x3a4] sm:$0xf]
    %v2831 = vld [vmem:[%s7 + $0x3a8] sm:$0xf]
    %v2832 = vld [vmem:[%s7 + $0x3ac] sm:$0xf]
    %v2833 = vld [vmem:[%s7 + $0x3b0] sm:$0xf]
    %v2834 = vld [vmem:[%s7 + $0x3b4] sm:$0xf]
    %v2835 = vld [vmem:[%s7 + $0x3b8] sm:$0xf]
    %v2836 = vld [vmem:[%s7 + $0x3bc] sm:$0xf]
    %v2837 = vld [vmem:[%s7 + $0x3c0] sm:$0xf]
    %v2838 = vld [vmem:[%s7 + $0x3c4] sm:$0xf]
    %v2839 = vld [vmem:[%s7 + $0x3c8] sm:$0xf]
    %v2840 = vld [vmem:[%s7 + $0x3cc] sm:$0xf]
    %v2841 = vld [vmem:[%s7 + $0x3d0] sm:$0xf]
    %v2842 = vld [vmem:[%s7 + $0x3d4] sm:$0xf]
    %v2843 = vld [vmem:[%s7 + $0x3d8] sm:$0xf]
    %v2844 = vld [vmem:[%s7 + $0x3dc] sm:$0xf]
    %v2845 = vld [vmem:[%s7 + $0x3e0] sm:$0xf]
    %v2846 = vld [vmem:[%s7 + $0x3e4] sm:$0xf]
    %v2847 = vld [vmem:[%s7 + $0x3e8] sm:$0xf]
    %v2848 = vld [vmem:[%s7 + $0x3ec] sm:$0xf]
    %v2849 = vld [vmem:[%s7 + $0x3f0] sm:$0xf]
    %v2850 = vld [vmem:[%s7 + $0x3f4] sm:$0xf]
    %v2851 = vld [vmem:[%s7 + $0x3f8] sm:$0xf]
    %v2852 = vld [vmem:[%s7 + $0x3fc] sm:$0xf]
    %v2853 = vld [vmem:[%s7 + $0x400] sm:$0xf]
    %v2854 = vld [vmem:[%s7 + $0x404] sm:$0xf]
    %v2855 = vld [vmem:[%s7 + $0x408] sm:$0xf]
    %v2856 = vld [vmem:[%s7 + $0x40c] sm:$0xf]
    %v2857 = vld [vmem:[%s7 + $0x410] sm:$0xf]
    %v2858 = vld [vmem:[%s7 + $0x414] sm:$0xf]
    %v2859 = vld [vmem:[%s7 + $0x418] sm:$0xf]
    %v2860 = vld [vmem:[%s7 + $0x41c] sm:$0xf]
    %v2861 = vld [vmem:[%s7 + $0x420] sm:$0xf]
    %v2862 = vld [vmem:[%s7 + $0x424] sm:$0xf]
    %v2863 = vld [vmem:[%s7 + $0x428] sm:$0xf]
    %v2864 = vld [vmem:[%s7 + $0x42c] sm:$0xf]
    %v2865 = vld [vmem:[%s7 + $0x430] sm:$0xf]
    %v2866 = vld [vmem:[%s7 + $0x434] sm:$0xf]
    %v2867 = vld [vmem:[%s7 + $0x438] sm:$0xf]
    %v2868 = vld [vmem:[%s7 + $0x43c] sm:$0xf]
    %v2869 = vld [vmem:[%s7 + $0x440] sm:$0xf]
    %v2870 = vld [vmem:[%s7 + $0x444] sm:$0xf]
    %v2871 = vld [vmem:[%s7 + $0x448] sm:$0xf]
    %v2872 = vld [vmem:[%s7 + $0x44c] sm:$0xf]
    %v2873 = vld [vmem:[%s7 + $0x450] sm:$0xf]
    %v2874 = vld [vmem:[%s7 + $0x454] sm:$0xf]
    %v2875 = vld [vmem:[%s7 + $0x458] sm:$0xf]
    %v2876 = vld [vmem:[%s7 + $0x45c] sm:$0xf]
    %v2877 = vld [vmem:[%s7 + $0x460] sm:$0xf]
    %v2878 = vld [vmem:[%s7 + $0x464] sm:$0xf]
    %v2879 = vld [vmem:[%s7 + $0x468] sm:$0xf]
    %v2880 = vld [vmem:[%s7 + $0x46c] sm:$0xf]
    %v2881 = vld [vmem:[%s7 + $0x470] sm:$0xf]
    %v2882 = vld [vmem:[%s7 + $0x474] sm:$0xf]
    %v2883 = vld [vmem:[%s7 + $0x478] sm:$0xf]
    %v2884 = vld [vmem:[%s7 + $0x47c] sm:$0xf]
    %v2885 = vld [vmem:[%s7 + $0x480] sm:$0xf]
    %v2886 = vld [vmem:[%s7 + $0x484] sm:$0xf]
    %v2887 = vld [vmem:[%s7 + $0x488] sm:$0xf]
    %v2888 = vld [vmem:[%s7 + $0x48c] sm:$0xf]
    %v2889 = vld [vmem:[%s7 + $0x490] sm:$0xf]
    %v2890 = vld [vmem:[%s7 + $0x494] sm:$0xf]
    %v2891 = vld [vmem:[%s7 + $0x498] sm:$0xf]
    %v2892 = vld [vmem:[%s7 + $0x49c] sm:$0xf]
    %v2893 = vld [vmem:[%s7 + $0x4a0] sm:$0xf]
    %v2894 = vld [vmem:[%s7 + $0x4a4] sm:$0xf]
    %v2895 = vld [vmem:[%s7 + $0x4a8] sm:$0xf]
    %v2896 = vld [vmem:[%s7 + $0x4ac] sm:$0xf]
    %v2897 = vld [vmem:[%s7 + $0x4b0] sm:$0xf]
    %v2898 = vld [vmem:[%s7 + $0x4b4] sm:$0xf]
    %v2899 = vld [vmem:[%s7 + $0x4b8] sm:$0xf]
    %v2900 = vld [vmem:[%s7 + $0x4bc] sm:$0xf]
    %v2901 = vld [vmem:[%s7 + $0x4c0] sm:$0xf]
    %v2902 = vld [vmem:[%s7 + $0x4c4] sm:$0xf]
    %v2903 = vld [vmem:[%s7 + $0x4c8] sm:$0xf]
    %v2904 = vld [vmem:[%s7 + $0x4cc] sm:$0xf]
    %v2905 = vld [vmem:[%s7 + $0x4d0] sm:$0xf]
    %v2906 = vld [vmem:[%s7 + $0x4d4] sm:$0xf]
    %v2907 = vld [vmem:[%s7 + $0x4d8] sm:$0xf]
    %v2908 = vld [vmem:[%s7 + $0x4dc] sm:$0xf]
    %v2909 = vld [vmem:[%s7 + $0x4e0] sm:$0xf]
    %v2910 = vld [vmem:[%s7 + $0x4e4] sm:$0xf]
    %v2911 = vld [vmem:[%s7 + $0x4e8] sm:$0xf]
    %v2912 = vld [vmem:[%s7 + $0x4ec] sm:$0xf]
    %v2913 = vld [vmem:[%s7 + $0x4f0] sm:$0xf]
    %v2914 = vld [vmem:[%s7 + $0x4f4] sm:$0xf]
    %v2915 = vld [vmem:[%s7 + $0x4f8] sm:$0xf]
    %v2916 = vld [vmem:[%s7 + $0x4fc] sm:$0xf]
    %v2917 = vld [vmem:[%s7 + $0x500] sm:$0xf]
    %v2918 = vld [vmem:[%s7 + $0x504] sm:$0xf]
    %v2919 = vld [vmem:[%s7 + $0x508] sm:$0xf]
    %v2920 = vld [vmem:[%s7 + $0x50c] sm:$0xf]
    %v2921 = vld [vmem:[%s7 + $0x510] sm:$0xf]
    %v2922 = vld [vmem:[%s7 + $0x514] sm:$0xf]
    %v2923 = vld [vmem:[%s7 + $0x518] sm:$0xf]
    %v2924 = vld [vmem:[%s7 + $0x51c] sm:$0xf]
    %v2925 = vld [vmem:[%s7 + $0x520] sm:$0xf]
    %v2926 = vld [vmem:[%s7 + $0x524] sm:$0xf]
    %v2927 = vld [vmem:[%s7 + $0x528] sm:$0xf]
    %v2928 = vld [vmem:[%s7 + $0x52c] sm:$0xf]
    %v2929 = vld [vmem:[%s7 + $0x530] sm:$0xf]
    %v2930 = vld [vmem:[%s7 + $0x534] sm:$0xf]
    %v2931 = vld [vmem:[%s7 + $0x538] sm:$0xf]
    %v2932 = vld [vmem:[%s7 + $0x53c] sm:$0xf]
    %v2933 = vld [vmem:[%s7 + $0x540] sm:$0xf]
    %v2934 = vld [vmem:[%s7 + $0x544] sm:$0xf]
    %v2935 = vld [vmem:[%s7 + $0x548] sm:$0xf]
    %v2936 = vld [vmem:[%s7 + $0x54c] sm:$0xf]
    %v2937 = vld [vmem:[%s7 + $0x550] sm:$0xf]
    %v2938 = vld [vmem:[%s7 + $0x554] sm:$0xf]
    %v2939 = vld [vmem:[%s7 + $0x558] sm:$0xf]
    %v2940 = vld [vmem:[%s7 + $0x55c] sm:$0xf]
    %v2941 = vld [vmem:[%s7 + $0x560] sm:$0xf]
    %v2942 = vld [vmem:[%s7 + $0x564] sm:$0xf]
    %v2943 = vld [vmem:[%s7 + $0x568] sm:$0xf]
    %v2944 = vld [vmem:[%s7 + $0x56c] sm:$0xf]
    %v2945 = vld [vmem:[%s7 + $0x570] sm:$0xf]
    %v2946 = vld [vmem:[%s7 + $0x574] sm:$0xf]
    %v2947 = vld [vmem:[%s7 + $0x578] sm:$0xf]
    %v2948 = vld [vmem:[%s7 + $0x57c] sm:$0xf]
    %v2949 = vld [vmem:[%s7 + $0x580] sm:$0xf]
    %v2950 = vld [vmem:[%s7 + $0x584] sm:$0xf]
    %v2951 = vld [vmem:[%s7 + $0x588] sm:$0xf]
    %v2952 = vld [vmem:[%s7 + $0x58c] sm:$0xf]
    %v2953 = vld [vmem:[%s7 + $0x590] sm:$0xf]
    %v2954 = vld [vmem:[%s7 + $0x594] sm:$0xf]
    %v2955 = vld [vmem:[%s7 + $0x598] sm:$0xf]
    %v2956 = vld [vmem:[%s7 + $0x59c] sm:$0xf]
    %v2957 = vld [vmem:[%s7 + $0x5a0] sm:$0xf]
    %v2958 = vld [vmem:[%s7 + $0x5a4] sm:$0xf]
    %v2959 = vld [vmem:[%s7 + $0x5a8] sm:$0xf]
    %v2960 = vld [vmem:[%s7 + $0x5ac] sm:$0xf]
    %v2961 = vld [vmem:[%s7 + $0x5b0] sm:$0xf]
    %v2962 = vld [vmem:[%s7 + $0x5b4] sm:$0xf]
    %v2963 = vld [vmem:[%s7 + $0x5b8] sm:$0xf]
    %v2964 = vld [vmem:[%s7 + $0x5bc] sm:$0xf]
    %v2965 = vld [vmem:[%s8] sm:$0x1]
    %v2967 = vlaneseq
    %v2968 = vshrl.u32 %v2967, 7
    %v2969 = vsub.s32 0, %v2968
    %v2970 = vrot.slane %v2965, %v2969
    %v2975 = vcombine.high %v2594, %v2594
    %v2977 = vunpack.c.l.s4 1966171168
    %v2978 = vunpack.c.0.s8 %v2977
    %v2979 = vlaneseq
    %v2980 = vshrl.u32 %v2979, 7
    %v2981 = vsub.s32 %v2978, %v2980
    %v2982 = vrot.slane %v2594, %v2981
    %v2984 = vunpack.c.l.s4 1966171168
    %v2985 = vunpack.c.0.s8 %v2984
    %v2986 = vlaneseq
    %v2987 = vshrl.u32 %v2986, 7
    %v2988 = vsub.s32 %v2985, %v2987
    %v2989 = vrot.slane %v2975, %v2988
    %v2990 = vcombine.high %v2982, %v2982
    %v2991 = vcombine.high %v2989, %v2989
    %v2993 = vunpack.c.l.s4 1966171168
    %v2994 = vunpack.c.0.s8 %v2993
    %v2995 = vlaneseq
    %v2996 = vshrl.u32 %v2995, 7
    %v2997 = vsub.s32 %v2994, %v2996
    %v2998 = vrot.slane %v2982, %v2997
    %v3000 = vunpack.c.l.s4 1966171168
    %v3001 = vunpack.c.0.s8 %v3000
    %v3002 = vlaneseq
    %v3003 = vshrl.u32 %v3002, 7
    %v3004 = vsub.s32 %v3001, %v3003
    %v3005 = vrot.slane %v2989, %v3004
    %v3007 = vunpack.c.l.s4 1966171168
    %v3008 = vunpack.c.0.s8 %v3007
    %v3009 = vlaneseq
    %v3010 = vshrl.u32 %v3009, 7
    %v3011 = vsub.s32 %v3008, %v3010
    %v3012 = vrot.slane %v2990, %v3011
    %v3014 = vunpack.c.l.s4 1966171168
    %v3015 = vunpack.c.0.s8 %v3014
    %v3016 = vlaneseq
    %v3017 = vshrl.u32 %v3016, 7
    %v3018 = vsub.s32 %v3015, %v3017
    %v3019 = vrot.slane %v2991, %v3018
    %v3020 = vcombine.high %v2998, %v2998
    %v3021 = vcombine.high %v3005, %v3005
    %v3022 = vcombine.high %v3012, %v3012
    %v3023 = vcombine.high %v3019, %v3019
    %v3024 = vcombine.high %v2595, %v2595
    %v3026 = vunpack.c.l.s4 1966171168
    %v3027 = vunpack.c.0.s8 %v3026
    %v3028 = vlaneseq
    %v3029 = vshrl.u32 %v3028, 7
    %v3030 = vsub.s32 %v3027, %v3029
    %v3031 = vrot.slane %v2595, %v3030
    %v3033 = vunpack.c.l.s4 1966171168
    %v3034 = vunpack.c.0.s8 %v3033
    %v3035 = vlaneseq
    %v3036 = vshrl.u32 %v3035, 7
    %v3037 = vsub.s32 %v3034, %v3036
    %v3038 = vrot.slane %v3024, %v3037
    %v3039 = vcombine.high %v3031, %v3031
    %v3040 = vcombine.high %v3038, %v3038
    %v3042 = vunpack.c.l.s4 1966171168
    %v3043 = vunpack.c.0.s8 %v3042
    %v3044 = vlaneseq
    %v3045 = vshrl.u32 %v3044, 7
    %v3046 = vsub.s32 %v3043, %v3045
    %v3047 = vrot.slane %v3031, %v3046
    %v3049 = vunpack.c.l.s4 1966171168
    %v3050 = vunpack.c.0.s8 %v3049
    %v3051 = vlaneseq
    %v3052 = vshrl.u32 %v3051, 7
    %v3053 = vsub.s32 %v3050, %v3052
    %v3054 = vrot.slane %v3038, %v3053
    %v3056 = vunpack.c.l.s4 1966171168
    %v3057 = vunpack.c.0.s8 %v3056
    %v3058 = vlaneseq
    %v3059 = vshrl.u32 %v3058, 7
    %v3060 = vsub.s32 %v3057, %v3059
    %v3061 = vrot.slane %v3039, %v3060
    %v3063 = vunpack.c.l.s4 1966171168
    %v3064 = vunpack.c.0.s8 %v3063
    %v3065 = vlaneseq
    %v3066 = vshrl.u32 %v3065, 7
    %v3067 = vsub.s32 %v3064, %v3066
    %v3068 = vrot.slane %v3040, %v3067
    %v3069 = vcombine.high %v3047, %v3047
    %v3070 = vcombine.high %v3054, %v3054
    %v3071 = vcombine.high %v3061, %v3061
    %v3072 = vcombine.high %v3068, %v3068
    %v3073 = vcombine.high %v2596, %v2596
    %v3075 = vunpack.c.l.s4 1966171168
    %v3076 = vunpack.c.0.s8 %v3075
    %v3077 = vlaneseq
    %v3078 = vshrl.u32 %v3077, 7
    %v3079 = vsub.s32 %v3076, %v3078
    %v3080 = vrot.slane %v2596, %v3079
    %v3082 = vunpack.c.l.s4 1966171168
    %v3083 = vunpack.c.0.s8 %v3082
    %v3084 = vlaneseq
    %v3085 = vshrl.u32 %v3084, 7
    %v3086 = vsub.s32 %v3083, %v3085
    %v3087 = vrot.slane %v3073, %v3086
    %v3088 = vcombine.high %v3080, %v3080
    %v3089 = vcombine.high %v3087, %v3087
    %v3091 = vunpack.c.l.s4 1966171168
    %v3092 = vunpack.c.0.s8 %v3091
    %v3093 = vlaneseq
    %v3094 = vshrl.u32 %v3093, 7
    %v3095 = vsub.s32 %v3092, %v3094
    %v3096 = vrot.slane %v3080, %v3095
    %v3098 = vunpack.c.l.s4 1966171168
    %v3099 = vunpack.c.0.s8 %v3098
    %v3100 = vlaneseq
    %v3101 = vshrl.u32 %v3100, 7
    %v3102 = vsub.s32 %v3099, %v3101
    %v3103 = vrot.slane %v3087, %v3102
    %v3105 = vunpack.c.l.s4 1966171168
    %v3106 = vunpack.c.0.s8 %v3105
    %v3107 = vlaneseq
    %v3108 = vshrl.u32 %v3107, 7
    %v3109 = vsub.s32 %v3106, %v3108
    %v3110 = vrot.slane %v3088, %v3109
    %v3112 = vunpack.c.l.s4 1966171168
    %v3113 = vunpack.c.0.s8 %v3112
    %v3114 = vlaneseq
    %v3115 = vshrl.u32 %v3114, 7
    %v3116 = vsub.s32 %v3113, %v3115
    %v3117 = vrot.slane %v3089, %v3116
    %v3118 = vcombine.high %v3096, %v3096
    %v3119 = vcombine.high %v3103, %v3103
    %v3120 = vcombine.high %v3110, %v3110
    %v3512 = vunpack.c.l.b16 %v2597
    %v3513 = vunpack.c.l.b16 %v2598
    %v3514 = vunpack.c.l.b16 %v2599
    %v3515 = vunpack.c.l.b16 %v2600
    %v3516 = vunpack.c.l.b16 %v2601
    %v3517 = vunpack.c.l.b16 %v2602
    %v3518 = vunpack.c.l.b16 %v2603
    %v3519 = vunpack.c.l.b16 %v2604
    %v3520 = vunpack.c.l.b16 %v2605
    %v3521 = vunpack.c.l.b16 %v2606
    %v3522 = vunpack.c.l.b16 %v2607
    %v3523 = vunpack.c.l.b16 %v2608
    %v3524 = vunpack.c.l.b16 %v2609
    %v3525 = vunpack.c.l.b16 %v2610
    %v3526 = vunpack.c.l.b16 %v2611
    %v3527 = vunpack.c.l.b16 %v2612
    %v3528 = vunpack.c.l.b16 %v2613
    %v3529 = vunpack.c.l.b16 %v2614
    %v3530 = vunpack.c.l.b16 %v2615
    %v3531 = vunpack.c.l.b16 %v2616
    %v3532 = vunpack.c.l.b16 %v2617
    %v3533 = vunpack.c.l.b16 %v2618
    %v3534 = vunpack.c.l.b16 %v2619
    %v3535 = vunpack.c.l.b16 %v2620
    %v3536 = vunpack.c.l.b16 %v2621
    %v3537 = vunpack.c.l.b16 %v2622
    %v3538 = vunpack.c.l.b16 %v2623
    %v3539 = vunpack.c.l.b16 %v2624
    %v3540 = vunpack.c.l.b16 %v2625
    %v3541 = vunpack.c.l.b16 %v2626
    %v3542 = vunpack.c.l.b16 %v2627
    %v3543 = vunpack.c.l.b16 %v2628
    %v3544 = vunpack.c.l.b16 %v2629
    %v3545 = vunpack.c.l.b16 %v2630
    %v3546 = vunpack.c.l.b16 %v2631
    %v3547 = vunpack.c.l.b16 %v2632
    %v3548 = vunpack.c.l.b16 %v2633
    %v3549 = vunpack.c.l.b16 %v2634
    %v3550 = vunpack.c.l.b16 %v2635
    %v3551 = vunpack.c.l.b16 %v2636
    %v3552 = vunpack.c.l.b16 %v2637
    %v3553 = vunpack.c.l.b16 %v2638
    %v3554 = vunpack.c.l.b16 %v2639
    %v3555 = vunpack.c.l.b16 %v2640
    %v3556 = vunpack.c.l.b16 %v2641
    %v3557 = vunpack.c.l.b16 %v2642
    %v3558 = vunpack.c.l.b16 %v2643
    %v3559 = vunpack.c.l.b16 %v2644
    %v3560 = vunpack.c.l.b16 %v2645
    %v3561 = vunpack.c.l.b16 %v2646
    %v3562 = vunpack.c.l.b16 %v2647
    %v3563 = vunpack.c.l.b16 %v2648
    %v3564 = vunpack.c.l.b16 %v2649
    %v3565 = vunpack.c.l.b16 %v2650
    %v3566 = vunpack.c.l.b16 %v2651
    %v3567 = vunpack.c.l.b16 %v2652
    %v3568 = vunpack.c.l.b16 %v2653
    %v3569 = vunpack.c.l.b16 %v2654
    %v3570 = vunpack.c.l.b16 %v2655
    %v3571 = vunpack.c.l.b16 %v2656
    %v3572 = vunpack.c.l.b16 %v2657
    %v3573 = vunpack.c.l.b16 %v2658
    %v3574 = vunpack.c.l.b16 %v2659
    %v3575 = vunpack.c.l.b16 %v2660
    %v3576 = vunpack.c.l.b16 %v2661
    %v3577 = vunpack.c.l.b16 %v2662
    %v3578 = vunpack.c.l.b16 %v2663
    %v3579 = vunpack.c.l.b16 %v2664
    %v3580 = vunpack.c.l.b16 %v2665
    %v3581 = vunpack.c.l.b16 %v2666
    %v3582 = vunpack.c.l.b16 %v2667
    %v3583 = vunpack.c.l.b16 %v2668
    %v3584 = vunpack.c.l.b16 %v2669
    %v3585 = vunpack.c.l.b16 %v2670
    %v3586 = vunpack.c.l.b16 %v2671
    %v3587 = vunpack.c.l.b16 %v2672
    %v3588 = vunpack.c.l.b16 %v2673
    %v3589 = vunpack.c.l.b16 %v2674
    %v3590 = vunpack.c.l.b16 %v2675
    %v3591 = vunpack.c.l.b16 %v2676
    %v3592 = vunpack.c.l.b16 %v2677
    %v3593 = vunpack.c.l.b16 %v2678
    %v3594 = vunpack.c.l.b16 %v2679
    %v3595 = vunpack.c.l.b16 %v2680
    %v3596 = vunpack.c.l.b16 %v2681
    %v3597 = vunpack.c.l.b16 %v2682
    %v3598 = vunpack.c.l.b16 %v2683
    %v3599 = vunpack.c.l.b16 %v2684
    %v3600 = vunpack.c.l.b16 %v2685
    %v3601 = vunpack.c.l.b16 %v2686
    %v3602 = vunpack.c.l.b16 %v2687
    %v3603 = vunpack.c.l.b16 %v2688
    %v3604 = vunpack.c.l.b16 %v2689
    %v3605 = vunpack.c.l.b16 %v2690
    %v3606 = vunpack.c.l.b16 %v2691
    %v3607 = vunpack.c.l.b16 %v2692
    %v3608 = vunpack.c.l.b16 %v2693
    %v3609 = vunpack.c.l.b16 %v2694
    %v3610 = vunpack.c.l.b16 %v2695
    %v3611 = vunpack.c.l.b16 %v2696
    %v3612 = vunpack.c.l.b16 %v2697
    %v3613 = vunpack.c.l.b16 %v2698
    %v3614 = vunpack.c.l.b16 %v2699
    %v3615 = vunpack.c.l.b16 %v2700
    %v3616 = vunpack.c.l.b16 %v2701
    %v3617 = vunpack.c.l.b16 %v2702
    %v3618 = vunpack.c.l.b16 %v2703
    %v3619 = vunpack.c.l.b16 %v2704
    %v3620 = vunpack.c.l.b16 %v2705
    %v3621 = vunpack.c.l.b16 %v2706
    %v3622 = vunpack.c.l.b16 %v2707
    %v3623 = vunpack.c.l.b16 %v2708
    %v3624 = vunpack.c.l.b16 %v2709
    %v3625 = vunpack.c.l.b16 %v2710
    %v3626 = vunpack.c.l.b16 %v2711
    %v3627 = vunpack.c.l.b16 %v2712
    %v3628 = vunpack.c.l.b16 %v2713
    %v3629 = vunpack.c.l.b16 %v2714
    %v3630 = vunpack.c.l.b16 %v2715
    %v3631 = vunpack.c.l.b16 %v2716
    %v3632 = vunpack.c.l.b16 %v2717
    %v3633 = vunpack.c.l.b16 %v2718
    %v3634 = vunpack.c.l.b16 %v2719
    %v3635 = vunpack.c.l.b16 %v2720
    %v3636 = vunpack.c.l.b16 %v2721
    %v3637 = vunpack.c.l.b16 %v2722
    %v3638 = vunpack.c.l.b16 %v2723
    %v3639 = vunpack.c.l.b16 %v2724
    %v3640 = vunpack.c.l.b16 %v2725
    %v3641 = vunpack.c.l.b16 %v2726
    %v3642 = vunpack.c.l.b16 %v2727
    %v3643 = vunpack.c.l.b16 %v2728
    %v3644 = vunpack.c.l.b16 %v2729
    %v3645 = vunpack.c.l.b16 %v2730
    %v3646 = vunpack.c.l.b16 %v2731
    %v3647 = vunpack.c.l.b16 %v2732
    %v3648 = vunpack.c.l.b16 %v2733
    %v3649 = vunpack.c.l.b16 %v2734
    %v3650 = vunpack.c.l.b16 %v2735
    %v3651 = vunpack.c.l.b16 %v2736
    %v3652 = vunpack.c.l.b16 %v2737
    %v3653 = vunpack.c.l.b16 %v2738
    %v3654 = vunpack.c.l.b16 %v2739
    %v3655 = vunpack.c.l.b16 %v2740
    %v3656 = vunpack.c.l.b16 %v2741
    %v3657 = vunpack.c.l.b16 %v2742
    %v3658 = vunpack.c.l.b16 %v2743
    %v3659 = vunpack.c.l.b16 %v2744
    %v3660 = vunpack.c.l.b16 %v2745
    %v3661 = vunpack.c.l.b16 %v2746
    %v3662 = vunpack.c.l.b16 %v2747
    %v3663 = vunpack.c.l.b16 %v2748
    %v3664 = vunpack.c.l.b16 %v2749
    %v3665 = vunpack.c.l.b16 %v2750
    %v3666 = vunpack.c.l.b16 %v2751
    %v3667 = vunpack.c.l.b16 %v2752
    %v3668 = vunpack.c.l.b16 %v2753
    %v3669 = vunpack.c.l.b16 %v2754
    %v3670 = vunpack.c.l.b16 %v2755
    %v3671 = vunpack.c.l.b16 %v2756
    %v3672 = vunpack.c.l.b16 %v2757
    %v3673 = vunpack.c.l.b16 %v2758
    %v3674 = vunpack.c.l.b16 %v2759
    %v3675 = vunpack.c.l.b16 %v2760
    %v3676 = vunpack.c.l.b16 %v2761
    %v3677 = vunpack.c.l.b16 %v2762
    %v3678 = vunpack.c.l.b16 %v2763
    %v3679 = vunpack.c.l.b16 %v2764
    %v3680 = vunpack.c.l.b16 %v2765
    %v3681 = vunpack.c.l.b16 %v2766
    %v3682 = vunpack.c.l.b16 %v2767
    %v3683 = vunpack.c.l.b16 %v2768
    %v3684 = vunpack.c.l.b16 %v2769
    %v3685 = vunpack.c.l.b16 %v2770
    %v3686 = vunpack.c.l.b16 %v2771
    %v3687 = vunpack.c.l.b16 %v2772
    %v3688 = vunpack.c.l.b16 %v2773
    %v3689 = vunpack.c.l.b16 %v2774
    %v3690 = vunpack.c.l.b16 %v2775
    %v3691 = vunpack.c.l.b16 %v2776
    %v3692 = vunpack.c.l.b16 %v2777
    %v3693 = vunpack.c.l.b16 %v2778
    %v3694 = vunpack.c.l.b16 %v2779
    %v3695 = vunpack.c.l.b16 %v2780
    %v3696 = vunpack.c.l.b16 %v2781
    %v3697 = vunpack.c.l.b16 %v2782
    %v3698 = vunpack.c.l.b16 %v2783
    %v3699 = vunpack.c.l.b16 %v2784
    %v3700 = vunpack.c.l.b16 %v2785
    %v3701 = vunpack.c.l.b16 %v2786
    %v3702 = vunpack.c.l.b16 %v2787
    %v3703 = vunpack.c.l.b16 %v2788
    %v3704 = vunpack.c.l.b16 %v2789
    %v3705 = vunpack.c.l.b16 %v2790
    %v3706 = vunpack.c.l.b16 %v2791
    %v3707 = vunpack.c.l.b16 %v2792
    %v3708 = vunpack.c.l.b16 %v2793
    %v3709 = vunpack.c.l.b16 %v2794
    %v3710 = vunpack.c.l.b16 %v2795
    %v3711 = vunpack.c.l.b16 %v2796
    %v3712 = vunpack.c.l.b16 %v2797
    %v3713 = vunpack.c.l.b16 %v2798
    %v3714 = vunpack.c.l.b16 %v2799
    %v3715 = vunpack.c.l.b16 %v2800
    %v3716 = vunpack.c.l.b16 %v2801
    %v3717 = vunpack.c.l.b16 %v2802
    %v3718 = vunpack.c.l.b16 %v2803
    %v3719 = vunpack.c.l.b16 %v2804
    %v3720 = vunpack.c.l.b16 %v2805
    %v3721 = vunpack.c.l.b16 %v2806
    %v3722 = vunpack.c.l.b16 %v2807
    %v3723 = vunpack.c.l.b16 %v2808
    %v3724 = vunpack.c.l.b16 %v2809
    %v3725 = vunpack.c.l.b16 %v2810
    %v3726 = vunpack.c.l.b16 %v2811
    %v3727 = vunpack.c.l.b16 %v2812
    %v3728 = vunpack.c.l.b16 %v2813
    %v3729 = vunpack.c.l.b16 %v2814
    %v3730 = vunpack.c.l.b16 %v2815
    %v3731 = vunpack.c.l.b16 %v2816
    %v3732 = vunpack.c.l.b16 %v2817
    %v3733 = vunpack.c.l.b16 %v2818
    %v3734 = vunpack.c.l.b16 %v2819
    %v3735 = vunpack.c.l.b16 %v2820
    %v3736 = vunpack.c.l.b16 %v2821
    %v3737 = vunpack.c.l.b16 %v2822
    %v3738 = vunpack.c.l.b16 %v2823
    %v3739 = vunpack.c.l.b16 %v2824
    %v3740 = vunpack.c.l.b16 %v2825
    %v3741 = vunpack.c.l.b16 %v2826
    %v3742 = vunpack.c.l.b16 %v2827
    %v3743 = vunpack.c.l.b16 %v2828
    %v3744 = vunpack.c.l.b16 %v2829
    %v3745 = vunpack.c.l.b16 %v2830
    %v3746 = vunpack.c.l.b16 %v2831
    %v3747 = vunpack.c.l.b16 %v2832
    %v3748 = vunpack.c.l.b16 %v2833
    %v3749 = vunpack.c.l.b16 %v2834
    %v3750 = vunpack.c.l.b16 %v2835
    %v3751 = vunpack.c.l.b16 %v2836
    %v3752 = vunpack.c.l.b16 %v2837
    %v3753 = vunpack.c.l.b16 %v2838
    %v3754 = vunpack.c.l.b16 %v2839
    %v3755 = vunpack.c.l.b16 %v2840
    %v3756 = vunpack.c.l.b16 %v2841
    %v3757 = vunpack.c.l.b16 %v2842
    %v3758 = vunpack.c.l.b16 %v2843
    %v3759 = vunpack.c.l.b16 %v2844
    %v3760 = vunpack.c.l.b16 %v2845
    %v3761 = vunpack.c.l.b16 %v2846
    %v3762 = vunpack.c.l.b16 %v2847
    %v3763 = vunpack.c.l.b16 %v2848
    %v3764 = vunpack.c.l.b16 %v2849
    %v3765 = vunpack.c.l.b16 %v2850
    %v3766 = vunpack.c.l.b16 %v2851
    %v3767 = vunpack.c.l.b16 %v2852
    %v3768 = vunpack.c.l.b16 %v2853
    %v3769 = vunpack.c.l.b16 %v2854
    %v3770 = vunpack.c.l.b16 %v2855
    %v3771 = vunpack.c.l.b16 %v2856
    %v3772 = vunpack.c.l.b16 %v2857
    %v3773 = vunpack.c.l.b16 %v2858
    %v3774 = vunpack.c.l.b16 %v2859
    %v3775 = vunpack.c.l.b16 %v2860
    %v3776 = vunpack.c.l.b16 %v2861
    %v3777 = vunpack.c.l.b16 %v2862
    %v3778 = vunpack.c.l.b16 %v2863
    %v3779 = vunpack.c.l.b16 %v2864
    %v3780 = vunpack.c.l.b16 %v2865
    %v3781 = vunpack.c.l.b16 %v2866
    %v3782 = vunpack.c.l.b16 %v2867
    %v3783 = vunpack.c.l.b16 %v2868
    %v3784 = vunpack.c.l.b16 %v2869
    %v3785 = vunpack.c.l.b16 %v2870
    %v3786 = vunpack.c.l.b16 %v2871
    %v3787 = vunpack.c.l.b16 %v2872
    %v3788 = vunpack.c.l.b16 %v2873
    %v3789 = vunpack.c.l.b16 %v2874
    %v3790 = vunpack.c.l.b16 %v2875
    %v3791 = vunpack.c.l.b16 %v2876
    %v3792 = vunpack.c.l.b16 %v2877
    %v3793 = vunpack.c.l.b16 %v2878
    %v3794 = vunpack.c.l.b16 %v2879
    %v3795 = vunpack.c.l.b16 %v2880
    %v3796 = vunpack.c.l.b16 %v2881
    %v3797 = vunpack.c.l.b16 %v2882
    %v3798 = vunpack.c.l.b16 %v2883
    %v3799 = vunpack.c.l.b16 %v2884
    %v3800 = vunpack.c.l.b16 %v2885
    %v3801 = vunpack.c.l.b16 %v2886
    %v3802 = vunpack.c.l.b16 %v2887
    %v3803 = vunpack.c.l.b16 %v2888
    %v3804 = vunpack.c.l.b16 %v2889
    %v3805 = vunpack.c.l.b16 %v2890
    %v3806 = vunpack.c.l.b16 %v2891
    %v3807 = vunpack.c.l.b16 %v2892
    %v3808 = vunpack.c.l.b16 %v2893
    %v3809 = vunpack.c.l.b16 %v2894
    %v3810 = vunpack.c.l.b16 %v2895
    %v3811 = vunpack.c.l.b16 %v2896
    %v3812 = vunpack.c.l.b16 %v2897
    %v3813 = vunpack.c.l.b16 %v2898
    %v3814 = vunpack.c.l.b16 %v2899
    %v3815 = vunpack.c.l.b16 %v2900
    %v3816 = vunpack.c.l.b16 %v2901
    %v3817 = vunpack.c.l.b16 %v2902
    %v3818 = vunpack.c.l.b16 %v2903
    %v3819 = vunpack.c.l.b16 %v2904
    %v3820 = vunpack.c.l.b16 %v2905
    %v3821 = vunpack.c.l.b16 %v2906
    %v3822 = vunpack.c.l.b16 %v2907
    %v3823 = vunpack.c.l.b16 %v2908
    %v3824 = vunpack.c.l.b16 %v2909
    %v3825 = vunpack.c.l.b16 %v2910
    %v3826 = vunpack.c.l.b16 %v2911
    %v3827 = vunpack.c.l.b16 %v2912
    %v3828 = vunpack.c.l.b16 %v2913
    %v3829 = vunpack.c.l.b16 %v2914
    %v3830 = vunpack.c.l.b16 %v2915
    %v3831 = vunpack.c.l.b16 %v2916
    %v3832 = vunpack.c.l.b16 %v2917
    %v3833 = vunpack.c.l.b16 %v2918
    %v3834 = vunpack.c.l.b16 %v2919
    %v3835 = vunpack.c.l.b16 %v2920
    %v3836 = vunpack.c.l.b16 %v2921
    %v3837 = vunpack.c.l.b16 %v2922
    %v3838 = vunpack.c.l.b16 %v2923
    %v3839 = vunpack.c.l.b16 %v2924
    %v3840 = vunpack.c.l.b16 %v2925
    %v3841 = vunpack.c.l.b16 %v2926
    %v3842 = vunpack.c.l.b16 %v2927
    %v3843 = vunpack.c.l.b16 %v2928
    %v3844 = vunpack.c.l.b16 %v2929
    %v3845 = vunpack.c.l.b16 %v2930
    %v3846 = vunpack.c.l.b16 %v2931
    %v3847 = vunpack.c.l.b16 %v2932
    %v3848 = vunpack.c.l.b16 %v2933
    %v3849 = vunpack.c.l.b16 %v2934
    %v3850 = vunpack.c.l.b16 %v2935
    %v3851 = vunpack.c.l.b16 %v2936
    %v3852 = vunpack.c.l.b16 %v2937
    %v3853 = vunpack.c.l.b16 %v2938
    %v3854 = vunpack.c.l.b16 %v2939
    %v3855 = vunpack.c.l.b16 %v2940
    %v3856 = vunpack.c.l.b16 %v2941
    %v3857 = vunpack.c.l.b16 %v2942
    %v3858 = vunpack.c.l.b16 %v2943
    %v3859 = vunpack.c.l.b16 %v2944
    %v3860 = vunpack.c.l.b16 %v2945
    %v3861 = vunpack.c.l.b16 %v2946
    %v3862 = vunpack.c.l.b16 %v2947
    %v3863 = vunpack.c.l.b16 %v2948
    %v3864 = vunpack.c.l.b16 %v2949
    %v3865 = vunpack.c.l.b16 %v2950
    %v3866 = vunpack.c.l.b16 %v2951
    %v3867 = vunpack.c.l.b16 %v2952
    %v3868 = vunpack.c.l.b16 %v2953
    %v3869 = vunpack.c.l.b16 %v2954
    %v3870 = vunpack.c.l.b16 %v2955
    %v3871 = vunpack.c.l.b16 %v2956
    %v3872 = vunpack.c.l.b16 %v2957
    %v3873 = vunpack.c.l.b16 %v2958
    %v3874 = vunpack.c.l.b16 %v2959
    %v3875 = vunpack.c.l.b16 %v2960
    %v3876 = vunpack.c.l.b16 %v2961
    %v3877 = vunpack.c.l.b16 %v2962
    %v3878 = vunpack.c.l.b16 %v2963
    %v3879 = vunpack.c.l.b16 %v2964
    %v3880 = vpack.c.b16 %v3513, %v3512
    %v3881 = vpack.c.b16 %v3515, %v3514
    %v3882 = vpack.c.b16 %v3517, %v3516
    %v3883 = vpack.c.b16 %v3519, %v3518
    %v3884 = vpack.c.b16 %v3521, %v3520
    %v3885 = vpack.c.b16 %v3523, %v3522
    %v3886 = vpack.c.b16 %v3525, %v3524
    %v3887 = vpack.c.b16 %v3527, %v3526
    %v3888 = vpack.c.b16 %v3529, %v3528
    %v3889 = vpack.c.b16 %v3531, %v3530
    %v3890 = vpack.c.b16 %v3533, %v3532
    %v3891 = vpack.c.b16 %v3535, %v3534
    %v3892 = vpack.c.b16 %v3537, %v3536
    %v3893 = vpack.c.b16 %v3539, %v3538
    %v3894 = vpack.c.b16 %v3541, %v3540
    %v3895 = vpack.c.b16 %v3543, %v3542
    %v3896 = vpack.c.b16 %v3545, %v3544
    %v3897 = vpack.c.b16 %v3547, %v3546
    %v3898 = vpack.c.b16 %v3549, %v3548
    %v3899 = vpack.c.b16 %v3551, %v3550
    %v3900 = vpack.c.b16 %v3553, %v3552
    %v3901 = vpack.c.b16 %v3555, %v3554
    %v3902 = vpack.c.b16 %v3557, %v3556
    %v3903 = vpack.c.b16 %v3559, %v3558
    %v3904 = vpack.c.b16 %v3561, %v3560
    %v3905 = vpack.c.b16 %v3563, %v3562
    %v3906 = vpack.c.b16 %v3565, %v3564
    %v3907 = vpack.c.b16 %v3567, %v3566
    %v3908 = vpack.c.b16 %v3569, %v3568
    %v3909 = vpack.c.b16 %v3571, %v3570
    %v3910 = vpack.c.b16 %v3573, %v3572
    %v3911 = vpack.c.b16 %v3575, %v3574
    %v3912 = vpack.c.b16 %v3577, %v3576
    %v3913 = vpack.c.b16 %v3579, %v3578
    %v3914 = vpack.c.b16 %v3581, %v3580
    %v3915 = vpack.c.b16 %v3583, %v3582
    %v3916 = vpack.c.b16 %v3585, %v3584
    %v3917 = vpack.c.b16 %v3587, %v3586
    %v3918 = vpack.c.b16 %v3589, %v3588
    %v3919 = vpack.c.b16 %v3591, %v3590
    %v3920 = vpack.c.b16 %v3593, %v3592
    %v3921 = vpack.c.b16 %v3595, %v3594
    %v3922 = vpack.c.b16 %v3597, %v3596
    %v3923 = vpack.c.b16 %v3599, %v3598
    %v3924 = vpack.c.b16 %v3601, %v3600
    %v3925 = vpack.c.b16 %v3603, %v3602
    %v3926 = vpack.c.b16 %v3605, %v3604
    %v3927 = vpack.c.b16 %v3607, %v3606
    %v3928 = vpack.c.b16 %v3609, %v3608
    %v3929 = vpack.c.b16 %v3611, %v3610
    %v3930 = vpack.c.b16 %v3613, %v3612
    %v3931 = vpack.c.b16 %v3615, %v3614
    %v3932 = vpack.c.b16 %v3617, %v3616
    %v3933 = vpack.c.b16 %v3619, %v3618
    %v3934 = vpack.c.b16 %v3621, %v3620
    %v3935 = vpack.c.b16 %v3623, %v3622
    %v3936 = vpack.c.b16 %v3625, %v3624
    %v3937 = vpack.c.b16 %v3627, %v3626
    %v3938 = vpack.c.b16 %v3629, %v3628
    %v3939 = vpack.c.b16 %v3631, %v3630
    %v3940 = vpack.c.b16 %v3633, %v3632
    %v3941 = vpack.c.b16 %v3635, %v3634
    %v3942 = vpack.c.b16 %v3637, %v3636
    %v3943 = vpack.c.b16 %v3639, %v3638
    %v3944 = vpack.c.b16 %v3641, %v3640
    %v3945 = vpack.c.b16 %v3643, %v3642
    %v3946 = vpack.c.b16 %v3645, %v3644
    %v3947 = vpack.c.b16 %v3647, %v3646
    %v3948 = vpack.c.b16 %v3649, %v3648
    %v3949 = vpack.c.b16 %v3651, %v3650
    %v3950 = vpack.c.b16 %v3653, %v3652
    %v3951 = vpack.c.b16 %v3655, %v3654
    %v3952 = vpack.c.b16 %v3657, %v3656
    %v3953 = vpack.c.b16 %v3659, %v3658
    %v3954 = vpack.c.b16 %v3661, %v3660
    %v3955 = vpack.c.b16 %v3663, %v3662
    %v3956 = vpack.c.b16 %v3665, %v3664
    %v3957 = vpack.c.b16 %v3667, %v3666
    %v3958 = vpack.c.b16 %v3669, %v3668
    %v3959 = vpack.c.b16 %v3671, %v3670
    %v3960 = vpack.c.b16 %v3673, %v3672
    %v3961 = vpack.c.b16 %v3675, %v3674
    %v3962 = vpack.c.b16 %v3677, %v3676
    %v3963 = vpack.c.b16 %v3679, %v3678
    %v3964 = vpack.c.b16 %v3681, %v3680
    %v3965 = vpack.c.b16 %v3683, %v3682
    %v3966 = vpack.c.b16 %v3685, %v3684
    %v3967 = vpack.c.b16 %v3687, %v3686
    %v3968 = vpack.c.b16 %v3689, %v3688
    %v3969 = vpack.c.b16 %v3691, %v3690
    %v3970 = vpack.c.b16 %v3693, %v3692
    %v3971 = vpack.c.b16 %v3695, %v3694
    %v3972 = vpack.c.b16 %v3697, %v3696
    %v3973 = vpack.c.b16 %v3699, %v3698
    %v3974 = vpack.c.b16 %v3701, %v3700
    %v3975 = vpack.c.b16 %v3703, %v3702
    %v3976 = vpack.c.b16 %v3705, %v3704
    %v3977 = vpack.c.b16 %v3707, %v3706
    %v3978 = vpack.c.b16 %v3709, %v3708
    %v3979 = vpack.c.b16 %v3711, %v3710
    %v3980 = vpack.c.b16 %v3713, %v3712
    %v3981 = vpack.c.b16 %v3715, %v3714
    %v3982 = vpack.c.b16 %v3717, %v3716
    %v3983 = vpack.c.b16 %v3719, %v3718
    %v3984 = vpack.c.b16 %v3721, %v3720
    %v3985 = vpack.c.b16 %v3723, %v3722
    %v3986 = vpack.c.b16 %v3725, %v3724
    %v3987 = vpack.c.b16 %v3727, %v3726
    %v3988 = vpack.c.b16 %v3729, %v3728
    %v3989 = vpack.c.b16 %v3731, %v3730
    %v3990 = vpack.c.b16 %v3733, %v3732
    %v3991 = vpack.c.b16 %v3735, %v3734
    %v3992 = vpack.c.b16 %v3737, %v3736
    %v3993 = vpack.c.b16 %v3739, %v3738
    %v3994 = vpack.c.b16 %v3741, %v3740
    %v3995 = vpack.c.b16 %v3743, %v3742
    %v3996 = vpack.c.b16 %v3745, %v3744
    %v3997 = vpack.c.b16 %v3747, %v3746
    %v3998 = vpack.c.b16 %v3749, %v3748
    %v3999 = vpack.c.b16 %v3751, %v3750
    %v4000 = vpack.c.b16 %v3753, %v3752
    %v4001 = vpack.c.b16 %v3755, %v3754
    %v4002 = vpack.c.b16 %v3757, %v3756
    %v4003 = vpack.c.b16 %v3759, %v3758
    %v4004 = vpack.c.b16 %v3761, %v3760
    %v4005 = vpack.c.b16 %v3763, %v3762
    %v4006 = vpack.c.b16 %v3765, %v3764
    %v4007 = vpack.c.b16 %v3767, %v3766
    %v4008 = vpack.c.b16 %v3769, %v3768
    %v4009 = vpack.c.b16 %v3771, %v3770
    %v4010 = vpack.c.b16 %v3773, %v3772
    %v4011 = vpack.c.b16 %v3775, %v3774
    %v4012 = vpack.c.b16 %v3777, %v3776
    %v4013 = vpack.c.b16 %v3779, %v3778
    %v4014 = vpack.c.b16 %v3781, %v3780
    %v4015 = vpack.c.b16 %v3783, %v3782
    %v4016 = vpack.c.b16 %v3785, %v3784
    %v4017 = vpack.c.b16 %v3787, %v3786
    %v4018 = vpack.c.b16 %v3789, %v3788
    %v4019 = vpack.c.b16 %v3791, %v3790
    %v4020 = vpack.c.b16 %v3793, %v3792
    %v4021 = vpack.c.b16 %v3795, %v3794
    %v4022 = vpack.c.b16 %v3797, %v3796
    %v4023 = vpack.c.b16 %v3799, %v3798
    %v4024 = vpack.c.b16 %v3801, %v3800
    %v4025 = vpack.c.b16 %v3803, %v3802
    %v4026 = vpack.c.b16 %v3805, %v3804
    %v4027 = vpack.c.b16 %v3807, %v3806
    %v4028 = vpack.c.b16 %v3809, %v3808
    %v4029 = vpack.c.b16 %v3811, %v3810
    %v4030 = vpack.c.b16 %v3813, %v3812
    %v4031 = vpack.c.b16 %v3815, %v3814
    %v4032 = vpack.c.b16 %v3817, %v3816
    %v4033 = vpack.c.b16 %v3819, %v3818
    %v4034 = vpack.c.b16 %v3821, %v3820
    %v4035 = vpack.c.b16 %v3823, %v3822
    %v4036 = vpack.c.b16 %v3825, %v3824
    %v4037 = vpack.c.b16 %v3827, %v3826
    %v4038 = vpack.c.b16 %v3829, %v3828
    %v4039 = vpack.c.b16 %v3831, %v3830
    %v4040 = vpack.c.b16 %v3833, %v3832
    %v4041 = vpack.c.b16 %v3835, %v3834
    %v4042 = vpack.c.b16 %v3837, %v3836
    %v4043 = vpack.c.b16 %v3839, %v3838
    %v4044 = vpack.c.b16 %v3841, %v3840
    %v4045 = vpack.c.b16 %v3843, %v3842
    %v4046 = vpack.c.b16 %v3845, %v3844
    %v4047 = vpack.c.b16 %v3847, %v3846
    %v4048 = vpack.c.b16 %v3849, %v3848
    %v4049 = vpack.c.b16 %v3851, %v3850
    %v4050 = vpack.c.b16 %v3853, %v3852
    %v4051 = vpack.c.b16 %v3855, %v3854
    %v4052 = vpack.c.b16 %v3857, %v3856
    %v4053 = vpack.c.b16 %v3859, %v3858
    %v4054 = vpack.c.b16 %v3861, %v3860
    %v4055 = vpack.c.b16 %v3863, %v3862
    %v4056 = vpack.c.b16 %v3865, %v3864
    %v4057 = vpack.c.b16 %v3867, %v3866
    %v4058 = vpack.c.b16 %v3869, %v3868
    %v4059 = vpack.c.b16 %v3871, %v3870
    %v4060 = vpack.c.b16 %v3873, %v3872
    %v4061 = vpack.c.b16 %v3875, %v3874
    %v4062 = vpack.c.b16 %v3877, %v3876
    %v4063 = vpack.c.b16 %v3879, %v3878
    %4248 = vmatprep.subr.bf16.mxu0 0
    %4249 = vmatpush1.bf16.msra.mxu0 %v3887
    %4250 = vmatprep.subr.bf16.mxu0 0
    %4251 = vmatpush1.bf16.msra.mxu0 %v3886
    %4252 = vmatprep.subr.bf16.mxu0 0
    %4253 = vmatpush1.bf16.msra.mxu0 %v3885
    %4254 = vmatprep.subr.bf16.mxu0 0
    %4255 = vmatpush1.bf16.msra.mxu0 %v3884
    %4256 = vmatprep.subr.bf16.mxu0 0
    %4257 = vmatpush1.bf16.msra.mxu0 %v3883
    %4258 = vmatprep.subr.bf16.mxu0 0
    %4259 = vmatpush1.bf16.msra.mxu0 %v3882
    %4260 = vmatprep.subr.bf16.mxu0 0
    %4261 = vmatpush1.bf16.msra.mxu0 %v3881
    %4262 = vmatprep.subr.bf16.mxu0 0
    %4263 = vmatpush1.bf16.msra.mxu0 %v3880
    %4264 = vmatprep.subr.bf16.mxu0 0
    %4265 = vmatpush2.bf16.msra.mxu0 %v3895
    %4266 = vmatprep.subr.bf16.mxu0 0
    %4267 = vmatpush2.bf16.msra.mxu0 %v3894
    %4268 = vmatprep.subr.bf16.mxu0 0
    %4269 = vmatpush2.bf16.msra.mxu0 %v3893
    %4270 = vmatprep.subr.bf16.mxu0 0
    %4271 = vmatpush2.bf16.msra.mxu0 %v3892
    %4272 = vmatprep.subr.bf16.mxu0 0
    %4273 = vmatpush2.bf16.msra.mxu0 %v3891
    %4274 = vmatprep.subr.bf16.mxu0 0
    %4275 = vmatpush2.bf16.msra.mxu0 %v3890
    %4276 = vmatprep.subr.bf16.mxu0 0
    %4277 = vmatpush2.bf16.msra.mxu0 %v3889
    %4278 = vmatprep.subr.bf16.mxu0 0
    %4279 = vmatpush2.bf16.msra.mxu0 %v3888
    %4280 = vmatprep.mubr.bf16.mxu0 %v3012
    %4281 = vmatmul.mubr.bf16.gmra.mxu0 %v2998
    %v4282 = vpop.f32.mrf.mxu0
    %v4283 = vadd.f32 %v2970, %v4282
    %v4284 = vpop.f32.mrf.mxu0
    %v4285 = vpop.f32.mrf.mxu0
    %v4286 = vpop.f32.mrf.mxu0
    %4287 = vdwg.mxu0
    %4288 = vmatprep.subr.bf16.mxu0 0
    %4289 = vmatpush1.bf16.msra.mxu0 %v3903
    %4290 = vmatprep.subr.bf16.mxu0 0
    %4291 = vmatpush1.bf16.msra.mxu0 %v3902
    %4292 = vmatprep.subr.bf16.mxu0 0
    %4293 = vmatpush1.bf16.msra.mxu0 %v3901
    %4294 = vmatprep.subr.bf16.mxu0 0
    %4295 = vmatpush1.bf16.msra.mxu0 %v3900
    %4296 = vmatprep.subr.bf16.mxu0 0
    %4297 = vmatpush1.bf16.msra.mxu0 %v3899
    %4298 = vmatprep.subr.bf16.mxu0 0
    %4299 = vmatpush1.bf16.msra.mxu0 %v3898
    %4300 = vmatprep.subr.bf16.mxu0 0
    %4301 = vmatpush1.bf16.msra.mxu0 %v3897
    %4302 = vmatprep.subr.bf16.mxu0 0
    %4303 = vmatpush1.bf16.msra.mxu0 %v3896
    %4304 = vmatprep.subr.bf16.mxu0 0
    %4305 = vmatpush2.bf16.msra.mxu0 %v3911
    %4306 = vmatprep.subr.bf16.mxu0 0
    %4307 = vmatpush2.bf16.msra.mxu0 %v3910
    %4308 = vmatprep.subr.bf16.mxu0 0
    %4309 = vmatpush2.bf16.msra.mxu0 %v3909
    %4310 = vmatprep.subr.bf16.mxu0 0
    %4311 = vmatpush2.bf16.msra.mxu0 %v3908
    %4312 = vmatprep.subr.bf16.mxu0 0
    %4313 = vmatpush2.bf16.msra.mxu0 %v3907
    %4314 = vmatprep.subr.bf16.mxu0 0
    %4315 = vmatpush2.bf16.msra.mxu0 %v3906
    %4316 = vmatprep.subr.bf16.mxu0 0
    %4317 = vmatpush2.bf16.msra.mxu0 %v3905
    %4318 = vmatprep.subr.bf16.mxu0 0
    %4319 = vmatpush2.bf16.msra.mxu0 %v3904
    %4320 = vmatprep.mubr.bf16.mxu0 %v3022
    %4321 = vmatmul.mubr.bf16.gmra.mxu0 %v3020
    %v4322 = vpop.f32.mrf.mxu0
    %v4323 = vadd.f32 %v4283, %v4322
    %v4324 = vpop.f32.mrf.mxu0
    %v4325 = vpop.f32.mrf.mxu0
    %v4326 = vpop.f32.mrf.mxu0
    %4327 = vdwg.mxu0
    %4328 = vmatprep.subr.bf16.mxu0 0
    %4329 = vmatpush1.bf16.msra.mxu0 %v3919
    %4330 = vmatprep.subr.bf16.mxu0 0
    %4331 = vmatpush1.bf16.msra.mxu0 %v3918
    %4332 = vmatprep.subr.bf16.mxu0 0
    %4333 = vmatpush1.bf16.msra.mxu0 %v3917
    %4334 = vmatprep.subr.bf16.mxu0 0
    %4335 = vmatpush1.bf16.msra.mxu0 %v3916
    %4336 = vmatprep.subr.bf16.mxu0 0
    %4337 = vmatpush1.bf16.msra.mxu0 %v3915
    %4338 = vmatprep.subr.bf16.mxu0 0
    %4339 = vmatpush1.bf16.msra.mxu0 %v3914
    %4340 = vmatprep.subr.bf16.mxu0 0
    %4341 = vmatpush1.bf16.msra.mxu0 %v3913
    %4342 = vmatprep.subr.bf16.mxu0 0
    %4343 = vmatpush1.bf16.msra.mxu0 %v3912
    %4344 = vmatprep.subr.bf16.mxu0 0
    %4345 = vmatpush2.bf16.msra.mxu0 %v3927
    %4346 = vmatprep.subr.bf16.mxu0 0
    %4347 = vmatpush2.bf16.msra.mxu0 %v3926
    %4348 = vmatprep.subr.bf16.mxu0 0
    %4349 = vmatpush2.bf16.msra.mxu0 %v3925
    %4350 = vmatprep.subr.bf16.mxu0 0
    %4351 = vmatpush2.bf16.msra.mxu0 %v3924
    %4352 = vmatprep.subr.bf16.mxu0 0
    %4353 = vmatpush2.bf16.msra.mxu0 %v3923
    %4354 = vmatprep.subr.bf16.mxu0 0
    %4355 = vmatpush2.bf16.msra.mxu0 %v3922
    %4356 = vmatprep.subr.bf16.mxu0 0
    %4357 = vmatpush2.bf16.msra.mxu0 %v3921
    %4358 = vmatprep.subr.bf16.mxu0 0
    %4359 = vmatpush2.bf16.msra.mxu0 %v3920
    %4360 = vmatprep.mubr.bf16.mxu0 %v3019
    %4361 = vmatmul.mubr.bf16.gmra.mxu0 %v3005
    %v4362 = vpop.f32.mrf.mxu0
    %v4363 = vadd.f32 %v4323, %v4362
    %v4364 = vpop.f32.mrf.mxu0
    %v4365 = vpop.f32.mrf.mxu0
    %v4366 = vpop.f32.mrf.mxu0
    %4367 = vdwg.mxu0
    %4368 = vmatprep.subr.bf16.mxu0 0
    %4369 = vmatpush1.bf16.msra.mxu0 %v3935
    %4370 = vmatprep.subr.bf16.mxu0 0
    %4371 = vmatpush1.bf16.msra.mxu0 %v3934
    %4372 = vmatprep.subr.bf16.mxu0 0
    %4373 = vmatpush1.bf16.msra.mxu0 %v3933
    %4374 = vmatprep.subr.bf16.mxu0 0
    %4375 = vmatpush1.bf16.msra.mxu0 %v3932
    %4376 = vmatprep.subr.bf16.mxu0 0
    %4377 = vmatpush1.bf16.msra.mxu0 %v3931
    %4378 = vmatprep.subr.bf16.mxu0 0
    %4379 = vmatpush1.bf16.msra.mxu0 %v3930
    %4380 = vmatprep.subr.bf16.mxu0 0
    %4381 = vmatpush1.bf16.msra.mxu0 %v3929
    %4382 = vmatprep.subr.bf16.mxu0 0
    %4383 = vmatpush1.bf16.msra.mxu0 %v3928
    %4384 = vmatprep.subr.bf16.mxu0 0
    %4385 = vmatpush2.bf16.msra.mxu0 %v3943
    %4386 = vmatprep.subr.bf16.mxu0 0
    %4387 = vmatpush2.bf16.msra.mxu0 %v3942
    %4388 = vmatprep.subr.bf16.mxu0 0
    %4389 = vmatpush2.bf16.msra.mxu0 %v3941
    %4390 = vmatprep.subr.bf16.mxu0 0
    %4391 = vmatpush2.bf16.msra.mxu0 %v3940
    %4392 = vmatprep.subr.bf16.mxu0 0
    %4393 = vmatpush2.bf16.msra.mxu0 %v3939
    %4394 = vmatprep.subr.bf16.mxu0 0
    %4395 = vmatpush2.bf16.msra.mxu0 %v3938
    %4396 = vmatprep.subr.bf16.mxu0 0
    %4397 = vmatpush2.bf16.msra.mxu0 %v3937
    %4398 = vmatprep.subr.bf16.mxu0 0
    %4399 = vmatpush2.bf16.msra.mxu0 %v3936
    %4400 = vmatprep.mubr.bf16.mxu0 %v3023
    %4401 = vmatmul.mubr.bf16.gmra.mxu0 %v3021
    %v4402 = vpop.f32.mrf.mxu0
    %v4403 = vadd.f32 %v4363, %v4402
    %v4404 = vpop.f32.mrf.mxu0
    %v4405 = vpop.f32.mrf.mxu0
    %v4406 = vpop.f32.mrf.mxu0
    %4407 = vdwg.mxu0
    %4408 = vmatprep.subr.bf16.mxu0 0
    %4409 = vmatpush1.bf16.msra.mxu0 %v3951
    %4410 = vmatprep.subr.bf16.mxu0 0
    %4411 = vmatpush1.bf16.msra.mxu0 %v3950
    %4412 = vmatprep.subr.bf16.mxu0 0
    %4413 = vmatpush1.bf16.msra.mxu0 %v3949
    %4414 = vmatprep.subr.bf16.mxu0 0
    %4415 = vmatpush1.bf16.msra.mxu0 %v3948
    %4416 = vmatprep.subr.bf16.mxu0 0
    %4417 = vmatpush1.bf16.msra.mxu0 %v3947
    %4418 = vmatprep.subr.bf16.mxu0 0
    %4419 = vmatpush1.bf16.msra.mxu0 %v3946
    %4420 = vmatprep.subr.bf16.mxu0 0
    %4421 = vmatpush1.bf16.msra.mxu0 %v3945
    %4422 = vmatprep.subr.bf16.mxu0 0
    %4423 = vmatpush1.bf16.msra.mxu0 %v3944
    %4424 = vmatprep.subr.bf16.mxu0 0
    %4425 = vmatpush2.bf16.msra.mxu0 %v3959
    %4426 = vmatprep.subr.bf16.mxu0 0
    %4427 = vmatpush2.bf16.msra.mxu0 %v3958
    %4428 = vmatprep.subr.bf16.mxu0 0
    %4429 = vmatpush2.bf16.msra.mxu0 %v3957
    %4430 = vmatprep.subr.bf16.mxu0 0
    %4431 = vmatpush2.bf16.msra.mxu0 %v3956
    %4432 = vmatprep.subr.bf16.mxu0 0
    %4433 = vmatpush2.bf16.msra.mxu0 %v3955
    %4434 = vmatprep.subr.bf16.mxu0 0
    %4435 = vmatpush2.bf16.msra.mxu0 %v3954
    %4436 = vmatprep.subr.bf16.mxu0 0
    %4437 = vmatpush2.bf16.msra.mxu0 %v3953
    %4438 = vmatprep.subr.bf16.mxu0 0
    %4439 = vmatpush2.bf16.msra.mxu0 %v3952
    %4440 = vmatprep.mubr.bf16.mxu0 %v3061
    %4441 = vmatmul.mubr.bf16.gmra.mxu0 %v3047
    %v4442 = vpop.f32.mrf.mxu0
    %v4443 = vadd.f32 %v4403, %v4442
    %v4444 = vpop.f32.mrf.mxu0
    %v4445 = vpop.f32.mrf.mxu0
    %v4446 = vpop.f32.mrf.mxu0
    %4447 = vdwg.mxu0
    %4448 = vmatprep.subr.bf16.mxu0 0
    %4449 = vmatpush1.bf16.msra.mxu0 %v3967
    %4450 = vmatprep.subr.bf16.mxu0 0
    %4451 = vmatpush1.bf16.msra.mxu0 %v3966
    %4452 = vmatprep.subr.bf16.mxu0 0
    %4453 = vmatpush1.bf16.msra.mxu0 %v3965
    %4454 = vmatprep.subr.bf16.mxu0 0
    %4455 = vmatpush1.bf16.msra.mxu0 %v3964
    %4456 = vmatprep.subr.bf16.mxu0 0
    %4457 = vmatpush1.bf16.msra.mxu0 %v3963
    %4458 = vmatprep.subr.bf16.mxu0 0
    %4459 = vmatpush1.bf16.msra.mxu0 %v3962
    %4460 = vmatprep.subr.bf16.mxu0 0
    %4461 = vmatpush1.bf16.msra.mxu0 %v3961
    %4462 = vmatprep.subr.bf16.mxu0 0
    %4463 = vmatpush1.bf16.msra.mxu0 %v3960
    %4464 = vmatprep.subr.bf16.mxu0 0
    %4465 = vmatpush2.bf16.msra.mxu0 %v3975
    %4466 = vmatprep.subr.bf16.mxu0 0
    %4467 = vmatpush2.bf16.msra.mxu0 %v3974
    %4468 = vmatprep.subr.bf16.mxu0 0
    %4469 = vmatpush2.bf16.msra.mxu0 %v3973
    %4470 = vmatprep.subr.bf16.mxu0 0
    %4471 = vmatpush2.bf16.msra.mxu0 %v3972
    %4472 = vmatprep.subr.bf16.mxu0 0
    %4473 = vmatpush2.bf16.msra.mxu0 %v3971
    %4474 = vmatprep.subr.bf16.mxu0 0
    %4475 = vmatpush2.bf16.msra.mxu0 %v3970
    %4476 = vmatprep.subr.bf16.mxu0 0
    %4477 = vmatpush2.bf16.msra.mxu0 %v3969
    %4478 = vmatprep.subr.bf16.mxu0 0
    %4479 = vmatpush2.bf16.msra.mxu0 %v3968
    %4480 = vmatprep.mubr.bf16.mxu0 %v3071
    %4481 = vmatmul.mubr.bf16.gmra.mxu0 %v3069
    %v4482 = vpop.f32.mrf.mxu0
    %v4483 = vadd.f32 %v4443, %v4482
    %v4484 = vpop.f32.mrf.mxu0
    %v4485 = vpop.f32.mrf.mxu0
    %v4486 = vpop.f32.mrf.mxu0
    %4487 = vdwg.mxu0
    %4488 = vmatprep.subr.bf16.mxu0 0
    %4489 = vmatpush1.bf16.msra.mxu0 %v3983
    %4490 = vmatprep.subr.bf16.mxu0 0
    %4491 = vmatpush1.bf16.msra.mxu0 %v3982
    %4492 = vmatprep.subr.bf16.mxu0 0
    %4493 = vmatpush1.bf16.msra.mxu0 %v3981
    %4494 = vmatprep.subr.bf16.mxu0 0
    %4495 = vmatpush1.bf16.msra.mxu0 %v3980
    %4496 = vmatprep.subr.bf16.mxu0 0
    %4497 = vmatpush1.bf16.msra.mxu0 %v3979
    %4498 = vmatprep.subr.bf16.mxu0 0
    %4499 = vmatpush1.bf16.msra.mxu0 %v3978
    %4500 = vmatprep.subr.bf16.mxu0 0
    %4501 = vmatpush1.bf16.msra.mxu0 %v3977
    %4502 = vmatprep.subr.bf16.mxu0 0
    %4503 = vmatpush1.bf16.msra.mxu0 %v3976
    %4504 = vmatprep.subr.bf16.mxu0 0
    %4505 = vmatpush2.bf16.msra.mxu0 %v3991
    %4506 = vmatprep.subr.bf16.mxu0 0
    %4507 = vmatpush2.bf16.msra.mxu0 %v3990
    %4508 = vmatprep.subr.bf16.mxu0 0
    %4509 = vmatpush2.bf16.msra.mxu0 %v3989
    %4510 = vmatprep.subr.bf16.mxu0 0
    %4511 = vmatpush2.bf16.msra.mxu0 %v3988
    %4512 = vmatprep.subr.bf16.mxu0 0
    %4513 = vmatpush2.bf16.msra.mxu0 %v3987
    %4514 = vmatprep.subr.bf16.mxu0 0
    %4515 = vmatpush2.bf16.msra.mxu0 %v3986
    %4516 = vmatprep.subr.bf16.mxu0 0
    %4517 = vmatpush2.bf16.msra.mxu0 %v3985
    %4518 = vmatprep.subr.bf16.mxu0 0
    %4519 = vmatpush2.bf16.msra.mxu0 %v3984
    %4520 = vmatprep.mubr.bf16.mxu0 %v3068
    %4521 = vmatmul.mubr.bf16.gmra.mxu0 %v3054
    %v4522 = vpop.f32.mrf.mxu0
    %v4523 = vadd.f32 %v4483, %v4522
    %v4524 = vpop.f32.mrf.mxu0
    %v4525 = vpop.f32.mrf.mxu0
    %v4526 = vpop.f32.mrf.mxu0
    %4527 = vdwg.mxu0
    %4528 = vmatprep.subr.bf16.mxu0 0
    %4529 = vmatpush1.bf16.msra.mxu0 %v3999
    %4530 = vmatprep.subr.bf16.mxu0 0
    %4531 = vmatpush1.bf16.msra.mxu0 %v3998
    %4532 = vmatprep.subr.bf16.mxu0 0
    %4533 = vmatpush1.bf16.msra.mxu0 %v3997
    %4534 = vmatprep.subr.bf16.mxu0 0
    %4535 = vmatpush1.bf16.msra.mxu0 %v3996
    %4536 = vmatprep.subr.bf16.mxu0 0
    %4537 = vmatpush1.bf16.msra.mxu0 %v3995
    %4538 = vmatprep.subr.bf16.mxu0 0
    %4539 = vmatpush1.bf16.msra.mxu0 %v3994
    %4540 = vmatprep.subr.bf16.mxu0 0
    %4541 = vmatpush1.bf16.msra.mxu0 %v3993
    %4542 = vmatprep.subr.bf16.mxu0 0
    %4543 = vmatpush1.bf16.msra.mxu0 %v3992
    %4544 = vmatprep.subr.bf16.mxu0 0
    %4545 = vmatpush2.bf16.msra.mxu0 %v4007
    %4546 = vmatprep.subr.bf16.mxu0 0
    %4547 = vmatpush2.bf16.msra.mxu0 %v4006
    %4548 = vmatprep.subr.bf16.mxu0 0
    %4549 = vmatpush2.bf16.msra.mxu0 %v4005
    %4550 = vmatprep.subr.bf16.mxu0 0
    %4551 = vmatpush2.bf16.msra.mxu0 %v4004
    %4552 = vmatprep.subr.bf16.mxu0 0
    %4553 = vmatpush2.bf16.msra.mxu0 %v4003
    %4554 = vmatprep.subr.bf16.mxu0 0
    %4555 = vmatpush2.bf16.msra.mxu0 %v4002
    %4556 = vmatprep.subr.bf16.mxu0 0
    %4557 = vmatpush2.bf16.msra.mxu0 %v4001
    %4558 = vmatprep.subr.bf16.mxu0 0
    %4559 = vmatpush2.bf16.msra.mxu0 %v4000
    %4560 = vmatprep.mubr.bf16.mxu0 %v3072
    %4561 = vmatmul.mubr.bf16.gmra.mxu0 %v3070
    %v4562 = vpop.f32.mrf.mxu0
    %v4563 = vadd.f32 %v4523, %v4562
    %v4564 = vpop.f32.mrf.mxu0
    %v4565 = vpop.f32.mrf.mxu0
    %v4566 = vpop.f32.mrf.mxu0
    %4567 = vdwg.mxu0
    %4568 = vmatprep.subr.bf16.mxu0 0
    %4569 = vmatpush1.bf16.msra.mxu0 %v4015
    %4570 = vmatprep.subr.bf16.mxu0 0
    %4571 = vmatpush1.bf16.msra.mxu0 %v4014
    %4572 = vmatprep.subr.bf16.mxu0 0
    %4573 = vmatpush1.bf16.msra.mxu0 %v4013
    %4574 = vmatprep.subr.bf16.mxu0 0
    %4575 = vmatpush1.bf16.msra.mxu0 %v4012
    %4576 = vmatprep.subr.bf16.mxu0 0
    %4577 = vmatpush1.bf16.msra.mxu0 %v4011
    %4578 = vmatprep.subr.bf16.mxu0 0
    %4579 = vmatpush1.bf16.msra.mxu0 %v4010
    %4580 = vmatprep.subr.bf16.mxu0 0
    %4581 = vmatpush1.bf16.msra.mxu0 %v4009
    %4582 = vmatprep.subr.bf16.mxu0 0
    %4583 = vmatpush1.bf16.msra.mxu0 %v4008
    %4584 = vmatprep.subr.bf16.mxu0 0
    %4585 = vmatpush2.bf16.msra.mxu0 %v4023
    %4586 = vmatprep.subr.bf16.mxu0 0
    %4587 = vmatpush2.bf16.msra.mxu0 %v4022
    %4588 = vmatprep.subr.bf16.mxu0 0
    %4589 = vmatpush2.bf16.msra.mxu0 %v4021
    %4590 = vmatprep.subr.bf16.mxu0 0
    %4591 = vmatpush2.bf16.msra.mxu0 %v4020
    %4592 = vmatprep.subr.bf16.mxu0 0
    %4593 = vmatpush2.bf16.msra.mxu0 %v4019
    %4594 = vmatprep.subr.bf16.mxu0 0
    %4595 = vmatpush2.bf16.msra.mxu0 %v4018
    %4596 = vmatprep.subr.bf16.mxu0 0
    %4597 = vmatpush2.bf16.msra.mxu0 %v4017
    %4598 = vmatprep.subr.bf16.mxu0 0
    %4599 = vmatpush2.bf16.msra.mxu0 %v4016
    %4600 = vmatprep.mubr.bf16.mxu0 %v3110
    %4601 = vmatmul.mubr.bf16.gmra.mxu0 %v3096
    %v4602 = vpop.f32.mrf.mxu0
    %v4603 = vadd.f32 %v4563, %v4602
    %v4604 = vpop.f32.mrf.mxu0
    %v4605 = vpop.f32.mrf.mxu0
    %v4606 = vpop.f32.mrf.mxu0
    %4607 = vdwg.mxu0
    %4608 = vmatprep.subr.bf16.mxu0 0
    %4609 = vmatpush1.bf16.msra.mxu0 %v4031
    %4610 = vmatprep.subr.bf16.mxu0 0
    %4611 = vmatpush1.bf16.msra.mxu0 %v4030
    %4612 = vmatprep.subr.bf16.mxu0 0
    %4613 = vmatpush1.bf16.msra.mxu0 %v4029
    %4614 = vmatprep.subr.bf16.mxu0 0
    %4615 = vmatpush1.bf16.msra.mxu0 %v4028
    %4616 = vmatprep.subr.bf16.mxu0 0
    %4617 = vmatpush1.bf16.msra.mxu0 %v4027
    %4618 = vmatprep.subr.bf16.mxu0 0
    %4619 = vmatpush1.bf16.msra.mxu0 %v4026
    %4620 = vmatprep.subr.bf16.mxu0 0
    %4621 = vmatpush1.bf16.msra.mxu0 %v4025
    %4622 = vmatprep.subr.bf16.mxu0 0
    %4623 = vmatpush1.bf16.msra.mxu0 %v4024
    %4624 = vmatprep.subr.bf16.mxu0 0
    %4625 = vmatpush2.bf16.msra.mxu0 %v4039
    %4626 = vmatprep.subr.bf16.mxu0 0
    %4627 = vmatpush2.bf16.msra.mxu0 %v4038
    %4628 = vmatprep.subr.bf16.mxu0 0
    %4629 = vmatpush2.bf16.msra.mxu0 %v4037
    %4630 = vmatprep.subr.bf16.mxu0 0
    %4631 = vmatpush2.bf16.msra.mxu0 %v4036
    %4632 = vmatprep.subr.bf16.mxu0 0
    %4633 = vmatpush2.bf16.msra.mxu0 %v4035
    %4634 = vmatprep.subr.bf16.mxu0 0
    %4635 = vmatpush2.bf16.msra.mxu0 %v4034
    %4636 = vmatprep.subr.bf16.mxu0 0
    %4637 = vmatpush2.bf16.msra.mxu0 %v4033
    %4638 = vmatprep.subr.bf16.mxu0 0
    %4639 = vmatpush2.bf16.msra.mxu0 %v4032
    %4640 = vmatprep.mubr.bf16.mxu0 %v3120
    %4641 = vmatmul.mubr.bf16.gmra.mxu0 %v3118
    %v4642 = vpop.f32.mrf.mxu0
    %v4643 = vadd.f32 %v4603, %v4642
    %v4644 = vpop.f32.mrf.mxu0
    %v4645 = vpop.f32.mrf.mxu0
    %v4646 = vpop.f32.mrf.mxu0
    %4647 = vdwg.mxu0
    %4648 = vmatprep.subr.bf16.mxu0 0
    %4649 = vmatpush1.bf16.msra.mxu0 %v4047
    %4650 = vmatprep.subr.bf16.mxu0 0
    %4651 = vmatpush1.bf16.msra.mxu0 %v4046
    %4652 = vmatprep.subr.bf16.mxu0 0
    %4653 = vmatpush1.bf16.msra.mxu0 %v4045
    %4654 = vmatprep.subr.bf16.mxu0 0
    %4655 = vmatpush1.bf16.msra.mxu0 %v4044
    %4656 = vmatprep.subr.bf16.mxu0 0
    %4657 = vmatpush1.bf16.msra.mxu0 %v4043
    %4658 = vmatprep.subr.bf16.mxu0 0
    %4659 = vmatpush1.bf16.msra.mxu0 %v4042
    %4660 = vmatprep.subr.bf16.mxu0 0
    %4661 = vmatpush1.bf16.msra.mxu0 %v4041
    %4662 = vmatprep.subr.bf16.mxu0 0
    %4663 = vmatpush1.bf16.msra.mxu0 %v4040
    %4664 = vmatprep.subr.bf16.mxu0 0
    %4665 = vmatpush2.bf16.msra.mxu0 %v4055
    %4666 = vmatprep.subr.bf16.mxu0 0
    %4667 = vmatpush2.bf16.msra.mxu0 %v4054
    %4668 = vmatprep.subr.bf16.mxu0 0
    %4669 = vmatpush2.bf16.msra.mxu0 %v4053
    %4670 = vmatprep.subr.bf16.mxu0 0
    %4671 = vmatpush2.bf16.msra.mxu0 %v4052
    %4672 = vmatprep.subr.bf16.mxu0 0
    %4673 = vmatpush2.bf16.msra.mxu0 %v4051
    %4674 = vmatprep.subr.bf16.mxu0 0
    %4675 = vmatpush2.bf16.msra.mxu0 %v4050
    %4676 = vmatprep.subr.bf16.mxu0 0
    %4677 = vmatpush2.bf16.msra.mxu0 %v4049
    %4678 = vmatprep.subr.bf16.mxu0 0
    %4679 = vmatpush2.bf16.msra.mxu0 %v4048
    %4680 = vmatprep.mubr.bf16.mxu0 %v3117
    %4681 = vmatmul.mubr.bf16.gmra.mxu0 %v3103
    %v4682 = vpop.f32.mrf.mxu0
    %v4683 = vadd.f32 %v4643, %v4682
    %v4684 = vpop.f32.mrf.mxu0
    %v4685 = vpop.f32.mrf.mxu0
    %v4686 = vpop.f32.mrf.mxu0
    %4687 = vdwg.mxu0
    %4688 = vmatprep.subr.bf16.mxu0 0
    %4689 = vmatpush1.bf16.msra.mxu0 %v4063
    %4690 = vmatprep.subr.bf16.mxu0 0
    %4691 = vmatpush1.bf16.msra.mxu0 %v4062
    %4692 = vmatprep.subr.bf16.mxu0 0
    %4693 = vmatpush1.bf16.msra.mxu0 %v4061
    %4694 = vmatprep.subr.bf16.mxu0 0
    %4695 = vmatpush1.bf16.msra.mxu0 %v4060
    %4696 = vmatprep.subr.bf16.mxu0 0
    %4697 = vmatpush1.bf16.msra.mxu0 %v4059
    %4698 = vmatprep.subr.bf16.mxu0 0
    %4699 = vmatpush1.bf16.msra.mxu0 %v4058
    %4700 = vmatprep.subr.bf16.mxu0 0
    %4701 = vmatpush1.bf16.msra.mxu0 %v4057
    %4702 = vmatprep.subr.bf16.mxu0 0
    %4703 = vmatpush1.bf16.msra.mxu0 %v4056
    %4704 = vmatprep.subr.bf16.mxu0 0
    %4705 = vmatpush2.bf16.msra.mxu0 0
    %4706 = vmatprep.subr.bf16.mxu0 0
    %4707 = vmatpush2.bf16.msra.mxu0 0
    %4708 = vmatprep.subr.bf16.mxu0 0
    %4709 = vmatpush2.bf16.msra.mxu0 0
    %4710 = vmatprep.subr.bf16.mxu0 0
    %4711 = vmatpush2.bf16.msra.mxu0 0
    %4712 = vmatprep.subr.bf16.mxu0 0
    %4713 = vmatpush2.bf16.msra.mxu0 0
    %4714 = vmatprep.subr.bf16.mxu0 0
    %4715 = vmatpush2.bf16.msra.mxu0 0
    %4716 = vmatprep.subr.bf16.mxu0 0
    %4717 = vmatpush2.bf16.msra.mxu0 0
    %4718 = vmatprep.subr.bf16.mxu0 0
    %4719 = vmatpush2.bf16.msra.mxu0 0
    %4720 = vmatprep.mubr.bf16.mxu0 0
    %4721 = vmatmul.mubr.bf16.gmra.mxu0 %v3119
    %v4722 = vpop.f32.mrf.mxu0
    %v4723 = vadd.f32 %v4683, %v4722
    %v4724 = vpop.f32.mrf.mxu0
    %v4725 = vpop.f32.mrf.mxu0
    %v4726 = vpop.f32.mrf.mxu0
    %4727 = vdwg.mxu0
    %vm4728 = vcmp.gt.f32.partialorder %v4723, 0.0
    %v4729 = vmul.f32 %v4723, 0.01
    %v4730 = vsel %vm4728, %v4723, %v4729
    %v4731 = vpack.c.bf16 %v4730, %v4730
    %v4732 = vld [vmem:[%s9] sm:$0xf]
    %v4733 = vld [vmem:[%s9 + $0x4] sm:$0xf]
    %v4734 = vld [vmem:[%s9 + $0x8] sm:$0xf]
    %v4735 = vld [vmem:[%s9 + $0xc] sm:$0xf]
    %v4736 = vld [vmem:[%s10] sm:$0x1]
    %v4738 = vlaneseq
    %v4739 = vshrl.u32 %v4738, 7
    %v4740 = vsub.s32 0, %v4739
    %v4741 = vrot.slane %v4736, %v4740
    %v4747 = vunpack.c.l.b16 %v4732
    %v4748 = vunpack.c.l.b16 %v4733
    %v4749 = vunpack.c.l.b16 %v4734
    %v4750 = vunpack.c.l.b16 %v4735
    %v4751 = vpack.c.b16 %v4748, %v4747
    %v4752 = vpack.c.b16 %v4750, %v4749
    %v4756 = vsel %vm1782, %v4731, 0
    %4758 = vmatprep.subr.bf16.mxu0 0
    %4759 = vmatpush1.bf16.msra.mxu0 0
    %4760 = vmatprep.subr.bf16.mxu0 0
    %4761 = vmatpush1.bf16.msra.mxu0 0
    %4762 = vmatprep.subr.bf16.mxu0 0
    %4763 = vmatpush1.bf16.msra.mxu0 0
    %4764 = vmatprep.subr.bf16.mxu0 0
    %4765 = vmatpush1.bf16.msra.mxu0 0
    %4766 = vmatprep.subr.bf16.mxu0 0
    %4767 = vmatpush1.bf16.msra.mxu0 0
    %4768 = vmatprep.subr.bf16.mxu0 0
    %4769 = vmatpush1.bf16.msra.mxu0 0
    %4770 = vmatprep.subr.bf16.mxu0 0
    %4771 = vmatpush1.bf16.msra.mxu0 %v4752
    %4772 = vmatprep.subr.bf16.mxu0 0
    %4773 = vmatpush1.bf16.msra.mxu0 %v4751
    %4774 = vmatprep.subr.bf16.mxu0 0
    %4775 = vmatpush2.bf16.msra.mxu0 0
    %4776 = vmatprep.subr.bf16.mxu0 0
    %4777 = vmatpush2.bf16.msra.mxu0 0
    %4778 = vmatprep.subr.bf16.mxu0 0
    %4779 = vmatpush2.bf16.msra.mxu0 0
    %4780 = vmatprep.subr.bf16.mxu0 0
    %4781 = vmatpush2.bf16.msra.mxu0 0
    %4782 = vmatprep.subr.bf16.mxu0 0
    %4783 = vmatpush2.bf16.msra.mxu0 0
    %4784 = vmatprep.subr.bf16.mxu0 0
    %4785 = vmatpush2.bf16.msra.mxu0 0
    %4786 = vmatprep.subr.bf16.mxu0 0
    %4787 = vmatpush2.bf16.msra.mxu0 0
    %4788 = vmatprep.subr.bf16.mxu0 0
    %4789 = vmatpush2.bf16.msra.mxu0 0
    %4790 = vmatprep.mubr.bf16.mxu0 0
    %4791 = vmatmul.mubr.bf16.gmra.mxu0 %v4756
    %v4792 = vpop.f32.mrf.mxu0
    %v4793 = vadd.f32 %v4741, %v4792
    %v4794 = vpop.f32.mrf.mxu0
    %v4795 = vpop.f32.mrf.mxu0
    %v4796 = vpop.f32.mrf.mxu0
    %4797 = vdwg.mxu0
    %vm4798 = vcmask 9216
    %4799 = vst.msk [vmem:[#allocation8] sm:$0x3] %vm4798, %v4793
    // Predicated region
    $region46: #{tpu_custom_call.1} parent=1 // pred_check
      _
    $region47: #{tpu_custom_call.1} parent=1 // pred_check_branch
      %4801 = sbr.rel (0) target = $region49
    $region48: #{tpu_custom_call.1} parent=1 // pred_region
      %s4803 = ssub.s32 32, 32
      %4804 = vsyncadd [#allocation9], %s4803
      %s4806 = sshll.u32 [#allocation8], 4
      %s4807 = int_to_ptr.vmem [resolvable:$true] %s4806
      %4809 = dma.vmem_to_hbm [thread:$0]  %s4807, 32, %s11, [#allocation9]
    $region49: #{tpu_custom_call.1} parent=1 // pred_fallthru
      _
    // Predicated region
    $region50: #{tpu_custom_call.1} parent=1 // pred_check
      _
    $region51: #{tpu_custom_call.1} parent=1 // pred_check_branch
      %4811 = sbr.rel (0) target = $region53
    $region52: #{tpu_custom_call.1} parent=1 // pred_region
      %4812 = dma.done [#allocation9], 32
    $region53: #{tpu_custom_call.1} parent=1 // pred_fallthru
      _
    %4813 = vsyncpa [#allocation9], 1

</llo_original>
